<compile_context>
chip_gen: v6e
topology: v6e:2x2x1
jax: 0.10.0
libtpu: 0.0.40
codegen_flags: <defaults>
</compile_context>

<pallas_src>
import functools

import jax
import jax.numpy as jnp
from jax.experimental import pallas as pl
from jax.experimental.pallas import tpu as pltpu


def _round_up(x, m):
    return (x + m - 1) // m * m


def _ff_kernel(seed_ref, x_ref, w1_ref, b1_ref, w2_ref, b2_ref, o_ref, acc_ref,
               *, block_m, block_h, dropout_p):
    """acc += dropout(gelu(x @ W1[:, j] + b1[j])) @ W2[j, :]; emit acc + b2 at last j."""
    j = pl.program_id(1)

    @pl.when(j == 0)
    def _():
        acc_ref[...] = jnp.zeros_like(acc_ref)

    # ---- first projection (MXU, bf16 in / f32 acc) + bias + GELU ----
    x = x_ref[...].astype(w1_ref.dtype)          # fp32 -> bf16 cast inside the kernel
    h = jnp.dot(x, w1_ref[...], preferred_element_type=jnp.float32)
    h = h + b1_ref[...]
    # TODO(synk): tanh-approximate GELU; PyTorch nn.GELU default is the exact erf form.
    h = jax.nn.gelu(h, approximate=True)

    # ---- dropout: stateless counter-based PRNG keyed on (seed, global_row, global_col) ----
    # Rank-1 decomposition: the row/col affine terms are computed on (block_m,1)
    # and (1,block_h) vectors and broadcast-added; only the 3-multiply avalanche
    # runs at full (block_m x block_h) width.  Pure u32 VPU ops -> lowers on
    # Mosaic and the CPU interpreter, and is tiling-independent for replay.
    if dropout_p > 0.0:
        thresh = jnp.int32(int(round(dropout_p * (1 << 24))))
        inv_keep = jnp.float32(1.0 / (1.0 - dropout_p))
        seed_u = seed_ref[0].astype(jnp.uint32)
        row0 = pl.program_id(0) * block_m
        col0 = j * block_h
        row_t = (jax.lax.broadcasted_iota(jnp.int32, (block_m, 1), 0) + row0
                 ).astype(jnp.uint32) * jnp.uint32(0x9E3779B1)
        col_t = (jax.lax.broadcasted_iota(jnp.int32, (1, block_h), 1) + col0
                 ).astype(jnp.uint32) * jnp.uint32(0x85EBCA77)
        key = seed_u + row_t + col_t                     # broadcast to (block_m, block_h)
        key = key ^ (key >> 16)
        key = key * jnp.uint32(0x7FEB352D)
        key = key ^ (key >> 15)
        key = key * jnp.uint32(0x846CA68B)
        key = key ^ (key >> 16)
        u24 = (key >> 8).astype(jnp.int32)               # uniform integer in [0, 2^24)
        keep = u24 >= thresh                             # P(keep) = 1 - p
        h = jnp.where(keep, h, 0.0) * inv_keep

    # ---- second projection (MXU), accumulated over hidden chunks ----
    acc_ref[...] += jnp.dot(h.astype(w2_ref.dtype), w2_ref[...],
                            preferred_element_type=jnp.float32)

    @pl.when(j == pl.num_programs(1) - 1)
    def _():
        o_ref[...] = (acc_ref[...] + b2_ref[...]).astype(o_ref.dtype)


def _pick_block_h(d, hidden, block_m, budget_bytes=24 * 1024 * 1024):
    """Largest multiple-of-128 divisor of `hidden` whose working set fits the budget.

    Keeps weights fully resident when they fit; otherwise chunks the hidden dim
    so the kernel still pipelines on v7x's 64 MiB VMEM (default scoped 32 MiB).
    """
    candidates = [bh for bh in range(hidden, 0, -128)
                  if bh % 128 == 0 and hidden % bh == 0]
    if not candidates:
        return hidden
    for bh in candidates:
        w_chunks = 2 * 2 * 2 * d * bh            # bf16 W1+W2 chunks, double-buffered
        temps = 6 * block_m * bh * 4             # fp32 h / hash / mask temporaries
        tiles = 2 * block_m * d * (4 + 4)        # fp32 x + out tiles, double-buffered
        acc = block_m * d * 4
        if w_chunks + temps + tiles + acc <= budget_bytes:
            return bh
    return candidates[-1]


def feedforward_pallas(params, x, *, seed, dropout_p=0.1, block_m=512):
    """x: (batch, seq, dim) float32 -> (batch, seq, dim) float32."""
    w1, b1, w2, b2 = params
    b, s, d = x.shape
    hidden = w1.shape[1]
    assert d % 128 == 0 and hidden % 128 == 0, "feature dims must be lane-aligned (x128)"

    m = b * s
    x2d = x.reshape(m, d)                        # no pad, no extra cast: stream fp32 rows

    # Row tile: large (512) for MXU fill + low per-step overhead, clamped to the
    # (sublane-rounded) row count so tiny inputs don't request oversized blocks.
    block_m = max(8, min(_round_up(block_m, 8), _round_up(m, 8)))
    block_h = _pick_block_h(d, hidden, block_m)

    # bf16 feeds the MXU at full rate on v5e/v6e/v7x; accumulate + epilogue in fp32.
    w1c = w1.astype(jnp.bfloat16)
    w2c = w2.astype(jnp.bfloat16)
    b1c = b1.astype(jnp.float32)
    b2c = b2.astype(jnp.float32)

    seed_arr = jnp.asarray([seed], dtype=jnp.int32)
    grid = (pl.cdiv(m, block_m), hidden // block_h)

    # VMEM budget: per-chunk weights + double-buffered activation tiles + fp32 temps.
    bytes_w_chunk = 2 * 2 * 2 * d * block_h
    bytes_bias = 2 * (block_h + d) * 4
    bytes_tiles = 2 * block_m * d * (4 + 4)
    bytes_acc = block_m * d * 4
    bytes_tmp = 6 * block_m * block_h * 4
    vmem_limit = int(min(64 * 1024 * 1024,
                         max(16 * 1024 * 1024,
                             2 * (bytes_w_chunk + bytes_bias + bytes_tiles
                                  + bytes_acc + bytes_tmp))))

    cost = pl.CostEstimate(
        flops=4 * m * d * hidden,                            # two matmuls
        transcendentals=m * hidden,                          # GELU tanh
        bytes_accessed=(m * d * 4) * 2                       # x in + out fp32
                       + 2 * d * hidden * 2                  # bf16 weights
                       + (hidden + d) * 4,                   # biases
    )

    kernel = functools.partial(_ff_kernel, block_m=block_m, block_h=block_h,
                               dropout_p=float(dropout_p))

    out2d = pl.pallas_call(
        kernel,
        out_shape=jax.ShapeDtypeStruct((m, d), x.dtype),
        grid_spec=pltpu.PrefetchScalarGridSpec(
            num_scalar_prefetch=1,               # seed lives in SMEM, prefetched
            grid=grid,
            in_specs=[
                pl.BlockSpec((block_m, d), lambda i, j, seed: (i, 0)),   # x row tile
                pl.BlockSpec((d, block_h), lambda i, j, seed: (0, j)),   # W1 chunk
                pl.BlockSpec((1, block_h), lambda i, j, seed: (0, j)),   # b1 chunk
                pl.BlockSpec((block_h, d), lambda i, j, seed: (j, 0)),   # W2 chunk
                pl.BlockSpec((1, d), lambda i, j, seed: (0, 0)),         # b2
            ],
            out_specs=pl.BlockSpec((block_m, d), lambda i, j, seed: (i, 0)),
            scratch_shapes=[pltpu.VMEM((block_m, d), jnp.float32)],      # fp32 accumulator
        ),
        compiler_params=pltpu.CompilerParams(
            dimension_semantics=("parallel", "arbitrary"),   # rows parallel, hidden reduced
            vmem_limit_bytes=vmem_limit,
        ),
        cost_estimate=cost,
    )(seed_arr, x2d, w1c, b1c, w2c, b2c)

    return out2d.reshape(b, s, d)


class Deterministic:
    """JAX/Pallas analogue of routing_transformer's Deterministic wrapper.

    Records the RNG state (here: an integer seed feeding the in-kernel
    counter-based PRNG) on `record_rng=True`, and replays it on `set_rng=True`
    so the wrapped net's dropout produces bit-identical results.
    """

    def __init__(self, net):
        self.net = net
        self.recorded_seed = None  # stands in for cpu_state / gpu_states

    def record_rng(self, seed):
        self.recorded_seed = seed

    def __call__(self, *args, record_rng=False, set_rng=False, seed=0, **kwargs):
        if record_rng:
            self.record_rng(seed)
        if not set_rng:
            return self.net(*args, seed=seed, **kwargs)
        # TODO(synk): PyTorch forks/restores the full global RNG stream; here we
        # replay the recorded seed into the kernel's stateless PRNG instead.
        assert self.recorded_seed is not None, "set_rng=True before record_rng"
        return self.net(*args, seed=self.recorded_seed, **kwargs)


def init_params(key, dim, hidden):
    k1, k2, k3, k4 = jax.random.split(key, 4)
    w1 = jax.random.normal(k1, (dim, hidden), jnp.float32) * 0.02
    b1 = jax.random.normal(k2, (1, hidden), jnp.float32) * 0.02
    w2 = jax.random.normal(k3, (hidden, dim), jnp.float32) * 0.02
    b2 = jax.random.normal(k4, (1, dim), jnp.float32) * 0.02
    return (w1, b1, w2, b2)


if __name__ == "__main__":
    # Small but lane-dense shapes: dim/hidden multiples of 128; 1024 total rows
    # so the row grid actually steps (2 tiles of 512 rows).
    batch, seq, dim, hidden = 2, 512, 128, 256

    root = jax.random.PRNGKey(0)
    kx, kp = jax.random.split(root)
    x = jax.random.normal(kx, (batch, seq, dim), jnp.float32)
    params = init_params(kp, dim, hidden)

    net = functools.partial(feedforward_pallas, params)
    det = Deterministic(net)

    # First pass: record RNG state (seed) while running the net.
    y1 = jax.block_until_ready(det(x, record_rng=True, seed=1234))

    # Second pass: replay recorded RNG state -> bit-identical output.
    y2 = jax.block_until_ready(det(x, set_rng=True))

    # A pass with a different seed (no replay) should differ (dropout mask changes).
    y3 = jax.block_until_ready(det(x, seed=999))

    assert y1.shape == (batch, seq, dim)
    assert bool(jnp.array_equal(y1, y2)), "replayed RNG state did not reproduce output"
    assert not bool(jnp.allclose(y1, y3)), "different seed unexpectedly matched"

    print("KERNEL_OK")
</pallas_src>

<mosaic_0001>
module attributes {stable_mosaic.version = 11 : i64} {
  func.func @_ff_kernel(%arg0: i32, %arg1: i32, %arg2: memref<1xi32, #tpu.memory_space<smem>>, %arg3: memref<512x128xf32, #tpu.memory_space<vmem>>, %arg4: memref<128x256xbf16, #tpu.memory_space<vmem>>, %arg5: memref<1x256xf32, #tpu.memory_space<vmem>>, %arg6: memref<256x128xbf16, #tpu.memory_space<vmem>>, %arg7: memref<1x128xf32, #tpu.memory_space<vmem>>, %arg8: memref<512x128xf32, #tpu.memory_space<vmem>>, %arg9: memref<512x128xf32, #tpu.memory_space<vmem>>) attributes {dimension_semantics = [#tpu.dimension_semantics<parallel>, #tpu.dimension_semantics<arbitrary>], iteration_bounds = array<i64: 2, 1>, scalar_prefetch = 1 : i64, scratch_operands = 1 : i64, tpu.core_type = #tpu.core_type<tc>, window_params = [{transform_indices = @transform_0, window_bounds = array<i64: 512, 128>}, {transform_indices = @transform_1, window_bounds = array<i64: 128, 256>}, {transform_indices = @transform_2, window_bounds = array<i64: 1, 256>}, {transform_indices = @transform_3, window_bounds = array<i64: 256, 128>}, {pipeline_mode = #tpu.pipeline_mode<synchronous>, transform_indices = @transform_4, window_bounds = array<i64: 1, 128>}, {transform_indices = @transform_5, window_bounds = array<i64: 512, 128>}]} {
    %c0_i32 = arith.constant 0 : i32
    %0 = arith.cmpi eq, %arg1, %c0_i32 : i32
    %1 = arith.extui %0 : i1 to i32
    %c0_i32_0 = arith.constant 0 : i32
    %2 = arith.cmpi ne, %1, %c0_i32_0 : i32
    scf.if %2 {
      %cst_23 = arith.constant 0.000000e+00 : f32
      %71 = vector.broadcast %cst_23 : f32 to vector<512x128xf32>
      %c0_24 = arith.constant 0 : index
      %c0_25 = arith.constant 0 : index
      %72 = vector.load %arg9[%c0_24, %c0_25] : memref<512x128xf32, #tpu.memory_space<vmem>>, vector<512x128xf32>
      tpu.vector_store %arg9[%c0_24, %c0_25], %71 {strides = array<i32>} : memref<512x128xf32, #tpu.memory_space<vmem>>, vector<512x128xf32>,
    } else {
    }
    %c0 = arith.constant 0 : index
    %c0_1 = arith.constant 0 : index
    %3 = vector.load %arg3[%c0, %c0_1] : memref<512x128xf32, #tpu.memory_space<vmem>>, vector<512x128xf32>
    %4 = arith.truncf %3 : vector<512x128xf32> to vector<512x128xbf16>
    %c0_2 = arith.constant 0 : index
    %c0_3 = arith.constant 0 : index
    %5 = vector.load %arg4[%c0_2, %c0_3] : memref<128x256xbf16, #tpu.memory_space<vmem>>, vector<128x256xbf16>
    %cst = arith.constant dense<0.000000e+00> : vector<512x256xf32>
    %6 = tpu.matmul %4, %5, %cst {dimension_numbers = #tpu.dot_dimension_numbers<[1], [0], [0], [1], [0, 0, 1, 1], [], []>} : vector<512x128xbf16>, vector<128x256xbf16>, vector<512x256xf32> -> vector<512x256xf32>
    %c0_4 = arith.constant 0 : index
    %c0_5 = arith.constant 0 : index
    %7 = vector.load %arg5[%c0_4, %c0_5] : memref<1x256xf32, #tpu.memory_space<vmem>>, vector<1x256xf32>
    %8 = vector.broadcast %7 : vector<1x256xf32> to vector<512x256xf32>
    %9 = arith.addf %6, %8 : vector<512x256xf32>
    %10 = arith.mulf %9, %9 : vector<512x256xf32>
    %11 = arith.mulf %9, %10 : vector<512x256xf32>
    %cst_6 = arith.constant 4.471500e-02 : f32
    %12 = vector.broadcast %cst_6 : f32 to vector<512x256xf32>
    %13 = arith.mulf %12, %11 : vector<512x256xf32>
    %14 = arith.addf %9, %13 : vector<512x256xf32>
    %cst_7 = arith.constant 0.797884583 : f32
    %15 = vector.broadcast %cst_7 : f32 to vector<512x256xf32>
    %16 = arith.mulf %15, %14 : vector<512x256xf32>
    %17 = math.tanh %16 : vector<512x256xf32>
    %cst_8 = arith.constant 1.000000e+00 : f32
    %18 = vector.broadcast %cst_8 : f32 to vector<512x256xf32>
    %19 = arith.addf %18, %17 : vector<512x256xf32>
    %cst_9 = arith.constant 5.000000e-01 : f32
    %20 = vector.broadcast %cst_9 : f32 to vector<512x256xf32>
    %21 = arith.mulf %20, %19 : vector<512x256xf32>
    %22 = arith.mulf %9, %21 : vector<512x256xf32>
    %c0_10 = arith.constant 0 : index
    %23 = memref.load %arg2[%c0_10] : memref<1xi32, #tpu.memory_space<smem>>
    %c512_i32 = arith.constant 512 : i32
    %24 = arith.muli %arg0, %c512_i32 : i32
    %c256_i32 = arith.constant 256 : i32
    %25 = arith.muli %arg1, %c256_i32 : i32
    %26 = tpu.iota {dimensions = array<i32: 0>} : vector<512x1xi32>
    %27 = vector.broadcast %24 : i32 to vector<512x1xi32>
    %28 = arith.addi %26, %27 : vector<512x1xi32>
    %c-1640531535_i32 = arith.constant -1640531535 : i32
    %29 = vector.broadcast %c-1640531535_i32 : i32 to vector<512x1xi32>
    %30 = arith.muli %28, %29 : vector<512x1xi32>
    %31 = tpu.iota {dimensions = array<i32: 1>} : vector<1x256xi32>
    %32 = vector.broadcast %25 : i32 to vector<1x256xi32>
    %33 = arith.addi %31, %32 : vector<1x256xi32>
    %c-2048144777_i32 = arith.constant -2048144777 : i32
    %34 = vector.broadcast %c-2048144777_i32 : i32 to vector<1x256xi32>
    %35 = arith.muli %33, %34 : vector<1x256xi32>
    %36 = vector.broadcast %23 : i32 to vector<512x1xi32>
    %37 = arith.addi %36, %30 : vector<512x1xi32>
    %38 = vector.broadcast %37 : vector<512x1xi32> to vector<512x256xi32>
    %39 = vector.broadcast %35 : vector<1x256xi32> to vector<512x256xi32>
    %40 = arith.addi %38, %39 : vector<512x256xi32>
    %c16_i32 = arith.constant 16 : i32
    %41 = vector.broadcast %c16_i32 : i32 to vector<512x256xi32>
    %42 = arith.shrui %40, %41 : vector<512x256xi32>
    %43 = arith.xori %40, %42 : vector<512x256xi32>
    %c2146121005_i32 = arith.constant 2146121005 : i32
    %44 = vector.broadcast %c2146121005_i32 : i32 to vector<512x256xi32>
    %45 = arith.muli %43, %44 : vector<512x256xi32>
    %c15_i32 = arith.constant 15 : i32
    %46 = vector.broadcast %c15_i32 : i32 to vector<512x256xi32>
    %47 = arith.shrui %45, %46 : vector<512x256xi32>
    %48 = arith.xori %45, %47 : vector<512x256xi32>
    %c-2073254261_i32 = arith.constant -2073254261 : i32
    %49 = vector.broadcast %c-2073254261_i32 : i32 to vector<512x256xi32>
    %50 = arith.muli %48, %49 : vector<512x256xi32>
    %c16_i32_11 = arith.constant 16 : i32
    %51 = vector.broadcast %c16_i32_11 : i32 to vector<512x256xi32>
    %52 = arith.shrui %50, %51 : vector<512x256xi32>
    %53 = arith.xori %50, %52 : vector<512x256xi32>
    %c8_i32 = arith.constant 8 : i32
    %54 = vector.broadcast %c8_i32 : i32 to vector<512x256xi32>
    %55 = arith.shrui %53, %54 : vector<512x256xi32>
    %c1677722_i32 = arith.constant 1677722 : i32
    %56 = vector.broadcast %c1677722_i32 : i32 to vector<512x256xi32>
    %57 = arith.cmpi sge, %55, %56 : vector<512x256xi32>
    %cst_12 = arith.constant 0.000000e+00 : f32
    %58 = vector.broadcast %cst_12 : f32 to vector<512x256xf32>
    %59 = arith.select %57, %22, %58 : vector<512x256xi1>, vector<512x256xf32>
    %cst_13 = arith.constant 1.11111116 : f32
    %60 = vector.broadcast %cst_13 : f32 to vector<512x256xf32>
    %61 = arith.mulf %59, %60 : vector<512x256xf32>
    %c0_14 = arith.constant 0 : index
    %c0_15 = arith.constant 0 : index
    %62 = vector.load %arg9[%c0_14, %c0_15] : memref<512x128xf32, #tpu.memory_space<vmem>>, vector<512x128xf32>
    %63 = arith.truncf %61 : vector<512x256xf32> to vector<512x256xbf16>
    %c0_16 = arith.constant 0 : index
    %c0_17 = arith.constant 0 : index
    %64 = vector.load %arg6[%c0_16, %c0_17] : memref<256x128xbf16, #tpu.memory_space<vmem>>, vector<256x128xbf16>
    %cst_18 = arith.constant dense<0.000000e+00> : vector<512x128xf32>
    %65 = tpu.matmul %63, %64, %cst_18 {dimension_numbers = #tpu.dot_dimension_numbers<[1], [0], [0], [1], [0, 0, 1, 1], [], []>} : vector<512x256xbf16>, vector<256x128xbf16>, vector<512x128xf32> -> vector<512x128xf32>
    %66 = arith.addf %62, %65 : vector<512x128xf32>
    %c0_19 = arith.constant 0 : index
    %c0_20 = arith.constant 0 : index
    %67 = vector.load %arg9[%c0_19, %c0_20] : memref<512x128xf32, #tpu.memory_space<vmem>>, vector<512x128xf32>
    tpu.vector_store %arg9[%c0_19, %c0_20], %66 {strides = array<i32>} : memref<512x128xf32, #tpu.memory_space<vmem>>, vector<512x128xf32>,
    %c0_i32_21 = arith.constant 0 : i32
    %68 = arith.cmpi eq, %arg1, %c0_i32_21 : i32
    %69 = arith.extui %68 : i1 to i32
    %c0_i32_22 = arith.constant 0 : i32
    %70 = arith.cmpi ne, %69, %c0_i32_22 : i32
    scf.if %70 {
      %c0_23 = arith.constant 0 : index
      %c0_24 = arith.constant 0 : index
      %71 = vector.load %arg9[%c0_23, %c0_24] : memref<512x128xf32, #tpu.memory_space<vmem>>, vector<512x128xf32>
      %c0_25 = arith.constant 0 : index
      %c0_26 = arith.constant 0 : index
      %72 = vector.load %arg7[%c0_25, %c0_26] : memref<1x128xf32, #tpu.memory_space<vmem>>, vector<1x128xf32>
      %73 = vector.broadcast %72 : vector<1x128xf32> to vector<512x128xf32>
      %74 = arith.addf %71, %73 : vector<512x128xf32>
      %c0_27 = arith.constant 0 : index
      %c0_28 = arith.constant 0 : index
      %75 = vector.load %arg8[%c0_27, %c0_28] : memref<512x128xf32, #tpu.memory_space<vmem>>, vector<512x128xf32>
      tpu.vector_store %arg8[%c0_27, %c0_28], %74 {strides = array<i32>} : memref<512x128xf32, #tpu.memory_space<vmem>>, vector<512x128xf32>,
    } else {
    }
    return
  }
  func.func @transform_0(%arg0: i32, %arg1: i32, %arg2: memref<1xi32, #tpu.memory_space<smem>>) -> (i32, i32) {
    %c0_i32 = arith.constant 0 : i32
    %c0_i32_0 = arith.constant 0 : i32
    return %arg0, %c0_i32 : i32, i32
  }
  func.func @transform_1(%arg0: i32, %arg1: i32, %arg2: memref<1xi32, #tpu.memory_space<smem>>) -> (i32, i32) {
    %c0_i32 = arith.constant 0 : i32
    %c0_i32_0 = arith.constant 0 : i32
    return %c0_i32, %arg1 : i32, i32
  }
  func.func @transform_2(%arg0: i32, %arg1: i32, %arg2: memref<1xi32, #tpu.memory_space<smem>>) -> (i32, i32) {
    %c0_i32 = arith.constant 0 : i32
    %c0_i32_0 = arith.constant 0 : i32
    return %c0_i32, %arg1 : i32, i32
  }
  func.func @transform_3(%arg0: i32, %arg1: i32, %arg2: memref<1xi32, #tpu.memory_space<smem>>) -> (i32, i32) {
    %c0_i32 = arith.constant 0 : i32
    %c0_i32_0 = arith.constant 0 : i32
    return %arg1, %c0_i32 : i32, i32
  }
  func.func @transform_4(%arg0: i32, %arg1: i32, %arg2: memref<1xi32, #tpu.memory_space<smem>>) -> (i32, i32) {
    %c0_i32 = arith.constant 0 : i32
    %c0_i32_0 = arith.constant 0 : i32
    %c0_i32_1 = arith.constant 0 : i32
    return %c0_i32, %c0_i32_0 : i32, i32
  }
  func.func @transform_5(%arg0: i32, %arg1: i32, %arg2: memref<1xi32, #tpu.memory_space<smem>>) -> (i32, i32) {
    %c0_i32 = arith.constant 0 : i32
    %c0_i32_0 = arith.constant 0 : i32
    return %arg0, %c0_i32 : i32, i32
  }
}

</mosaic_0001>

<llo_original>
// kernel: tpu_custom_call.1
$region0: #{tpu_custom_call.1}
  #allocation0 [shape = 'u32[]', space=smem, size = 0x4, offset = 0x4, fixed_abs, tag = 'smem constant byte address 0x4 - core index']
  #allocation1 [shape = 'u32[144,128]{1,0:T(1,128)}', space=vmem, size = 0x12000, scoped, tag = 'internal scratch']
  #allocation2 [shape = 'f32[512,128]{1,0:T(8,128)}', space=vmem, size = 0x40000, scoped, tag = 'scratch operand']
  #allocation3 [shape = 's32[1]{0}', space=sflag, size = 0x4, scoped, tag = 'scoped memory for tpu_custom_call.1']
  #allocation4 [shape = 's32[1]{0:T(128)S(6)}', space=smem, size = 0x200, scoped, tag = 'prefetched SMEM operand 0']
  %s0 = inlined_call_operand.<no memory space> [shape: s32[1], index: 0, kind: input, shape index: {}]
  %s1 = inlined_call_operand.hbm [shape: f32[1024,128], index: 1, kind: input, shape index: {}]
  %s2 = inlined_call_operand.hbm [shape: bf16[128,256], index: 2, kind: input, shape index: {}]
  %s3 = inlined_call_operand.vmem [shape: f32[1,256], index: 3, kind: input, shape index: {}]
  %s4 = inlined_call_operand.hbm [shape: bf16[256,128], index: 4, kind: input, shape index: {}]
  %s5 = inlined_call_operand.vmem [shape: f32[1,128], index: 5, kind: input, shape index: {}]
  %s6 = inlined_call_operand.hbm [shape: f32[1024,128], index: 6, kind: output, shape index: {}]
  %s7 = sld [smem:[#allocation0]]
  $region73: #{tpu_custom_call.1} parent=0
    _
  %s9 = ssub.s32 1, %s7
  %s10 = scalar_select 0, %s9, %s7
  %11 = sst [smem:[#allocation4]] %s0
  $region1: #{tpu_custom_call.1} parent=0
    #allocation5 [shape = 'u8[524288]{0}', space=vmem, size = 0x80000, scoped, tag = 'input window, operand 1']
    #allocation6 [shape = 's32[2]{0}', space=sflag, size = 0x8, scoped, tag = 'scoped memory for tpu_custom_call.1']
    #allocation7 [shape = 's32[2]{0}', space=sflag, size = 0x8, scoped, tag = 'scoped memory for tpu_custom_call.1']
    #allocation8 [shape = 'u8[65536]{0}', space=vmem, size = 0x10000, scoped, tag = 'input window, operand 2, single buffered']
    #allocation9 [shape = 's32[1]{0}', space=sflag, size = 0x4, scoped, tag = 'scoped memory for tpu_custom_call.1']
    #allocation10 [shape = 'u8[65536]{0}', space=vmem, size = 0x10000, scoped, tag = 'input window, operand 4, single buffered']
    #allocation11 [shape = 'u8[524288]{0}', space=vmem, size = 0x80000, scoped, tag = 'output window, operand 0']
    %12 = vsyncpa [#allocation6], 0
    %s13 = scalar_lea.sflag [#allocation6], 1
    %14 = vsyncpa %s13, 0
    %15 = vsyncpa [#allocation9], 0
    %16 = vsyncpa [#allocation7], 0
    %s17 = scalar_lea.sflag [#allocation7], 1
    %18 = vsyncpa %s17, 0
    loop: start=0, step=1, limit=4
    $region2: #{tpu_custom_call.1} parent=1 // loop_pre_header
      _
    $region3: #{tpu_custom_call.1} parent=1 // loop_header
      %s20 = sphi 0, %s24
      %p21 = scmp.ge.s32.totalorder %s20, 4
      %s27 = sphi 0, %s39
      %s28 = sphi 0, %s35
      %s29 = sphi 0, %s27
      %s30 = sphi 0, %s28
      %s31 = sphi 0, %s29
      %s32 = sphi 0, %s30
      %s42 = sphi 0, %s44
      %s45 = sphi 0, %s42
      %s46 = sphi 0, %s45
      %s62 = sphi 0, %s46
      %s68 = sphi 0, %s70
      %s71 = sphi 0, %s68
      %s72 = sphi 0, %s71
      %s88 = sphi 0, %s72
      %s94 = sphi 0, %s96
      %s97 = sphi 0, %s94
      %s98 = sphi 0, %s97
      %s114 = sphi 0, %s98
      %s120 = sphi 0, %s122
      %s123 = sphi 0, %s120
      %s124 = sphi 0, %s123
      %s140 = sphi 0, %s124
      %s144 = sphi 0, %s144
      %s146 = sphi 0, %s144
      %s147 = sphi 0, %s146
      %s161 = sphi 0, %s147
      %s167 = sphi 0, %s169
      %s170 = sphi 0, %s167
      %s171 = sphi 0, %s170
      %s187 = sphi 0, %s171
    $region4: #{tpu_custom_call.1} parent=1 // loop_header_branch
      %23 = sbr.rel (%p21) target = $region8
    $region5: #{tpu_custom_call.1} parent=1 // loop_body
      %s25 = ssub.s32 %s20, 1
      %s26 = ssub.s32 %s20, 2
      %s33 = sadd.s32 1, %s28
      %p34 = scmp.ge.s32.totalorder %s33, 1
      %s35 = scalar_select %p34, 0, %s33
      %s36 = sadd.s32 1, %s27
      %s37 = scalar_select %p34, %s36, %s27
      %p38 = scmp.ge.s32.totalorder %s37, 2
      %s39 = scalar_select %p38, 0, %s37
      %s40 = ssub.s32 %s27, %s39
      %p41 = scmp.eq.s32.totalorder %s40, 0
      %s43 = sadd.s32 %s42, 1
      %s44 = scalar_select %p41, %s42, %s43
      %p47 = pneg %p41
      %p48 = scmp.eq.s32.totalorder %s20, 1
      %p49 = por %p47, %p48
      %p50 = scmp.ne.s32.totalorder %s42, %s45
      %p51 = scmp.eq.s32.totalorder %s20, 0
      %p52 = por %p50, %p51
      %p53 = scmp.ne.s32.totalorder %s42, %s45
      %p54 = scmp.eq.s32.totalorder %s25, 1
      %p55 = por %p53, %p54
      %p56 = scmp.ne.s32.totalorder %s45, %s46
      %p57 = scmp.eq.s32.totalorder %s25, 0
      %p58 = por %p56, %p57
      %p59 = scmp.ne.s32.totalorder %s45, %s46
      %p60 = scmp.eq.s32.totalorder %s26, 1
      %p61 = por %p59, %p60
      %p63 = scmp.ne.s32.totalorder %s46, %s62
      %p64 = scmp.eq.s32.totalorder %s26, 0
      %p65 = por %p63, %p64
      %s66 = ssub.s32 %s28, %s35
      %p67 = scmp.eq.s32.totalorder %s66, 0
      %s69 = sadd.s32 %s68, 1
      %s70 = scalar_select %p67, %s68, %s69
      %p73 = pneg %p67
      %p74 = scmp.eq.s32.totalorder %s20, 1
      %p75 = por %p73, %p74
      %p76 = scmp.ne.s32.totalorder %s68, %s71
      %p77 = scmp.eq.s32.totalorder %s20, 0
      %p78 = por %p76, %p77
      %p79 = scmp.ne.s32.totalorder %s68, %s71
      %p80 = scmp.eq.s32.totalorder %s25, 1
      %p81 = por %p79, %p80
      %p82 = scmp.ne.s32.totalorder %s71, %s72
      %p83 = scmp.eq.s32.totalorder %s25, 0
      %p84 = por %p82, %p83
      %p85 = scmp.ne.s32.totalorder %s71, %s72
      %p86 = scmp.eq.s32.totalorder %s26, 1
      %p87 = por %p85, %p86
      %p89 = scmp.ne.s32.totalorder %s72, %s88
      %p90 = scmp.eq.s32.totalorder %s26, 0
      %p91 = por %p89, %p90
      %s92 = ssub.s32 %s28, %s35
      %p93 = scmp.eq.s32.totalorder %s92, 0
      %s95 = sadd.s32 %s94, 1
      %s96 = scalar_select %p93, %s94, %s95
      %p99 = pneg %p93
      %p100 = scmp.eq.s32.totalorder %s20, 1
      %p101 = por %p99, %p100
      %p102 = scmp.ne.s32.totalorder %s94, %s97
      %p103 = scmp.eq.s32.totalorder %s20, 0
      %p104 = por %p102, %p103
      %p105 = scmp.ne.s32.totalorder %s94, %s97
      %p106 = scmp.eq.s32.totalorder %s25, 1
      %p107 = por %p105, %p106
      %p108 = scmp.ne.s32.totalorder %s97, %s98
      %p109 = scmp.eq.s32.totalorder %s25, 0
      %p110 = por %p108, %p109
      %p111 = scmp.ne.s32.totalorder %s97, %s98
      %p112 = scmp.eq.s32.totalorder %s26, 1
      %p113 = por %p111, %p112
      %p115 = scmp.ne.s32.totalorder %s98, %s114
      %p116 = scmp.eq.s32.totalorder %s26, 0
      %p117 = por %p115, %p116
      %s118 = ssub.s32 %s28, %s35
      %p119 = scmp.eq.s32.totalorder %s118, 0
      %s121 = sadd.s32 %s120, 1
      %s122 = scalar_select %p119, %s120, %s121
      %p125 = pneg %p119
      %p126 = scmp.eq.s32.totalorder %s20, 1
      %p127 = por %p125, %p126
      %p128 = scmp.ne.s32.totalorder %s120, %s123
      %p129 = scmp.eq.s32.totalorder %s20, 0
      %p130 = por %p128, %p129
      %p131 = scmp.ne.s32.totalorder %s120, %s123
      %p132 = scmp.eq.s32.totalorder %s25, 1
      %p133 = por %p131, %p132
      %p134 = scmp.ne.s32.totalorder %s123, %s124
      %p135 = scmp.eq.s32.totalorder %s25, 0
      %p136 = por %p134, %p135
      %p137 = scmp.ne.s32.totalorder %s123, %s124
      %p138 = scmp.eq.s32.totalorder %s26, 1
      %p139 = por %p137, %p138
      %p141 = scmp.ne.s32.totalorder %s124, %s140
      %p142 = scmp.eq.s32.totalorder %s26, 0
      %p143 = por %p141, %p142
      %s145 = sadd.s32 %s144, 1
      %p148 = scmp.eq.s32.totalorder %s20, 1
      %p149 = scmp.ne.s32.totalorder %s144, %s146
      %p150 = scmp.eq.s32.totalorder %s20, 0
      %p151 = por %p149, %p150
      %p152 = scmp.ne.s32.totalorder %s144, %s146
      %p153 = scmp.eq.s32.totalorder %s25, 1
      %p154 = por %p152, %p153
      %p155 = scmp.ne.s32.totalorder %s146, %s147
      %p156 = scmp.eq.s32.totalorder %s25, 0
      %p157 = por %p155, %p156
      %p158 = scmp.ne.s32.totalorder %s146, %s147
      %p159 = scmp.eq.s32.totalorder %s26, 1
      %p160 = por %p158, %p159
      %p162 = scmp.ne.s32.totalorder %s147, %s161
      %p163 = scmp.eq.s32.totalorder %s26, 0
      %p164 = por %p162, %p163
      %s165 = ssub.s32 %s27, %s39
      %p166 = scmp.eq.s32.totalorder %s165, 0
      %s168 = sadd.s32 %s167, 1
      %s169 = scalar_select %p166, %s167, %s168
      %p172 = pneg %p166
      %p173 = scmp.eq.s32.totalorder %s20, 1
      %p174 = por %p172, %p173
      %p175 = scmp.ne.s32.totalorder %s167, %s170
      %p176 = scmp.eq.s32.totalorder %s20, 0
      %p177 = por %p175, %p176
      %p178 = scmp.ne.s32.totalorder %s167, %s170
      %p179 = scmp.eq.s32.totalorder %s25, 1
      %p180 = por %p178, %p179
      %p181 = scmp.ne.s32.totalorder %s170, %s171
      %p182 = scmp.eq.s32.totalorder %s25, 0
      %p183 = por %p181, %p182
      %p184 = scmp.ne.s32.totalorder %s170, %s171
      %p185 = scmp.eq.s32.totalorder %s26, 1
      %p186 = por %p184, %p185
      %p188 = scmp.ne.s32.totalorder %s171, %s187
      %p189 = scmp.eq.s32.totalorder %s26, 0
      %p190 = por %p188, %p189
      %p191 = scmp.le.s32.totalorder 1, %s20
      %p192 = scmp.lt.s32.totalorder %s20, 3
      %p193 = pnand %p191, %p192
      %p194 = pneg %p193
      // Predicated region
      $region9: #{tpu_custom_call.1} parent=5 // pred_check
        _
      $region10: #{tpu_custom_call.1} parent=5 // pred_check_branch
        %196 = sbr.rel (%p193) target = $region12
      $region11: #{tpu_custom_call.1} parent=5 // pred_region
        %s197 = ssub.s32 %s20, 1
        // Predicated region
        $region13: #{tpu_custom_call.1} parent=11 // pred_check
          %p198 = pneg %p84
        $region14: #{tpu_custom_call.1} parent=11 // pred_check_branch
          %200 = sbr.rel (%p198) target = $region16
        $region15: #{tpu_custom_call.1} parent=11 // pred_region
          %s201 = smul.u32 2, %s30
          %s203 = ssub.s32 2048, 2048
          %204 = vsyncadd [#allocation9], %s203
          %s205 = smul.addr %s201, 64
          %s206 = scalar_lea.hbm %s2, %s205
          %s207 = sshll.u32 [#allocation8], 4
          %s208 = int_to_ptr.vmem [resolvable:$true] %s207
          %213 = dma.hbm_to_vmem [thread:$0]  %s206, 2048, %s208, [#allocation9], 128, 128, 8
        $region16: #{tpu_custom_call.1} parent=11 // pred_fallthru
          _
        // Predicated region
        $region17: #{tpu_custom_call.1} parent=11 // pred_check
          %p214 = pneg %p110
        $region18: #{tpu_custom_call.1} parent=11 // pred_check_branch
          %216 = sbr.rel (%p214) target = $region20
        $region19: #{tpu_custom_call.1} parent=11 // pred_region
          %s217 = smul.u32 2, %s30
          %p218 = scmp.lt.s32.totalorder %s217, 1
          %s219 = scalar_select %p218, %s217, 1
          %s220 = scalar_lea.vmem %s3, %s219
          %s221 = smul.u32 2, %s30
        $region20: #{tpu_custom_call.1} parent=11 // pred_fallthru
          _
        // Predicated region
        $region21: #{tpu_custom_call.1} parent=11 // pred_check
          %p222 = pneg %p136
        $region22: #{tpu_custom_call.1} parent=11 // pred_check_branch
          %224 = sbr.rel (%p222) target = $region24
        $region23: #{tpu_custom_call.1} parent=11 // pred_region
          %s225 = smul.u32 32, %s30
          %s227 = ssub.s32 2048, 2048
          %228 = vsyncadd [#allocation9], %s227
          %s229 = smul.addr %s225, 64
          %s230 = scalar_lea.hbm %s4, %s229
          %s231 = sshll.u32 [#allocation10], 4
          %s232 = int_to_ptr.vmem [resolvable:$true] %s231
          %237 = dma.hbm_to_vmem [thread:$0]  %s230, 2048, %s232, [#allocation9], 64, 64, 4
        $region24: #{tpu_custom_call.1} parent=11 // pred_fallthru
          _
        // Predicated region
        $region25: #{tpu_custom_call.1} parent=11 // pred_check
          %p238 = pneg %p157
        $region26: #{tpu_custom_call.1} parent=11 // pred_check_branch
          %240 = sbr.rel (%p238) target = $region28
        $region27: #{tpu_custom_call.1} parent=11 // pred_region
          _
        $region28: #{tpu_custom_call.1} parent=11 // pred_fallthru
          _
      $region12: #{tpu_custom_call.1} parent=5 // pred_fallthru
        _
      %p241 = scmp.lt.s32.totalorder %s20, 2
      // Predicated region
      $region29: #{tpu_custom_call.1} parent=5 // pred_check
        %p242 = pneg %p241
      $region30: #{tpu_custom_call.1} parent=5 // pred_check_branch
        %244 = sbr.rel (%p242) target = $region32
      $region31: #{tpu_custom_call.1} parent=5 // pred_region
        // Predicated region
        $region33: #{tpu_custom_call.1} parent=31 // pred_check
          %p245 = pneg %p52
        $region34: #{tpu_custom_call.1} parent=31 // pred_check_branch
          %247 = sbr.rel (%p245) target = $region36
        $region35: #{tpu_custom_call.1} parent=31 // pred_region
          %s248 = sand.u32 %s42, 1
          %s249 = scalar_lea.sflag [#allocation6], %s248
          %s250 = sand.u32 %s42, 1
          %s251 = smul.addr %s250, 512
          %s252 = scalar_lea.vmem [#allocation5], %s251
          %s253 = smul.u32 64, %s27
          %s255 = ssub.s32 8192, 8192
          %256 = vsyncadd %s249, %s255
          %s257 = smul.addr %s253, 128
          %s258 = scalar_lea.hbm %s1, %s257
          %s259 = sshll.u32 %s252, 4
          %s260 = int_to_ptr.vmem [resolvable:$true] %s259
          %265 = dma.hbm_to_vmem [thread:$0]  %s258, 8192, %s260, %s249, 128, 128, 8
        $region36: #{tpu_custom_call.1} parent=31 // pred_fallthru
          _
      $region32: #{tpu_custom_call.1} parent=5 // pred_fallthru
        _
      %p266 = scmp.le.s32.totalorder 1, %s20
      %p267 = scmp.lt.s32.totalorder %s20, 3
      %p268 = pnand %p266, %p267
      %p269 = pneg %p268
      // Predicated region
      $region37: #{tpu_custom_call.1} parent=5 // pred_check
        _
      $region38: #{tpu_custom_call.1} parent=5 // pred_check_branch
        %271 = sbr.rel (%p268) target = $region40
      $region39: #{tpu_custom_call.1} parent=5 // pred_region
        %s272 = ssub.s32 %s20, 1
        %s273 = sand.u32 %s45, 1
        %s274 = scalar_lea.sflag [#allocation6], %s273
        %s275 = sand.u32 %s45, 1
        %s276 = smul.addr %s275, 512
        %s277 = scalar_lea.vmem [#allocation5], %s276
        // Predicated region
        $region41: #{tpu_custom_call.1} parent=39 // pred_check
          %p278 = pneg %p58
        $region42: #{tpu_custom_call.1} parent=39 // pred_check_branch
          %280 = sbr.rel (%p278) target = $region44
        $region43: #{tpu_custom_call.1} parent=39 // pred_region
          %281 = dma.done %s274, 8192
        $region44: #{tpu_custom_call.1} parent=39 // pred_fallthru
          _
        // Predicated region
        $region45: #{tpu_custom_call.1} parent=39 // pred_check
          %p282 = pneg %p84
        $region46: #{tpu_custom_call.1} parent=39 // pred_check_branch
          %284 = sbr.rel (%p282) target = $region48
        $region47: #{tpu_custom_call.1} parent=39 // pred_region
          %285 = dma.done [#allocation9], 2048
        $region48: #{tpu_custom_call.1} parent=39 // pred_fallthru
          _
        // Predicated region
        $region49: #{tpu_custom_call.1} parent=39 // pred_check
          %p286 = pneg %p136
        $region50: #{tpu_custom_call.1} parent=39 // pred_check_branch
          %288 = sbr.rel (%p286) target = $region52
        $region51: #{tpu_custom_call.1} parent=39 // pred_region
          %289 = dma.done [#allocation9], 2048
        $region52: #{tpu_custom_call.1} parent=39 // pred_fallthru
          _
        %s290 = sand.u32 %s45, 1
        %s291 = scalar_lea.sflag [#allocation6], %s290
        %s292 = sand.u32 %s45, 1
        %s293 = smul.addr %s292, 512
        %s294 = scalar_lea.vmem [#allocation5], %s293
        %p295 = pneg %p58
        %p296 = pneg %p55
        %p297 = pneg %p84
        %p298 = pneg %p81
        %s299 = smul.u32 2, %s30
        %p300 = scmp.lt.s32.totalorder %s299, 1
        %s301 = scalar_select %p300, %s299, 1
        %s302 = scalar_lea.vmem %s3, %s301
        %p303 = pneg %p110
        %p304 = pneg %p107
        %p305 = pneg %p136
        %p306 = pneg %p133
        %p307 = pneg %p157
        %p308 = pneg %p154
        %p309 = pneg %p183
        %p310 = pneg %p180
        %s311 = sand.u32 %s170, 1
        %s312 = scalar_lea.sflag [#allocation7], %s311
        %s313 = sand.u32 %s170, 1
        %s314 = smul.addr %s313, 512
        %s315 = scalar_lea.vmem [#allocation11], %s314
        %s316 = smul.u32 64, %s29
        %s317 = smul.u32 2, %s30
        %s318 = smul.u32 2, %s30
        %p319 = scmp.lt.s32.totalorder %s318, 1
        %s320 = scalar_select %p319, %s318, 1
        %s321 = scalar_lea.vmem %s3, %s320
        %s322 = smul.u32 2, %s30
        %s323 = smul.u32 32, %s30
        %s324 = smul.u32 64, %s29
        %p326 = scmp.eq.s32.totalorder %s30, 0
        // Predicated region
        $region53: #{tpu_custom_call.1} parent=39 // pred_check
          %p327 = pneg %p326
        $region54: #{tpu_custom_call.1} parent=39 // pred_check_branch
          %329 = sbr.rel (%p327) target = $region56
        $region55: #{tpu_custom_call.1} parent=39 // pred_region
          %330 = vst [vmem:[#allocation2] sm:$0xff] 0.0
          %331 = vst [vmem:[#allocation2 + $0x8] sm:$0xff] 0.0
          %332 = vst [vmem:[#allocation2 + $0x10] sm:$0xff] 0.0
          %333 = vst [vmem:[#allocation2 + $0x18] sm:$0xff] 0.0
          %334 = vst [vmem:[#allocation2 + $0x20] sm:$0xff] 0.0
          %335 = vst [vmem:[#allocation2 + $0x28] sm:$0xff] 0.0
          %336 = vst [vmem:[#allocation2 + $0x30] sm:$0xff] 0.0
          %337 = vst [vmem:[#allocation2 + $0x38] sm:$0xff] 0.0
          %338 = vst [vmem:[#allocation2 + $0x40] sm:$0xff] 0.0
          %339 = vst [vmem:[#allocation2 + $0x48] sm:$0xff] 0.0
          %340 = vst [vmem:[#allocation2 + $0x50] sm:$0xff] 0.0
          %341 = vst [vmem:[#allocation2 + $0x58] sm:$0xff] 0.0
          %342 = vst [vmem:[#allocation2 + $0x60] sm:$0xff] 0.0
          %343 = vst [vmem:[#allocation2 + $0x68] sm:$0xff] 0.0
          %344 = vst [vmem:[#allocation2 + $0x70] sm:$0xff] 0.0
          %345 = vst [vmem:[#allocation2 + $0x78] sm:$0xff] 0.0
          %346 = vst [vmem:[#allocation2 + $0x80] sm:$0xff] 0.0
          %347 = vst [vmem:[#allocation2 + $0x88] sm:$0xff] 0.0
          %348 = vst [vmem:[#allocation2 + $0x90] sm:$0xff] 0.0
          %349 = vst [vmem:[#allocation2 + $0x98] sm:$0xff] 0.0
          %350 = vst [vmem:[#allocation2 + $0xa0] sm:$0xff] 0.0
          %351 = vst [vmem:[#allocation2 + $0xa8] sm:$0xff] 0.0
          %352 = vst [vmem:[#allocation2 + $0xb0] sm:$0xff] 0.0
          %353 = vst [vmem:[#allocation2 + $0xb8] sm:$0xff] 0.0
          %354 = vst [vmem:[#allocation2 + $0xc0] sm:$0xff] 0.0
          %355 = vst [vmem:[#allocation2 + $0xc8] sm:$0xff] 0.0
          %356 = vst [vmem:[#allocation2 + $0xd0] sm:$0xff] 0.0
          %357 = vst [vmem:[#allocation2 + $0xd8] sm:$0xff] 0.0
          %358 = vst [vmem:[#allocation2 + $0xe0] sm:$0xff] 0.0
          %359 = vst [vmem:[#allocation2 + $0xe8] sm:$0xff] 0.0
          %360 = vst [vmem:[#allocation2 + $0xf0] sm:$0xff] 0.0
          %361 = vst [vmem:[#allocation2 + $0xf8] sm:$0xff] 0.0
          %362 = vst [vmem:[#allocation2 + $0x100] sm:$0xff] 0.0
          %363 = vst [vmem:[#allocation2 + $0x108] sm:$0xff] 0.0
          %364 = vst [vmem:[#allocation2 + $0x110] sm:$0xff] 0.0
          %365 = vst [vmem:[#allocation2 + $0x118] sm:$0xff] 0.0
          %366 = vst [vmem:[#allocation2 + $0x120] sm:$0xff] 0.0
          %367 = vst [vmem:[#allocation2 + $0x128] sm:$0xff] 0.0
          %368 = vst [vmem:[#allocation2 + $0x130] sm:$0xff] 0.0
          %369 = vst [vmem:[#allocation2 + $0x138] sm:$0xff] 0.0
          %370 = vst [vmem:[#allocation2 + $0x140] sm:$0xff] 0.0
          %371 = vst [vmem:[#allocation2 + $0x148] sm:$0xff] 0.0
          %372 = vst [vmem:[#allocation2 + $0x150] sm:$0xff] 0.0
          %373 = vst [vmem:[#allocation2 + $0x158] sm:$0xff] 0.0
          %374 = vst [vmem:[#allocation2 + $0x160] sm:$0xff] 0.0
          %375 = vst [vmem:[#allocation2 + $0x168] sm:$0xff] 0.0
          %376 = vst [vmem:[#allocation2 + $0x170] sm:$0xff] 0.0
          %377 = vst [vmem:[#allocation2 + $0x178] sm:$0xff] 0.0
          %378 = vst [vmem:[#allocation2 + $0x180] sm:$0xff] 0.0
          %379 = vst [vmem:[#allocation2 + $0x188] sm:$0xff] 0.0
          %380 = vst [vmem:[#allocation2 + $0x190] sm:$0xff] 0.0
          %381 = vst [vmem:[#allocation2 + $0x198] sm:$0xff] 0.0
          %382 = vst [vmem:[#allocation2 + $0x1a0] sm:$0xff] 0.0
          %383 = vst [vmem:[#allocation2 + $0x1a8] sm:$0xff] 0.0
          %384 = vst [vmem:[#allocation2 + $0x1b0] sm:$0xff] 0.0
          %385 = vst [vmem:[#allocation2 + $0x1b8] sm:$0xff] 0.0
          %386 = vst [vmem:[#allocation2 + $0x1c0] sm:$0xff] 0.0
          %387 = vst [vmem:[#allocation2 + $0x1c8] sm:$0xff] 0.0
          %388 = vst [vmem:[#allocation2 + $0x1d0] sm:$0xff] 0.0
          %389 = vst [vmem:[#allocation2 + $0x1d8] sm:$0xff] 0.0
          %390 = vst [vmem:[#allocation2 + $0x1e0] sm:$0xff] 0.0
          %391 = vst [vmem:[#allocation2 + $0x1e8] sm:$0xff] 0.0
          %392 = vst [vmem:[#allocation2 + $0x1f0] sm:$0xff] 0.0
          %393 = vst [vmem:[#allocation2 + $0x1f8] sm:$0xff] 0.0
        $region56: #{tpu_custom_call.1} parent=39 // pred_fallthru
          _
        %v394 = vld [vmem:[%s277] sm:$0xff]
        %v395 = vld [vmem:[%s277 + $0x8] sm:$0xff]
        %v396 = vld [vmem:[%s277 + $0x10] sm:$0xff]
        %v397 = vld [vmem:[%s277 + $0x18] sm:$0xff]
        %v398 = vld [vmem:[%s277 + $0x20] sm:$0xff]
        %v399 = vld [vmem:[%s277 + $0x28] sm:$0xff]
        %v400 = vld [vmem:[%s277 + $0x30] sm:$0xff]
        %v401 = vld [vmem:[%s277 + $0x38] sm:$0xff]
        %v402 = vld [vmem:[%s277 + $0x40] sm:$0xff]
        %v403 = vld [vmem:[%s277 + $0x48] sm:$0xff]
        %v404 = vld [vmem:[%s277 + $0x50] sm:$0xff]
        %v405 = vld [vmem:[%s277 + $0x58] sm:$0xff]
        %v406 = vld [vmem:[%s277 + $0x60] sm:$0xff]
        %v407 = vld [vmem:[%s277 + $0x68] sm:$0xff]
        %v408 = vld [vmem:[%s277 + $0x70] sm:$0xff]
        %v409 = vld [vmem:[%s277 + $0x78] sm:$0xff]
        %v410 = vld [vmem:[%s277 + $0x80] sm:$0xff]
        %v411 = vld [vmem:[%s277 + $0x88] sm:$0xff]
        %v412 = vld [vmem:[%s277 + $0x90] sm:$0xff]
        %v413 = vld [vmem:[%s277 + $0x98] sm:$0xff]
        %v414 = vld [vmem:[%s277 + $0xa0] sm:$0xff]
        %v415 = vld [vmem:[%s277 + $0xa8] sm:$0xff]
        %v416 = vld [vmem:[%s277 + $0xb0] sm:$0xff]
        %v417 = vld [vmem:[%s277 + $0xb8] sm:$0xff]
        %v418 = vld [vmem:[%s277 + $0xc0] sm:$0xff]
        %v419 = vld [vmem:[%s277 + $0xc8] sm:$0xff]
        %v420 = vld [vmem:[%s277 + $0xd0] sm:$0xff]
        %v421 = vld [vmem:[%s277 + $0xd8] sm:$0xff]
        %v422 = vld [vmem:[%s277 + $0xe0] sm:$0xff]
        %v423 = vld [vmem:[%s277 + $0xe8] sm:$0xff]
        %v424 = vld [vmem:[%s277 + $0xf0] sm:$0xff]
        %v425 = vld [vmem:[%s277 + $0xf8] sm:$0xff]
        %v426 = vld [vmem:[%s277 + $0x100] sm:$0xff]
        %v427 = vld [vmem:[%s277 + $0x108] sm:$0xff]
        %v428 = vld [vmem:[%s277 + $0x110] sm:$0xff]
        %v429 = vld [vmem:[%s277 + $0x118] sm:$0xff]
        %v430 = vld [vmem:[%s277 + $0x120] sm:$0xff]
        %v431 = vld [vmem:[%s277 + $0x128] sm:$0xff]
        %v432 = vld [vmem:[%s277 + $0x130] sm:$0xff]
        %v433 = vld [vmem:[%s277 + $0x138] sm:$0xff]
        %v434 = vld [vmem:[%s277 + $0x140] sm:$0xff]
        %v435 = vld [vmem:[%s277 + $0x148] sm:$0xff]
        %v436 = vld [vmem:[%s277 + $0x150] sm:$0xff]
        %v437 = vld [vmem:[%s277 + $0x158] sm:$0xff]
        %v438 = vld [vmem:[%s277 + $0x160] sm:$0xff]
        %v439 = vld [vmem:[%s277 + $0x168] sm:$0xff]
        %v440 = vld [vmem:[%s277 + $0x170] sm:$0xff]
        %v441 = vld [vmem:[%s277 + $0x178] sm:$0xff]
        %v442 = vld [vmem:[%s277 + $0x180] sm:$0xff]
        %v443 = vld [vmem:[%s277 + $0x188] sm:$0xff]
        %v444 = vld [vmem:[%s277 + $0x190] sm:$0xff]
        %v445 = vld [vmem:[%s277 + $0x198] sm:$0xff]
        %v446 = vld [vmem:[%s277 + $0x1a0] sm:$0xff]
        %v447 = vld [vmem:[%s277 + $0x1a8] sm:$0xff]
        %v448 = vld [vmem:[%s277 + $0x1b0] sm:$0xff]
        %v449 = vld [vmem:[%s277 + $0x1b8] sm:$0xff]
        %v450 = vld [vmem:[%s277 + $0x1c0] sm:$0xff]
        %v451 = vld [vmem:[%s277 + $0x1c8] sm:$0xff]
        %v452 = vld [vmem:[%s277 + $0x1d0] sm:$0xff]
        %v453 = vld [vmem:[%s277 + $0x1d8] sm:$0xff]
        %v454 = vld [vmem:[%s277 + $0x1e0] sm:$0xff]
        %v455 = vld [vmem:[%s277 + $0x1e8] sm:$0xff]
        %v456 = vld [vmem:[%s277 + $0x1f0] sm:$0xff]
        %v457 = vld [vmem:[%s277 + $0x1f8] sm:$0xff]
        %v458 = vpack.c.bf16 %v395, %v394
        %v459 = vpack.c.bf16 %v397, %v396
        %v460 = vpack.c.bf16 %v399, %v398
        %v461 = vpack.c.bf16 %v401, %v400
        %v462 = vpack.c.bf16 %v403, %v402
        %v463 = vpack.c.bf16 %v405, %v404
        %v464 = vpack.c.bf16 %v407, %v406
        %v465 = vpack.c.bf16 %v409, %v408
        %v466 = vpack.c.bf16 %v411, %v410
        %v467 = vpack.c.bf16 %v413, %v412
        %v468 = vpack.c.bf16 %v415, %v414
        %v469 = vpack.c.bf16 %v417, %v416
        %v470 = vpack.c.bf16 %v419, %v418
        %v471 = vpack.c.bf16 %v421, %v420
        %v472 = vpack.c.bf16 %v423, %v422
        %v473 = vpack.c.bf16 %v425, %v424
        %v474 = vpack.c.bf16 %v427, %v426
        %v475 = vpack.c.bf16 %v429, %v428
        %v476 = vpack.c.bf16 %v431, %v430
        %v477 = vpack.c.bf16 %v433, %v432
        %v478 = vpack.c.bf16 %v435, %v434
        %v479 = vpack.c.bf16 %v437, %v436
        %v480 = vpack.c.bf16 %v439, %v438
        %v481 = vpack.c.bf16 %v441, %v440
        %v482 = vpack.c.bf16 %v443, %v442
        %v483 = vpack.c.bf16 %v445, %v444
        %v484 = vpack.c.bf16 %v447, %v446
        %v485 = vpack.c.bf16 %v449, %v448
        %v486 = vpack.c.bf16 %v451, %v450
        %v487 = vpack.c.bf16 %v453, %v452
        %v488 = vpack.c.bf16 %v455, %v454
        %v489 = vpack.c.bf16 %v457, %v456
        %v490 = vld [vmem:[#allocation8] sm:$0xff]
        %v491 = vld [vmem:[#allocation8 + $0x8] sm:$0xff]
        %v492 = vld [vmem:[#allocation8 + $0x10] sm:$0xff]
        %v493 = vld [vmem:[#allocation8 + $0x18] sm:$0xff]
        %v494 = vld [vmem:[#allocation8 + $0x20] sm:$0xff]
        %v495 = vld [vmem:[#allocation8 + $0x28] sm:$0xff]
        %v496 = vld [vmem:[#allocation8 + $0x30] sm:$0xff]
        %v497 = vld [vmem:[#allocation8 + $0x38] sm:$0xff]
        %v498 = vld [vmem:[#allocation8 + $0x40] sm:$0xff]
        %v499 = vld [vmem:[#allocation8 + $0x48] sm:$0xff]
        %v500 = vld [vmem:[#allocation8 + $0x50] sm:$0xff]
        %v501 = vld [vmem:[#allocation8 + $0x58] sm:$0xff]
        %v502 = vld [vmem:[#allocation8 + $0x60] sm:$0xff]
        %v503 = vld [vmem:[#allocation8 + $0x68] sm:$0xff]
        %v504 = vld [vmem:[#allocation8 + $0x70] sm:$0xff]
        %v505 = vld [vmem:[#allocation8 + $0x78] sm:$0xff]
        %v506 = vld [vmem:[%s321] sm:$0x3]
        %v508 = vlaneseq
        %v509 = vshrl.u32 %v508, 7
        %v510 = vsub.s32 0, %v509
        %v511 = vrot.slane %v506, %v510
        %v512 = vlaneseq
        %v513 = vshrl.u32 %v512, 7
        %v514 = vsub.s32 1, %v513
        %v515 = vrot.slane %v506, %v514
        %v534 = vunpack.c.l.b16 %v490
        %v535 = vunpack.c.h.b16 %v490
        %v536 = vunpack.c.l.b16 %v491
        %v537 = vunpack.c.h.b16 %v491
        %v538 = vunpack.c.l.b16 %v492
        %v539 = vunpack.c.h.b16 %v492
        %v540 = vunpack.c.l.b16 %v493
        %v541 = vunpack.c.h.b16 %v493
        %v542 = vunpack.c.l.b16 %v494
        %v543 = vunpack.c.h.b16 %v494
        %v544 = vunpack.c.l.b16 %v495
        %v545 = vunpack.c.h.b16 %v495
        %v546 = vunpack.c.l.b16 %v496
        %v547 = vunpack.c.h.b16 %v496
        %v548 = vunpack.c.l.b16 %v497
        %v549 = vunpack.c.h.b16 %v497
        %v550 = vunpack.c.l.b16 %v498
        %v551 = vunpack.c.h.b16 %v498
        %v552 = vunpack.c.l.b16 %v499
        %v553 = vunpack.c.h.b16 %v499
        %v554 = vunpack.c.l.b16 %v500
        %v555 = vunpack.c.h.b16 %v500
        %v556 = vunpack.c.l.b16 %v501
        %v557 = vunpack.c.h.b16 %v501
        %v558 = vunpack.c.l.b16 %v502
        %v559 = vunpack.c.h.b16 %v502
        %v560 = vunpack.c.l.b16 %v503
        %v561 = vunpack.c.h.b16 %v503
        %v562 = vunpack.c.l.b16 %v504
        %v563 = vunpack.c.h.b16 %v504
        %v564 = vunpack.c.l.b16 %v505
        %v565 = vunpack.c.h.b16 %v505
        %v566 = vpack.c.b16 %v536, %v534
        %v567 = vpack.c.b16 %v537, %v535
        %v568 = vpack.c.b16 %v540, %v538
        %v569 = vpack.c.b16 %v541, %v539
        %v570 = vpack.c.b16 %v544, %v542
        %v571 = vpack.c.b16 %v545, %v543
        %v572 = vpack.c.b16 %v548, %v546
        %v573 = vpack.c.b16 %v549, %v547
        %v574 = vpack.c.b16 %v552, %v550
        %v575 = vpack.c.b16 %v553, %v551
        %v576 = vpack.c.b16 %v556, %v554
        %v577 = vpack.c.b16 %v557, %v555
        %v578 = vpack.c.b16 %v560, %v558
        %v579 = vpack.c.b16 %v561, %v559
        %v580 = vpack.c.b16 %v564, %v562
        %v581 = vpack.c.b16 %v565, %v563
        %598 = vmatprep.subr.bf16.mxu0 %v581
        %599 = vmatpush1.bf16.msra.mxu0 %v580
        %600 = vmatprep.subr.bf16.mxu0 %v579
        %601 = vmatpush1.bf16.msra.mxu0 %v578
        %602 = vmatprep.subr.bf16.mxu0 %v577
        %603 = vmatpush1.bf16.msra.mxu0 %v576
        %604 = vmatprep.subr.bf16.mxu0 %v575
        %605 = vmatpush1.bf16.msra.mxu0 %v574
        %606 = vmatprep.subr.bf16.mxu0 %v573
        %607 = vmatpush1.bf16.msra.mxu0 %v572
        %608 = vmatprep.subr.bf16.mxu0 %v571
        %609 = vmatpush1.bf16.msra.mxu0 %v570
        %610 = vmatprep.subr.bf16.mxu0 %v569
        %611 = vmatpush1.bf16.msra.mxu0 %v568
        %612 = vmatprep.subr.bf16.mxu0 %v567
        %613 = vmatpush1.bf16.msra.mxu0 %v566
        %614 = vmatprep.subr.bf16.mxu0 0
        %615 = vmatpush2.bf16.msra.mxu0 0
        %616 = vmatprep.subr.bf16.mxu0 0
        %617 = vmatpush2.bf16.msra.mxu0 0
        %618 = vmatprep.subr.bf16.mxu0 0
        %619 = vmatpush2.bf16.msra.mxu0 0
        %620 = vmatprep.subr.bf16.mxu0 0
        %621 = vmatpush2.bf16.msra.mxu0 0
        %622 = vmatprep.subr.bf16.mxu0 0
        %623 = vmatpush2.bf16.msra.mxu0 0
        %624 = vmatprep.subr.bf16.mxu0 0
        %625 = vmatpush2.bf16.msra.mxu0 0
        %626 = vmatprep.subr.bf16.mxu0 0
        %627 = vmatpush2.bf16.msra.mxu0 0
        %628 = vmatprep.subr.bf16.mxu0 0
        %629 = vmatpush2.bf16.msra.mxu0 0
        %630 = vmatprep.mubr.bf16.mxu0 0
        %631 = vmatmul.mubr.bf16.gmra.mxu0 %v458
        %v632 = vpop.f32.mrf.mxu0
        %v633 = vadd.f32 %v511, %v632
        %v634 = vpop.f32.mrf.mxu0
        %v635 = vadd.f32 %v515, %v634
        %v636 = vpop.f32.mrf.mxu0
        %v637 = vadd.f32 %v511, %v636
        %v638 = vpop.f32.mrf.mxu0
        %v639 = vadd.f32 %v515, %v638
        %640 = vmatprep.mubr.bf16.mxu0 0
        %641 = vmatmul.mubr.bf16.gmra.mxu0 %v459
        %v642 = vpop.f32.mrf.mxu0
        %v643 = vadd.f32 %v511, %v642
        %v644 = vpop.f32.mrf.mxu0
        %v645 = vadd.f32 %v515, %v644
        %v646 = vpop.f32.mrf.mxu0
        %v647 = vadd.f32 %v511, %v646
        %v648 = vpop.f32.mrf.mxu0
        %v649 = vadd.f32 %v515, %v648
        %650 = vmatprep.mubr.bf16.mxu0 0
        %651 = vmatmul.mubr.bf16.gmra.mxu0 %v460
        %v652 = vpop.f32.mrf.mxu0
        %v653 = vadd.f32 %v511, %v652
        %v654 = vpop.f32.mrf.mxu0
        %v655 = vadd.f32 %v515, %v654
        %v656 = vpop.f32.mrf.mxu0
        %v657 = vadd.f32 %v511, %v656
        %v658 = vpop.f32.mrf.mxu0
        %v659 = vadd.f32 %v515, %v658
        %660 = vmatprep.mubr.bf16.mxu0 0
        %661 = vmatmul.mubr.bf16.gmra.mxu0 %v461
        %v662 = vpop.f32.mrf.mxu0
        %v663 = vadd.f32 %v511, %v662
        %v664 = vpop.f32.mrf.mxu0
        %v665 = vadd.f32 %v515, %v664
        %v666 = vpop.f32.mrf.mxu0
        %v667 = vadd.f32 %v511, %v666
        %v668 = vpop.f32.mrf.mxu0
        %v669 = vadd.f32 %v515, %v668
        %670 = vmatprep.mubr.bf16.mxu0 0
        %671 = vmatmul.mubr.bf16.gmra.mxu0 %v462
        %v672 = vpop.f32.mrf.mxu0
        %v673 = vadd.f32 %v511, %v672
        %v674 = vpop.f32.mrf.mxu0
        %v675 = vadd.f32 %v515, %v674
        %v676 = vpop.f32.mrf.mxu0
        %v677 = vadd.f32 %v511, %v676
        %v678 = vpop.f32.mrf.mxu0
        %v679 = vadd.f32 %v515, %v678
        %680 = vmatprep.mubr.bf16.mxu0 0
        %681 = vmatmul.mubr.bf16.gmra.mxu0 %v463
        %v682 = vpop.f32.mrf.mxu0
        %v683 = vadd.f32 %v511, %v682
        %v684 = vpop.f32.mrf.mxu0
        %v685 = vadd.f32 %v515, %v684
        %v686 = vpop.f32.mrf.mxu0
        %v687 = vadd.f32 %v511, %v686
        %v688 = vpop.f32.mrf.mxu0
        %v689 = vadd.f32 %v515, %v688
        %690 = vmatprep.mubr.bf16.mxu0 0
        %691 = vmatmul.mubr.bf16.gmra.mxu0 %v464
        %v692 = vpop.f32.mrf.mxu0
        %v693 = vadd.f32 %v511, %v692
        %v694 = vpop.f32.mrf.mxu0
        %v695 = vadd.f32 %v515, %v694
        %v696 = vpop.f32.mrf.mxu0
        %v697 = vadd.f32 %v511, %v696
        %v698 = vpop.f32.mrf.mxu0
        %v699 = vadd.f32 %v515, %v698
        %700 = vmatprep.mubr.bf16.mxu0 0
        %701 = vmatmul.mubr.bf16.gmra.mxu0 %v465
        %v702 = vpop.f32.mrf.mxu0
        %v703 = vadd.f32 %v511, %v702
        %v704 = vpop.f32.mrf.mxu0
        %v705 = vadd.f32 %v515, %v704
        %v706 = vpop.f32.mrf.mxu0
        %v707 = vadd.f32 %v511, %v706
        %v708 = vpop.f32.mrf.mxu0
        %v709 = vadd.f32 %v515, %v708
        %710 = vmatprep.mubr.bf16.mxu0 0
        %711 = vmatmul.mubr.bf16.gmra.mxu0 %v466
        %v712 = vpop.f32.mrf.mxu0
        %v713 = vadd.f32 %v511, %v712
        %v714 = vpop.f32.mrf.mxu0
        %v715 = vadd.f32 %v515, %v714
        %v716 = vpop.f32.mrf.mxu0
        %v717 = vadd.f32 %v511, %v716
        %v718 = vpop.f32.mrf.mxu0
        %v719 = vadd.f32 %v515, %v718
        %720 = vmatprep.mubr.bf16.mxu0 0
        %721 = vmatmul.mubr.bf16.gmra.mxu0 %v467
        %v722 = vpop.f32.mrf.mxu0
        %v723 = vadd.f32 %v511, %v722
        %v724 = vpop.f32.mrf.mxu0
        %v725 = vadd.f32 %v515, %v724
        %v726 = vpop.f32.mrf.mxu0
        %v727 = vadd.f32 %v511, %v726
        %v728 = vpop.f32.mrf.mxu0
        %v729 = vadd.f32 %v515, %v728
        %730 = vmatprep.mubr.bf16.mxu0 0
        %731 = vmatmul.mubr.bf16.gmra.mxu0 %v468
        %v732 = vpop.f32.mrf.mxu0
        %v733 = vadd.f32 %v511, %v732
        %v734 = vpop.f32.mrf.mxu0
        %v735 = vadd.f32 %v515, %v734
        %v736 = vpop.f32.mrf.mxu0
        %v737 = vadd.f32 %v511, %v736
        %v738 = vpop.f32.mrf.mxu0
        %v739 = vadd.f32 %v515, %v738
        %740 = vmatprep.mubr.bf16.mxu0 0
        %741 = vmatmul.mubr.bf16.gmra.mxu0 %v469
        %v742 = vpop.f32.mrf.mxu0
        %v743 = vadd.f32 %v511, %v742
        %v744 = vpop.f32.mrf.mxu0
        %v745 = vadd.f32 %v515, %v744
        %v746 = vpop.f32.mrf.mxu0
        %v747 = vadd.f32 %v511, %v746
        %v748 = vpop.f32.mrf.mxu0
        %v749 = vadd.f32 %v515, %v748
        %750 = vmatprep.mubr.bf16.mxu0 0
        %751 = vmatmul.mubr.bf16.gmra.mxu0 %v470
        %v752 = vpop.f32.mrf.mxu0
        %v753 = vadd.f32 %v511, %v752
        %v754 = vpop.f32.mrf.mxu0
        %v755 = vadd.f32 %v515, %v754
        %v756 = vpop.f32.mrf.mxu0
        %v757 = vadd.f32 %v511, %v756
        %v758 = vpop.f32.mrf.mxu0
        %v759 = vadd.f32 %v515, %v758
        %760 = vmatprep.mubr.bf16.mxu0 0
        %761 = vmatmul.mubr.bf16.gmra.mxu0 %v471
        %v762 = vpop.f32.mrf.mxu0
        %v763 = vadd.f32 %v511, %v762
        %v764 = vpop.f32.mrf.mxu0
        %v765 = vadd.f32 %v515, %v764
        %v766 = vpop.f32.mrf.mxu0
        %v767 = vadd.f32 %v511, %v766
        %v768 = vpop.f32.mrf.mxu0
        %v769 = vadd.f32 %v515, %v768
        %770 = vmatprep.mubr.bf16.mxu0 0
        %771 = vmatmul.mubr.bf16.gmra.mxu0 %v472
        %v772 = vpop.f32.mrf.mxu0
        %v773 = vadd.f32 %v511, %v772
        %v774 = vpop.f32.mrf.mxu0
        %v775 = vadd.f32 %v515, %v774
        %v776 = vpop.f32.mrf.mxu0
        %v777 = vadd.f32 %v511, %v776
        %v778 = vpop.f32.mrf.mxu0
        %v779 = vadd.f32 %v515, %v778
        %780 = vmatprep.mubr.bf16.mxu0 0
        %781 = vmatmul.mubr.bf16.gmra.mxu0 %v473
        %v782 = vpop.f32.mrf.mxu0
        %v783 = vadd.f32 %v511, %v782
        %v784 = vpop.f32.mrf.mxu0
        %v785 = vadd.f32 %v515, %v784
        %v786 = vpop.f32.mrf.mxu0
        %v787 = vadd.f32 %v511, %v786
        %v788 = vpop.f32.mrf.mxu0
        %v789 = vadd.f32 %v515, %v788
        %790 = vmatprep.mubr.bf16.mxu0 0
        %791 = vmatmul.mubr.bf16.gmra.mxu0 %v474
        %v792 = vpop.f32.mrf.mxu0
        %v793 = vadd.f32 %v511, %v792
        %v794 = vpop.f32.mrf.mxu0
        %v795 = vadd.f32 %v515, %v794
        %v796 = vpop.f32.mrf.mxu0
        %v797 = vadd.f32 %v511, %v796
        %v798 = vpop.f32.mrf.mxu0
        %v799 = vadd.f32 %v515, %v798
        %800 = vmatprep.mubr.bf16.mxu0 0
        %801 = vmatmul.mubr.bf16.gmra.mxu0 %v475
        %v802 = vpop.f32.mrf.mxu0
        %v803 = vadd.f32 %v511, %v802
        %v804 = vpop.f32.mrf.mxu0
        %v805 = vadd.f32 %v515, %v804
        %v806 = vpop.f32.mrf.mxu0
        %v807 = vadd.f32 %v511, %v806
        %v808 = vpop.f32.mrf.mxu0
        %v809 = vadd.f32 %v515, %v808
        %810 = vmatprep.mubr.bf16.mxu0 0
        %811 = vmatmul.mubr.bf16.gmra.mxu0 %v476
        %v812 = vpop.f32.mrf.mxu0
        %v813 = vadd.f32 %v511, %v812
        %v814 = vpop.f32.mrf.mxu0
        %v815 = vadd.f32 %v515, %v814
        %v816 = vpop.f32.mrf.mxu0
        %v817 = vadd.f32 %v511, %v816
        %v818 = vpop.f32.mrf.mxu0
        %v819 = vadd.f32 %v515, %v818
        %820 = vmatprep.mubr.bf16.mxu0 0
        %821 = vmatmul.mubr.bf16.gmra.mxu0 %v477
        %v822 = vpop.f32.mrf.mxu0
        %v823 = vadd.f32 %v511, %v822
        %v824 = vpop.f32.mrf.mxu0
        %v825 = vadd.f32 %v515, %v824
        %v826 = vpop.f32.mrf.mxu0
        %v827 = vadd.f32 %v511, %v826
        %v828 = vpop.f32.mrf.mxu0
        %v829 = vadd.f32 %v515, %v828
        %830 = vmatprep.mubr.bf16.mxu0 0
        %831 = vmatmul.mubr.bf16.gmra.mxu0 %v478
        %v832 = vpop.f32.mrf.mxu0
        %v833 = vadd.f32 %v511, %v832
        %v834 = vpop.f32.mrf.mxu0
        %v835 = vadd.f32 %v515, %v834
        %v836 = vpop.f32.mrf.mxu0
        %v837 = vadd.f32 %v511, %v836
        %v838 = vpop.f32.mrf.mxu0
        %v839 = vadd.f32 %v515, %v838
        %840 = vmatprep.mubr.bf16.mxu0 0
        %841 = vmatmul.mubr.bf16.gmra.mxu0 %v479
        %v842 = vpop.f32.mrf.mxu0
        %v843 = vadd.f32 %v511, %v842
        %v844 = vpop.f32.mrf.mxu0
        %v845 = vadd.f32 %v515, %v844
        %v846 = vpop.f32.mrf.mxu0
        %v847 = vadd.f32 %v511, %v846
        %v848 = vpop.f32.mrf.mxu0
        %v849 = vadd.f32 %v515, %v848
        %850 = vmatprep.mubr.bf16.mxu0 0
        %851 = vmatmul.mubr.bf16.gmra.mxu0 %v480
        %v852 = vpop.f32.mrf.mxu0
        %v853 = vadd.f32 %v511, %v852
        %v854 = vpop.f32.mrf.mxu0
        %v855 = vadd.f32 %v515, %v854
        %v856 = vpop.f32.mrf.mxu0
        %v857 = vadd.f32 %v511, %v856
        %v858 = vpop.f32.mrf.mxu0
        %v859 = vadd.f32 %v515, %v858
        %860 = vmatprep.mubr.bf16.mxu0 0
        %861 = vmatmul.mubr.bf16.gmra.mxu0 %v481
        %v862 = vpop.f32.mrf.mxu0
        %v863 = vadd.f32 %v511, %v862
        %v864 = vpop.f32.mrf.mxu0
        %v865 = vadd.f32 %v515, %v864
        %v866 = vpop.f32.mrf.mxu0
        %v867 = vadd.f32 %v511, %v866
        %v868 = vpop.f32.mrf.mxu0
        %v869 = vadd.f32 %v515, %v868
        %870 = vmatprep.mubr.bf16.mxu0 0
        %871 = vmatmul.mubr.bf16.gmra.mxu0 %v482
        %v872 = vpop.f32.mrf.mxu0
        %v873 = vadd.f32 %v511, %v872
        %v874 = vpop.f32.mrf.mxu0
        %v875 = vadd.f32 %v515, %v874
        %v876 = vpop.f32.mrf.mxu0
        %v877 = vadd.f32 %v511, %v876
        %v878 = vpop.f32.mrf.mxu0
        %v879 = vadd.f32 %v515, %v878
        %880 = vmatprep.mubr.bf16.mxu0 0
        %881 = vmatmul.mubr.bf16.gmra.mxu0 %v483
        %v882 = vpop.f32.mrf.mxu0
        %v883 = vadd.f32 %v511, %v882
        %v884 = vpop.f32.mrf.mxu0
        %v885 = vadd.f32 %v515, %v884
        %v886 = vpop.f32.mrf.mxu0
        %v887 = vadd.f32 %v511, %v886
        %v888 = vpop.f32.mrf.mxu0
        %v889 = vadd.f32 %v515, %v888
        %890 = vmatprep.mubr.bf16.mxu0 0
        %891 = vmatmul.mubr.bf16.gmra.mxu0 %v484
        %v892 = vpop.f32.mrf.mxu0
        %v893 = vadd.f32 %v511, %v892
        %v894 = vpop.f32.mrf.mxu0
        %v895 = vadd.f32 %v515, %v894
        %v896 = vpop.f32.mrf.mxu0
        %v897 = vadd.f32 %v511, %v896
        %v898 = vpop.f32.mrf.mxu0
        %v899 = vadd.f32 %v515, %v898
        %900 = vmatprep.mubr.bf16.mxu0 0
        %901 = vmatmul.mubr.bf16.gmra.mxu0 %v485
        %v902 = vpop.f32.mrf.mxu0
        %v903 = vadd.f32 %v511, %v902
        %v904 = vpop.f32.mrf.mxu0
        %v905 = vadd.f32 %v515, %v904
        %v906 = vpop.f32.mrf.mxu0
        %v907 = vadd.f32 %v511, %v906
        %v908 = vpop.f32.mrf.mxu0
        %v909 = vadd.f32 %v515, %v908
        %910 = vmatprep.mubr.bf16.mxu0 0
        %911 = vmatmul.mubr.bf16.gmra.mxu0 %v486
        %v912 = vpop.f32.mrf.mxu0
        %v913 = vadd.f32 %v511, %v912
        %v914 = vpop.f32.mrf.mxu0
        %v915 = vadd.f32 %v515, %v914
        %v916 = vpop.f32.mrf.mxu0
        %v917 = vadd.f32 %v511, %v916
        %v918 = vpop.f32.mrf.mxu0
        %v919 = vadd.f32 %v515, %v918
        %920 = vmatprep.mubr.bf16.mxu0 0
        %921 = vmatmul.mubr.bf16.gmra.mxu0 %v487
        %v922 = vpop.f32.mrf.mxu0
        %v923 = vadd.f32 %v511, %v922
        %v924 = vpop.f32.mrf.mxu0
        %v925 = vadd.f32 %v515, %v924
        %v926 = vpop.f32.mrf.mxu0
        %v927 = vadd.f32 %v511, %v926
        %v928 = vpop.f32.mrf.mxu0
        %v929 = vadd.f32 %v515, %v928
        %930 = vmatprep.mubr.bf16.mxu0 0
        %931 = vmatmul.mubr.bf16.gmra.mxu0 %v488
        %v932 = vpop.f32.mrf.mxu0
        %v933 = vadd.f32 %v511, %v932
        %v934 = vpop.f32.mrf.mxu0
        %v935 = vadd.f32 %v515, %v934
        %v936 = vpop.f32.mrf.mxu0
        %v937 = vadd.f32 %v511, %v936
        %v938 = vpop.f32.mrf.mxu0
        %v939 = vadd.f32 %v515, %v938
        %940 = vmatprep.mubr.bf16.mxu0 0
        %941 = vmatmul.mubr.bf16.gmra.mxu0 %v489
        %v942 = vpop.f32.mrf.mxu0
        %v943 = vadd.f32 %v511, %v942
        %v944 = vpop.f32.mrf.mxu0
        %v945 = vadd.f32 %v515, %v944
        %v946 = vpop.f32.mrf.mxu0
        %v947 = vadd.f32 %v511, %v946
        %v948 = vpop.f32.mrf.mxu0
        %v949 = vadd.f32 %v515, %v948
        %950 = vdwg.mxu0
        %v951 = vmul.f32 %v633, %v633
        %v952 = vmul.f32 %v635, %v635
        %v953 = vmul.f32 %v637, %v637
        %v954 = vmul.f32 %v639, %v639
        %v955 = vmul.f32 %v643, %v643
        %v956 = vmul.f32 %v645, %v645
        %v957 = vmul.f32 %v647, %v647
        %v958 = vmul.f32 %v649, %v649
        %v959 = vmul.f32 %v653, %v653
        %v960 = vmul.f32 %v655, %v655
        %v961 = vmul.f32 %v657, %v657
        %v962 = vmul.f32 %v659, %v659
        %v963 = vmul.f32 %v663, %v663
        %v964 = vmul.f32 %v665, %v665
        %v965 = vmul.f32 %v667, %v667
        %v966 = vmul.f32 %v669, %v669
        %v967 = vmul.f32 %v673, %v673
        %v968 = vmul.f32 %v675, %v675
        %v969 = vmul.f32 %v677, %v677
        %v970 = vmul.f32 %v679, %v679
        %v971 = vmul.f32 %v683, %v683
        %v972 = vmul.f32 %v685, %v685
        %v973 = vmul.f32 %v687, %v687
        %v974 = vmul.f32 %v689, %v689
        %v975 = vmul.f32 %v693, %v693
        %v976 = vmul.f32 %v695, %v695
        %v977 = vmul.f32 %v697, %v697
        %v978 = vmul.f32 %v699, %v699
        %v979 = vmul.f32 %v703, %v703
        %v980 = vmul.f32 %v705, %v705
        %v981 = vmul.f32 %v707, %v707
        %v982 = vmul.f32 %v709, %v709
        %v983 = vmul.f32 %v713, %v713
        %v984 = vmul.f32 %v715, %v715
        %v985 = vmul.f32 %v717, %v717
        %v986 = vmul.f32 %v719, %v719
        %v987 = vmul.f32 %v723, %v723
        %v988 = vmul.f32 %v725, %v725
        %v989 = vmul.f32 %v727, %v727
        %v990 = vmul.f32 %v729, %v729
        %v991 = vmul.f32 %v733, %v733
        %v992 = vmul.f32 %v735, %v735
        %v993 = vmul.f32 %v737, %v737
        %v994 = vmul.f32 %v739, %v739
        %v995 = vmul.f32 %v743, %v743
        %v996 = vmul.f32 %v745, %v745
        %v997 = vmul.f32 %v747, %v747
        %v998 = vmul.f32 %v749, %v749
        %v999 = vmul.f32 %v753, %v753
        %v1000 = vmul.f32 %v755, %v755
        %v1001 = vmul.f32 %v757, %v757
        %v1002 = vmul.f32 %v759, %v759
        %v1003 = vmul.f32 %v763, %v763
        %v1004 = vmul.f32 %v765, %v765
        %v1005 = vmul.f32 %v767, %v767
        %v1006 = vmul.f32 %v769, %v769
        %v1007 = vmul.f32 %v773, %v773
        %v1008 = vmul.f32 %v775, %v775
        %v1009 = vmul.f32 %v777, %v777
        %v1010 = vmul.f32 %v779, %v779
        %v1011 = vmul.f32 %v783, %v783
        %v1012 = vmul.f32 %v785, %v785
        %v1013 = vmul.f32 %v787, %v787
        %v1014 = vmul.f32 %v789, %v789
        %v1015 = vmul.f32 %v793, %v793
        %v1016 = vmul.f32 %v795, %v795
        %v1017 = vmul.f32 %v797, %v797
        %v1018 = vmul.f32 %v799, %v799
        %v1019 = vmul.f32 %v803, %v803
        %v1020 = vmul.f32 %v805, %v805
        %v1021 = vmul.f32 %v807, %v807
        %v1022 = vmul.f32 %v809, %v809
        %v1023 = vmul.f32 %v813, %v813
        %v1024 = vmul.f32 %v815, %v815
        %v1025 = vmul.f32 %v817, %v817
        %v1026 = vmul.f32 %v819, %v819
        %v1027 = vmul.f32 %v823, %v823
        %v1028 = vmul.f32 %v825, %v825
        %v1029 = vmul.f32 %v827, %v827
        %v1030 = vmul.f32 %v829, %v829
        %v1031 = vmul.f32 %v833, %v833
        %v1032 = vmul.f32 %v835, %v835
        %v1033 = vmul.f32 %v837, %v837
        %v1034 = vmul.f32 %v839, %v839
        %v1035 = vmul.f32 %v843, %v843
        %v1036 = vmul.f32 %v845, %v845
        %v1037 = vmul.f32 %v847, %v847
        %v1038 = vmul.f32 %v849, %v849
        %v1039 = vmul.f32 %v853, %v853
        %v1040 = vmul.f32 %v855, %v855
        %v1041 = vmul.f32 %v857, %v857
        %v1042 = vmul.f32 %v859, %v859
        %v1043 = vmul.f32 %v863, %v863
        %v1044 = vmul.f32 %v865, %v865
        %v1045 = vmul.f32 %v867, %v867
        %v1046 = vmul.f32 %v869, %v869
        %v1047 = vmul.f32 %v873, %v873
        %v1048 = vmul.f32 %v875, %v875
        %v1049 = vmul.f32 %v877, %v877
        %v1050 = vmul.f32 %v879, %v879
        %v1051 = vmul.f32 %v883, %v883
        %v1052 = vmul.f32 %v885, %v885
        %v1053 = vmul.f32 %v887, %v887
        %v1054 = vmul.f32 %v889, %v889
        %v1055 = vmul.f32 %v893, %v893
        %v1056 = vmul.f32 %v895, %v895
        %v1057 = vmul.f32 %v897, %v897
        %v1058 = vmul.f32 %v899, %v899
        %v1059 = vmul.f32 %v903, %v903
        %v1060 = vmul.f32 %v905, %v905
        %v1061 = vmul.f32 %v907, %v907
        %v1062 = vmul.f32 %v909, %v909
        %v1063 = vmul.f32 %v913, %v913
        %v1064 = vmul.f32 %v915, %v915
        %v1065 = vmul.f32 %v917, %v917
        %v1066 = vmul.f32 %v919, %v919
        %v1067 = vmul.f32 %v923, %v923
        %v1068 = vmul.f32 %v925, %v925
        %v1069 = vmul.f32 %v927, %v927
        %v1070 = vmul.f32 %v929, %v929
        %v1071 = vmul.f32 %v933, %v933
        %v1072 = vmul.f32 %v935, %v935
        %v1073 = vmul.f32 %v937, %v937
        %v1074 = vmul.f32 %v939, %v939
        %v1075 = vmul.f32 %v943, %v943
        %v1076 = vmul.f32 %v945, %v945
        %v1077 = vmul.f32 %v947, %v947
        %v1078 = vmul.f32 %v949, %v949
        %v1079 = vmul.f32 %v633, %v951
        %v1080 = vmul.f32 %v635, %v952
        %v1081 = vmul.f32 %v637, %v953
        %v1082 = vmul.f32 %v639, %v954
        %v1083 = vmul.f32 %v643, %v955
        %v1084 = vmul.f32 %v645, %v956
        %v1085 = vmul.f32 %v647, %v957
        %v1086 = vmul.f32 %v649, %v958
        %v1087 = vmul.f32 %v653, %v959
        %v1088 = vmul.f32 %v655, %v960
        %v1089 = vmul.f32 %v657, %v961
        %v1090 = vmul.f32 %v659, %v962
        %v1091 = vmul.f32 %v663, %v963
        %v1092 = vmul.f32 %v665, %v964
        %v1093 = vmul.f32 %v667, %v965
        %v1094 = vmul.f32 %v669, %v966
        %v1095 = vmul.f32 %v673, %v967
        %v1096 = vmul.f32 %v675, %v968
        %v1097 = vmul.f32 %v677, %v969
        %v1098 = vmul.f32 %v679, %v970
        %v1099 = vmul.f32 %v683, %v971
        %v1100 = vmul.f32 %v685, %v972
        %v1101 = vmul.f32 %v687, %v973
        %v1102 = vmul.f32 %v689, %v974
        %v1103 = vmul.f32 %v693, %v975
        %v1104 = vmul.f32 %v695, %v976
        %v1105 = vmul.f32 %v697, %v977
        %v1106 = vmul.f32 %v699, %v978
        %v1107 = vmul.f32 %v703, %v979
        %v1108 = vmul.f32 %v705, %v980
        %v1109 = vmul.f32 %v707, %v981
        %v1110 = vmul.f32 %v709, %v982
        %v1111 = vmul.f32 %v713, %v983
        %v1112 = vmul.f32 %v715, %v984
        %v1113 = vmul.f32 %v717, %v985
        %v1114 = vmul.f32 %v719, %v986
        %v1115 = vmul.f32 %v723, %v987
        %v1116 = vmul.f32 %v725, %v988
        %v1117 = vmul.f32 %v727, %v989
        %v1118 = vmul.f32 %v729, %v990
        %v1119 = vmul.f32 %v733, %v991
        %v1120 = vmul.f32 %v735, %v992
        %v1121 = vmul.f32 %v737, %v993
        %v1122 = vmul.f32 %v739, %v994
        %v1123 = vmul.f32 %v743, %v995
        %v1124 = vmul.f32 %v745, %v996
        %v1125 = vmul.f32 %v747, %v997
        %v1126 = vmul.f32 %v749, %v998
        %v1127 = vmul.f32 %v753, %v999
        %v1128 = vmul.f32 %v755, %v1000
        %v1129 = vmul.f32 %v757, %v1001
        %v1130 = vmul.f32 %v759, %v1002
        %v1131 = vmul.f32 %v763, %v1003
        %v1132 = vmul.f32 %v765, %v1004
        %v1133 = vmul.f32 %v767, %v1005
        %v1134 = vmul.f32 %v769, %v1006
        %v1135 = vmul.f32 %v773, %v1007
        %v1136 = vmul.f32 %v775, %v1008
        %v1137 = vmul.f32 %v777, %v1009
        %v1138 = vmul.f32 %v779, %v1010
        %v1139 = vmul.f32 %v783, %v1011
        %v1140 = vmul.f32 %v785, %v1012
        %v1141 = vmul.f32 %v787, %v1013
        %v1142 = vmul.f32 %v789, %v1014
        %v1143 = vmul.f32 %v793, %v1015
        %v1144 = vmul.f32 %v795, %v1016
        %v1145 = vmul.f32 %v797, %v1017
        %v1146 = vmul.f32 %v799, %v1018
        %v1147 = vmul.f32 %v803, %v1019
        %v1148 = vmul.f32 %v805, %v1020
        %v1149 = vmul.f32 %v807, %v1021
        %v1150 = vmul.f32 %v809, %v1022
        %v1151 = vmul.f32 %v813, %v1023
        %v1152 = vmul.f32 %v815, %v1024
        %v1153 = vmul.f32 %v817, %v1025
        %v1154 = vmul.f32 %v819, %v1026
        %v1155 = vmul.f32 %v823, %v1027
        %v1156 = vmul.f32 %v825, %v1028
        %v1157 = vmul.f32 %v827, %v1029
        %v1158 = vmul.f32 %v829, %v1030
        %v1159 = vmul.f32 %v833, %v1031
        %v1160 = vmul.f32 %v835, %v1032
        %v1161 = vmul.f32 %v837, %v1033
        %v1162 = vmul.f32 %v839, %v1034
        %v1163 = vmul.f32 %v843, %v1035
        %v1164 = vmul.f32 %v845, %v1036
        %v1165 = vmul.f32 %v847, %v1037
        %v1166 = vmul.f32 %v849, %v1038
        %v1167 = vmul.f32 %v853, %v1039
        %v1168 = vmul.f32 %v855, %v1040
        %v1169 = vmul.f32 %v857, %v1041
        %v1170 = vmul.f32 %v859, %v1042
        %v1171 = vmul.f32 %v863, %v1043
        %v1172 = vmul.f32 %v865, %v1044
        %v1173 = vmul.f32 %v867, %v1045
        %v1174 = vmul.f32 %v869, %v1046
        %v1175 = vmul.f32 %v873, %v1047
        %v1176 = vmul.f32 %v875, %v1048
        %v1177 = vmul.f32 %v877, %v1049
        %v1178 = vmul.f32 %v879, %v1050
        %v1179 = vmul.f32 %v883, %v1051
        %v1180 = vmul.f32 %v885, %v1052
        %v1181 = vmul.f32 %v887, %v1053
        %v1182 = vmul.f32 %v889, %v1054
        %v1183 = vmul.f32 %v893, %v1055
        %v1184 = vmul.f32 %v895, %v1056
        %v1185 = vmul.f32 %v897, %v1057
        %v1186 = vmul.f32 %v899, %v1058
        %v1187 = vmul.f32 %v903, %v1059
        %v1188 = vmul.f32 %v905, %v1060
        %v1189 = vmul.f32 %v907, %v1061
        %v1190 = vmul.f32 %v909, %v1062
        %v1191 = vmul.f32 %v913, %v1063
        %v1192 = vmul.f32 %v915, %v1064
        %v1193 = vmul.f32 %v917, %v1065
        %v1194 = vmul.f32 %v919, %v1066
        %v1195 = vmul.f32 %v923, %v1067
        %v1196 = vmul.f32 %v925, %v1068
        %v1197 = vmul.f32 %v927, %v1069
        %v1198 = vmul.f32 %v929, %v1070
        %v1199 = vmul.f32 %v933, %v1071
        %v1200 = vmul.f32 %v935, %v1072
        %v1201 = vmul.f32 %v937, %v1073
        %v1202 = vmul.f32 %v939, %v1074
        %v1203 = vmul.f32 %v943, %v1075
        %v1204 = vmul.f32 %v945, %v1076
        %v1205 = vmul.f32 %v947, %v1077
        %v1206 = vmul.f32 %v949, %v1078
        %v1207 = vmul.f32 %v1079, 0.044715
        %v1208 = vmul.f32 %v1080, 0.044715
        %v1209 = vmul.f32 %v1081, 0.044715
        %v1210 = vmul.f32 %v1082, 0.044715
        %v1211 = vmul.f32 %v1083, 0.044715
        %v1212 = vmul.f32 %v1084, 0.044715
        %v1213 = vmul.f32 %v1085, 0.044715
        %v1214 = vmul.f32 %v1086, 0.044715
        %v1215 = vmul.f32 %v1087, 0.044715
        %v1216 = vmul.f32 %v1088, 0.044715
        %v1217 = vmul.f32 %v1089, 0.044715
        %v1218 = vmul.f32 %v1090, 0.044715
        %v1219 = vmul.f32 %v1091, 0.044715
        %v1220 = vmul.f32 %v1092, 0.044715
        %v1221 = vmul.f32 %v1093, 0.044715
        %v1222 = vmul.f32 %v1094, 0.044715
        %v1223 = vmul.f32 %v1095, 0.044715
        %v1224 = vmul.f32 %v1096, 0.044715
        %v1225 = vmul.f32 %v1097, 0.044715
        %v1226 = vmul.f32 %v1098, 0.044715
        %v1227 = vmul.f32 %v1099, 0.044715
        %v1228 = vmul.f32 %v1100, 0.044715
        %v1229 = vmul.f32 %v1101, 0.044715
        %v1230 = vmul.f32 %v1102, 0.044715
        %v1231 = vmul.f32 %v1103, 0.044715
        %v1232 = vmul.f32 %v1104, 0.044715
        %v1233 = vmul.f32 %v1105, 0.044715
        %v1234 = vmul.f32 %v1106, 0.044715
        %v1235 = vmul.f32 %v1107, 0.044715
        %v1236 = vmul.f32 %v1108, 0.044715
        %v1237 = vmul.f32 %v1109, 0.044715
        %v1238 = vmul.f32 %v1110, 0.044715
        %v1239 = vmul.f32 %v1111, 0.044715
        %v1240 = vmul.f32 %v1112, 0.044715
        %v1241 = vmul.f32 %v1113, 0.044715
        %v1242 = vmul.f32 %v1114, 0.044715
        %v1243 = vmul.f32 %v1115, 0.044715
        %v1244 = vmul.f32 %v1116, 0.044715
        %v1245 = vmul.f32 %v1117, 0.044715
        %v1246 = vmul.f32 %v1118, 0.044715
        %v1247 = vmul.f32 %v1119, 0.044715
        %v1248 = vmul.f32 %v1120, 0.044715
        %v1249 = vmul.f32 %v1121, 0.044715
        %v1250 = vmul.f32 %v1122, 0.044715
        %v1251 = vmul.f32 %v1123, 0.044715
        %v1252 = vmul.f32 %v1124, 0.044715
        %v1253 = vmul.f32 %v1125, 0.044715
        %v1254 = vmul.f32 %v1126, 0.044715
        %v1255 = vmul.f32 %v1127, 0.044715
        %v1256 = vmul.f32 %v1128, 0.044715
        %v1257 = vmul.f32 %v1129, 0.044715
        %v1258 = vmul.f32 %v1130, 0.044715
        %v1259 = vmul.f32 %v1131, 0.044715
        %v1260 = vmul.f32 %v1132, 0.044715
        %v1261 = vmul.f32 %v1133, 0.044715
        %v1262 = vmul.f32 %v1134, 0.044715
        %v1263 = vmul.f32 %v1135, 0.044715
        %v1264 = vmul.f32 %v1136, 0.044715
        %v1265 = vmul.f32 %v1137, 0.044715
        %v1266 = vmul.f32 %v1138, 0.044715
        %v1267 = vmul.f32 %v1139, 0.044715
        %v1268 = vmul.f32 %v1140, 0.044715
        %v1269 = vmul.f32 %v1141, 0.044715
        %v1270 = vmul.f32 %v1142, 0.044715
        %v1271 = vmul.f32 %v1143, 0.044715
        %v1272 = vmul.f32 %v1144, 0.044715
        %v1273 = vmul.f32 %v1145, 0.044715
        %v1274 = vmul.f32 %v1146, 0.044715
        %v1275 = vmul.f32 %v1147, 0.044715
        %v1276 = vmul.f32 %v1148, 0.044715
        %v1277 = vmul.f32 %v1149, 0.044715
        %v1278 = vmul.f32 %v1150, 0.044715
        %v1279 = vmul.f32 %v1151, 0.044715
        %v1280 = vmul.f32 %v1152, 0.044715
        %v1281 = vmul.f32 %v1153, 0.044715
        %v1282 = vmul.f32 %v1154, 0.044715
        %v1283 = vmul.f32 %v1155, 0.044715
        %v1284 = vmul.f32 %v1156, 0.044715
        %v1285 = vmul.f32 %v1157, 0.044715
        %v1286 = vmul.f32 %v1158, 0.044715
        %v1287 = vmul.f32 %v1159, 0.044715
        %v1288 = vmul.f32 %v1160, 0.044715
        %v1289 = vmul.f32 %v1161, 0.044715
        %v1290 = vmul.f32 %v1162, 0.044715
        %v1291 = vmul.f32 %v1163, 0.044715
        %v1292 = vmul.f32 %v1164, 0.044715
        %v1293 = vmul.f32 %v1165, 0.044715
        %v1294 = vmul.f32 %v1166, 0.044715
        %v1295 = vmul.f32 %v1167, 0.044715
        %v1296 = vmul.f32 %v1168, 0.044715
        %v1297 = vmul.f32 %v1169, 0.044715
        %v1298 = vmul.f32 %v1170, 0.044715
        %v1299 = vmul.f32 %v1171, 0.044715
        %v1300 = vmul.f32 %v1172, 0.044715
        %v1301 = vmul.f32 %v1173, 0.044715
        %v1302 = vmul.f32 %v1174, 0.044715
        %v1303 = vmul.f32 %v1175, 0.044715
        %v1304 = vmul.f32 %v1176, 0.044715
        %v1305 = vmul.f32 %v1177, 0.044715
        %v1306 = vmul.f32 %v1178, 0.044715
        %v1307 = vmul.f32 %v1179, 0.044715
        %v1308 = vmul.f32 %v1180, 0.044715
        %v1309 = vmul.f32 %v1181, 0.044715
        %v1310 = vmul.f32 %v1182, 0.044715
        %v1311 = vmul.f32 %v1183, 0.044715
        %v1312 = vmul.f32 %v1184, 0.044715
        %v1313 = vmul.f32 %v1185, 0.044715
        %v1314 = vmul.f32 %v1186, 0.044715
        %v1315 = vmul.f32 %v1187, 0.044715
        %v1316 = vmul.f32 %v1188, 0.044715
        %v1317 = vmul.f32 %v1189, 0.044715
        %v1318 = vmul.f32 %v1190, 0.044715
        %v1319 = vmul.f32 %v1191, 0.044715
        %v1320 = vmul.f32 %v1192, 0.044715
        %v1321 = vmul.f32 %v1193, 0.044715
        %v1322 = vmul.f32 %v1194, 0.044715
        %v1323 = vmul.f32 %v1195, 0.044715
        %v1324 = vmul.f32 %v1196, 0.044715
        %v1325 = vmul.f32 %v1197, 0.044715
        %v1326 = vmul.f32 %v1198, 0.044715
        %v1327 = vmul.f32 %v1199, 0.044715
        %v1328 = vmul.f32 %v1200, 0.044715
        %v1329 = vmul.f32 %v1201, 0.044715
        %v1330 = vmul.f32 %v1202, 0.044715
        %v1331 = vmul.f32 %v1203, 0.044715
        %v1332 = vmul.f32 %v1204, 0.044715
        %v1333 = vmul.f32 %v1205, 0.044715
        %v1334 = vmul.f32 %v1206, 0.044715
        %v1335 = vadd.f32 %v633, %v1207
        %v1336 = vadd.f32 %v635, %v1208
        %v1337 = vadd.f32 %v637, %v1209
        %v1338 = vadd.f32 %v639, %v1210
        %v1339 = vadd.f32 %v643, %v1211
        %v1340 = vadd.f32 %v645, %v1212
        %v1341 = vadd.f32 %v647, %v1213
        %v1342 = vadd.f32 %v649, %v1214
        %v1343 = vadd.f32 %v653, %v1215
        %v1344 = vadd.f32 %v655, %v1216
        %v1345 = vadd.f32 %v657, %v1217
        %v1346 = vadd.f32 %v659, %v1218
        %v1347 = vadd.f32 %v663, %v1219
        %v1348 = vadd.f32 %v665, %v1220
        %v1349 = vadd.f32 %v667, %v1221
        %v1350 = vadd.f32 %v669, %v1222
        %v1351 = vadd.f32 %v673, %v1223
        %v1352 = vadd.f32 %v675, %v1224
        %v1353 = vadd.f32 %v677, %v1225
        %v1354 = vadd.f32 %v679, %v1226
        %v1355 = vadd.f32 %v683, %v1227
        %v1356 = vadd.f32 %v685, %v1228
        %v1357 = vadd.f32 %v687, %v1229
        %v1358 = vadd.f32 %v689, %v1230
        %v1359 = vadd.f32 %v693, %v1231
        %v1360 = vadd.f32 %v695, %v1232
        %v1361 = vadd.f32 %v697, %v1233
        %v1362 = vadd.f32 %v699, %v1234
        %v1363 = vadd.f32 %v703, %v1235
        %v1364 = vadd.f32 %v705, %v1236
        %v1365 = vadd.f32 %v707, %v1237
        %v1366 = vadd.f32 %v709, %v1238
        %v1367 = vadd.f32 %v713, %v1239
        %v1368 = vadd.f32 %v715, %v1240
        %v1369 = vadd.f32 %v717, %v1241
        %v1370 = vadd.f32 %v719, %v1242
        %v1371 = vadd.f32 %v723, %v1243
        %v1372 = vadd.f32 %v725, %v1244
        %v1373 = vadd.f32 %v727, %v1245
        %v1374 = vadd.f32 %v729, %v1246
        %v1375 = vadd.f32 %v733, %v1247
        %v1376 = vadd.f32 %v735, %v1248
        %v1377 = vadd.f32 %v737, %v1249
        %v1378 = vadd.f32 %v739, %v1250
        %v1379 = vadd.f32 %v743, %v1251
        %v1380 = vadd.f32 %v745, %v1252
        %v1381 = vadd.f32 %v747, %v1253
        %v1382 = vadd.f32 %v749, %v1254
        %v1383 = vadd.f32 %v753, %v1255
        %v1384 = vadd.f32 %v755, %v1256
        %v1385 = vadd.f32 %v757, %v1257
        %v1386 = vadd.f32 %v759, %v1258
        %v1387 = vadd.f32 %v763, %v1259
        %v1388 = vadd.f32 %v765, %v1260
        %v1389 = vadd.f32 %v767, %v1261
        %v1390 = vadd.f32 %v769, %v1262
        %v1391 = vadd.f32 %v773, %v1263
        %v1392 = vadd.f32 %v775, %v1264
        %v1393 = vadd.f32 %v777, %v1265
        %v1394 = vadd.f32 %v779, %v1266
        %v1395 = vadd.f32 %v783, %v1267
        %v1396 = vadd.f32 %v785, %v1268
        %v1397 = vadd.f32 %v787, %v1269
        %v1398 = vadd.f32 %v789, %v1270
        %v1399 = vadd.f32 %v793, %v1271
        %v1400 = vadd.f32 %v795, %v1272
        %v1401 = vadd.f32 %v797, %v1273
        %v1402 = vadd.f32 %v799, %v1274
        %v1403 = vadd.f32 %v803, %v1275
        %v1404 = vadd.f32 %v805, %v1276
        %v1405 = vadd.f32 %v807, %v1277
        %v1406 = vadd.f32 %v809, %v1278
        %v1407 = vadd.f32 %v813, %v1279
        %v1408 = vadd.f32 %v815, %v1280
        %v1409 = vadd.f32 %v817, %v1281
        %v1410 = vadd.f32 %v819, %v1282
        %v1411 = vadd.f32 %v823, %v1283
        %v1412 = vadd.f32 %v825, %v1284
        %v1413 = vadd.f32 %v827, %v1285
        %v1414 = vadd.f32 %v829, %v1286
        %v1415 = vadd.f32 %v833, %v1287
        %v1416 = vadd.f32 %v835, %v1288
        %v1417 = vadd.f32 %v837, %v1289
        %v1418 = vadd.f32 %v839, %v1290
        %v1419 = vadd.f32 %v843, %v1291
        %v1420 = vadd.f32 %v845, %v1292
        %v1421 = vadd.f32 %v847, %v1293
        %v1422 = vadd.f32 %v849, %v1294
        %v1423 = vadd.f32 %v853, %v1295
        %v1424 = vadd.f32 %v855, %v1296
        %v1425 = vadd.f32 %v857, %v1297
        %v1426 = vadd.f32 %v859, %v1298
        %v1427 = vadd.f32 %v863, %v1299
        %v1428 = vadd.f32 %v865, %v1300
        %v1429 = vadd.f32 %v867, %v1301
        %v1430 = vadd.f32 %v869, %v1302
        %v1431 = vadd.f32 %v873, %v1303
        %v1432 = vadd.f32 %v875, %v1304
        %v1433 = vadd.f32 %v877, %v1305
        %v1434 = vadd.f32 %v879, %v1306
        %v1435 = vadd.f32 %v883, %v1307
        %v1436 = vadd.f32 %v885, %v1308
        %v1437 = vadd.f32 %v887, %v1309
        %v1438 = vadd.f32 %v889, %v1310
        %v1439 = vadd.f32 %v893, %v1311
        %v1440 = vadd.f32 %v895, %v1312
        %v1441 = vadd.f32 %v897, %v1313
        %v1442 = vadd.f32 %v899, %v1314
        %v1443 = vadd.f32 %v903, %v1315
        %v1444 = vadd.f32 %v905, %v1316
        %v1445 = vadd.f32 %v907, %v1317
        %v1446 = vadd.f32 %v909, %v1318
        %v1447 = vadd.f32 %v913, %v1319
        %v1448 = vadd.f32 %v915, %v1320
        %v1449 = vadd.f32 %v917, %v1321
        %v1450 = vadd.f32 %v919, %v1322
        %v1451 = vadd.f32 %v923, %v1323
        %v1452 = vadd.f32 %v925, %v1324
        %v1453 = vadd.f32 %v927, %v1325
        %v1454 = vadd.f32 %v929, %v1326
        %v1455 = vadd.f32 %v933, %v1327
        %v1456 = vadd.f32 %v935, %v1328
        %v1457 = vadd.f32 %v937, %v1329
        %v1458 = vadd.f32 %v939, %v1330
        %v1459 = vadd.f32 %v943, %v1331
        %v1460 = vadd.f32 %v945, %v1332
        %v1461 = vadd.f32 %v947, %v1333
        %v1462 = vadd.f32 %v949, %v1334
        %v1463 = vmul.f32 %v1335, 0.7978846
        %v1464 = vmul.f32 %v1336, 0.7978846
        %v1465 = vmul.f32 %v1337, 0.7978846
        %v1466 = vmul.f32 %v1338, 0.7978846
        %v1467 = vmul.f32 %v1339, 0.7978846
        %v1468 = vmul.f32 %v1340, 0.7978846
        %v1469 = vmul.f32 %v1341, 0.7978846
        %v1470 = vmul.f32 %v1342, 0.7978846
        %v1471 = vmul.f32 %v1343, 0.7978846
        %v1472 = vmul.f32 %v1344, 0.7978846
        %v1473 = vmul.f32 %v1345, 0.7978846
        %v1474 = vmul.f32 %v1346, 0.7978846
        %v1475 = vmul.f32 %v1347, 0.7978846
        %v1476 = vmul.f32 %v1348, 0.7978846
        %v1477 = vmul.f32 %v1349, 0.7978846
        %v1478 = vmul.f32 %v1350, 0.7978846
        %v1479 = vmul.f32 %v1351, 0.7978846
        %v1480 = vmul.f32 %v1352, 0.7978846
        %v1481 = vmul.f32 %v1353, 0.7978846
        %v1482 = vmul.f32 %v1354, 0.7978846
        %v1483 = vmul.f32 %v1355, 0.7978846
        %v1484 = vmul.f32 %v1356, 0.7978846
        %v1485 = vmul.f32 %v1357, 0.7978846
        %v1486 = vmul.f32 %v1358, 0.7978846
        %v1487 = vmul.f32 %v1359, 0.7978846
        %v1488 = vmul.f32 %v1360, 0.7978846
        %v1489 = vmul.f32 %v1361, 0.7978846
        %v1490 = vmul.f32 %v1362, 0.7978846
        %v1491 = vmul.f32 %v1363, 0.7978846
        %v1492 = vmul.f32 %v1364, 0.7978846
        %v1493 = vmul.f32 %v1365, 0.7978846
        %v1494 = vmul.f32 %v1366, 0.7978846
        %v1495 = vmul.f32 %v1367, 0.7978846
        %v1496 = vmul.f32 %v1368, 0.7978846
        %v1497 = vmul.f32 %v1369, 0.7978846
        %v1498 = vmul.f32 %v1370, 0.7978846
        %v1499 = vmul.f32 %v1371, 0.7978846
        %v1500 = vmul.f32 %v1372, 0.7978846
        %v1501 = vmul.f32 %v1373, 0.7978846
        %v1502 = vmul.f32 %v1374, 0.7978846
        %v1503 = vmul.f32 %v1375, 0.7978846
        %v1504 = vmul.f32 %v1376, 0.7978846
        %v1505 = vmul.f32 %v1377, 0.7978846
        %v1506 = vmul.f32 %v1378, 0.7978846
        %v1507 = vmul.f32 %v1379, 0.7978846
        %v1508 = vmul.f32 %v1380, 0.7978846
        %v1509 = vmul.f32 %v1381, 0.7978846
        %v1510 = vmul.f32 %v1382, 0.7978846
        %v1511 = vmul.f32 %v1383, 0.7978846
        %v1512 = vmul.f32 %v1384, 0.7978846
        %v1513 = vmul.f32 %v1385, 0.7978846
        %v1514 = vmul.f32 %v1386, 0.7978846
        %v1515 = vmul.f32 %v1387, 0.7978846
        %v1516 = vmul.f32 %v1388, 0.7978846
        %v1517 = vmul.f32 %v1389, 0.7978846
        %v1518 = vmul.f32 %v1390, 0.7978846
        %v1519 = vmul.f32 %v1391, 0.7978846
        %v1520 = vmul.f32 %v1392, 0.7978846
        %v1521 = vmul.f32 %v1393, 0.7978846
        %v1522 = vmul.f32 %v1394, 0.7978846
        %v1523 = vmul.f32 %v1395, 0.7978846
        %v1524 = vmul.f32 %v1396, 0.7978846
        %v1525 = vmul.f32 %v1397, 0.7978846
        %v1526 = vmul.f32 %v1398, 0.7978846
        %v1527 = vmul.f32 %v1399, 0.7978846
        %v1528 = vmul.f32 %v1400, 0.7978846
        %v1529 = vmul.f32 %v1401, 0.7978846
        %v1530 = vmul.f32 %v1402, 0.7978846
        %v1531 = vmul.f32 %v1403, 0.7978846
        %v1532 = vmul.f32 %v1404, 0.7978846
        %v1533 = vmul.f32 %v1405, 0.7978846
        %v1534 = vmul.f32 %v1406, 0.7978846
        %v1535 = vmul.f32 %v1407, 0.7978846
        %v1536 = vmul.f32 %v1408, 0.7978846
        %v1537 = vmul.f32 %v1409, 0.7978846
        %v1538 = vmul.f32 %v1410, 0.7978846
        %v1539 = vmul.f32 %v1411, 0.7978846
        %v1540 = vmul.f32 %v1412, 0.7978846
        %v1541 = vmul.f32 %v1413, 0.7978846
        %v1542 = vmul.f32 %v1414, 0.7978846
        %v1543 = vmul.f32 %v1415, 0.7978846
        %v1544 = vmul.f32 %v1416, 0.7978846
        %v1545 = vmul.f32 %v1417, 0.7978846
        %v1546 = vmul.f32 %v1418, 0.7978846
        %v1547 = vmul.f32 %v1419, 0.7978846
        %v1548 = vmul.f32 %v1420, 0.7978846
        %v1549 = vmul.f32 %v1421, 0.7978846
        %v1550 = vmul.f32 %v1422, 0.7978846
        %v1551 = vmul.f32 %v1423, 0.7978846
        %v1552 = vmul.f32 %v1424, 0.7978846
        %v1553 = vmul.f32 %v1425, 0.7978846
        %v1554 = vmul.f32 %v1426, 0.7978846
        %v1555 = vmul.f32 %v1427, 0.7978846
        %v1556 = vmul.f32 %v1428, 0.7978846
        %v1557 = vmul.f32 %v1429, 0.7978846
        %v1558 = vmul.f32 %v1430, 0.7978846
        %v1559 = vmul.f32 %v1431, 0.7978846
        %v1560 = vmul.f32 %v1432, 0.7978846
        %v1561 = vmul.f32 %v1433, 0.7978846
        %v1562 = vmul.f32 %v1434, 0.7978846
        %v1563 = vmul.f32 %v1435, 0.7978846
        %v1564 = vmul.f32 %v1436, 0.7978846
        %v1565 = vmul.f32 %v1437, 0.7978846
        %v1566 = vmul.f32 %v1438, 0.7978846
        %v1567 = vmul.f32 %v1439, 0.7978846
        %v1568 = vmul.f32 %v1440, 0.7978846
        %v1569 = vmul.f32 %v1441, 0.7978846
        %v1570 = vmul.f32 %v1442, 0.7978846
        %v1571 = vmul.f32 %v1443, 0.7978846
        %v1572 = vmul.f32 %v1444, 0.7978846
        %v1573 = vmul.f32 %v1445, 0.7978846
        %v1574 = vmul.f32 %v1446, 0.7978846
        %v1575 = vmul.f32 %v1447, 0.7978846
        %v1576 = vmul.f32 %v1448, 0.7978846
        %v1577 = vmul.f32 %v1449, 0.7978846
        %v1578 = vmul.f32 %v1450, 0.7978846
        %v1579 = vmul.f32 %v1451, 0.7978846
        %v1580 = vmul.f32 %v1452, 0.7978846
        %v1581 = vmul.f32 %v1453, 0.7978846
        %v1582 = vmul.f32 %v1454, 0.7978846
        %v1583 = vmul.f32 %v1455, 0.7978846
        %v1584 = vmul.f32 %v1456, 0.7978846
        %v1585 = vmul.f32 %v1457, 0.7978846
        %v1586 = vmul.f32 %v1458, 0.7978846
        %v1587 = vmul.f32 %v1459, 0.7978846
        %v1588 = vmul.f32 %v1460, 0.7978846
        %v1589 = vmul.f32 %v1461, 0.7978846
        %v1590 = vmul.f32 %v1462, 0.7978846
        %v1591 = vtanh.pop %v1463
        %v1592 = vtanh.pop %v1464
        %v1593 = vtanh.pop %v1465
        %v1594 = vtanh.pop %v1466
        %v1595 = vtanh.pop %v1467
        %v1596 = vtanh.pop %v1468
        %v1597 = vtanh.pop %v1469
        %v1598 = vtanh.pop %v1470
        %v1599 = vtanh.pop %v1471
        %v1600 = vtanh.pop %v1472
        %v1601 = vtanh.pop %v1473
        %v1602 = vtanh.pop %v1474
        %v1603 = vtanh.pop %v1475
        %v1604 = vtanh.pop %v1476
        %v1605 = vtanh.pop %v1477
        %v1606 = vtanh.pop %v1478
        %v1607 = vtanh.pop %v1479
        %v1608 = vtanh.pop %v1480
        %v1609 = vtanh.pop %v1481
        %v1610 = vtanh.pop %v1482
        %v1611 = vtanh.pop %v1483
        %v1612 = vtanh.pop %v1484
        %v1613 = vtanh.pop %v1485
        %v1614 = vtanh.pop %v1486
        %v1615 = vtanh.pop %v1487
        %v1616 = vtanh.pop %v1488
        %v1617 = vtanh.pop %v1489
        %v1618 = vtanh.pop %v1490
        %v1619 = vtanh.pop %v1491
        %v1620 = vtanh.pop %v1492
        %v1621 = vtanh.pop %v1493
        %v1622 = vtanh.pop %v1494
        %v1623 = vtanh.pop %v1495
        %v1624 = vtanh.pop %v1496
        %v1625 = vtanh.pop %v1497
        %v1626 = vtanh.pop %v1498
        %v1627 = vtanh.pop %v1499
        %v1628 = vtanh.pop %v1500
        %v1629 = vtanh.pop %v1501
        %v1630 = vtanh.pop %v1502
        %v1631 = vtanh.pop %v1503
        %v1632 = vtanh.pop %v1504
        %v1633 = vtanh.pop %v1505
        %v1634 = vtanh.pop %v1506
        %v1635 = vtanh.pop %v1507
        %v1636 = vtanh.pop %v1508
        %v1637 = vtanh.pop %v1509
        %v1638 = vtanh.pop %v1510
        %v1639 = vtanh.pop %v1511
        %v1640 = vtanh.pop %v1512
        %v1641 = vtanh.pop %v1513
        %v1642 = vtanh.pop %v1514
        %v1643 = vtanh.pop %v1515
        %v1644 = vtanh.pop %v1516
        %v1645 = vtanh.pop %v1517
        %v1646 = vtanh.pop %v1518
        %v1647 = vtanh.pop %v1519
        %v1648 = vtanh.pop %v1520
        %v1649 = vtanh.pop %v1521
        %v1650 = vtanh.pop %v1522
        %v1651 = vtanh.pop %v1523
        %v1652 = vtanh.pop %v1524
        %v1653 = vtanh.pop %v1525
        %v1654 = vtanh.pop %v1526
        %v1655 = vtanh.pop %v1527
        %v1656 = vtanh.pop %v1528
        %v1657 = vtanh.pop %v1529
        %v1658 = vtanh.pop %v1530
        %v1659 = vtanh.pop %v1531
        %v1660 = vtanh.pop %v1532
        %v1661 = vtanh.pop %v1533
        %v1662 = vtanh.pop %v1534
        %v1663 = vtanh.pop %v1535
        %v1664 = vtanh.pop %v1536
        %v1665 = vtanh.pop %v1537
        %v1666 = vtanh.pop %v1538
        %v1667 = vtanh.pop %v1539
        %v1668 = vtanh.pop %v1540
        %v1669 = vtanh.pop %v1541
        %v1670 = vtanh.pop %v1542
        %v1671 = vtanh.pop %v1543
        %v1672 = vtanh.pop %v1544
        %v1673 = vtanh.pop %v1545
        %v1674 = vtanh.pop %v1546
        %v1675 = vtanh.pop %v1547
        %v1676 = vtanh.pop %v1548
        %v1677 = vtanh.pop %v1549
        %v1678 = vtanh.pop %v1550
        %v1679 = vtanh.pop %v1551
        %v1680 = vtanh.pop %v1552
        %v1681 = vtanh.pop %v1553
        %v1682 = vtanh.pop %v1554
        %v1683 = vtanh.pop %v1555
        %v1684 = vtanh.pop %v1556
        %v1685 = vtanh.pop %v1557
        %v1686 = vtanh.pop %v1558
        %v1687 = vtanh.pop %v1559
        %v1688 = vtanh.pop %v1560
        %v1689 = vtanh.pop %v1561
        %v1690 = vtanh.pop %v1562
        %v1691 = vtanh.pop %v1563
        %v1692 = vtanh.pop %v1564
        %v1693 = vtanh.pop %v1565
        %v1694 = vtanh.pop %v1566
        %v1695 = vtanh.pop %v1567
        %v1696 = vtanh.pop %v1568
        %v1697 = vtanh.pop %v1569
        %v1698 = vtanh.pop %v1570
        %v1699 = vtanh.pop %v1571
        %v1700 = vtanh.pop %v1572
        %v1701 = vtanh.pop %v1573
        %v1702 = vtanh.pop %v1574
        %v1703 = vtanh.pop %v1575
        %v1704 = vtanh.pop %v1576
        %v1705 = vtanh.pop %v1577
        %v1706 = vtanh.pop %v1578
        %v1707 = vtanh.pop %v1579
        %v1708 = vtanh.pop %v1580
        %v1709 = vtanh.pop %v1581
        %v1710 = vtanh.pop %v1582
        %v1711 = vtanh.pop %v1583
        %v1712 = vtanh.pop %v1584
        %v1713 = vtanh.pop %v1585
        %v1714 = vtanh.pop %v1586
        %v1715 = vtanh.pop %v1587
        %v1716 = vtanh.pop %v1588
        %v1717 = vtanh.pop %v1589
        %v1718 = vtanh.pop %v1590
        %v1719 = vadd.f32 %v1591, 1.0
        %v1720 = vadd.f32 %v1592, 1.0
        %v1721 = vadd.f32 %v1593, 1.0
        %v1722 = vadd.f32 %v1594, 1.0
        %v1723 = vadd.f32 %v1595, 1.0
        %v1724 = vadd.f32 %v1596, 1.0
        %v1725 = vadd.f32 %v1597, 1.0
        %v1726 = vadd.f32 %v1598, 1.0
        %v1727 = vadd.f32 %v1599, 1.0
        %v1728 = vadd.f32 %v1600, 1.0
        %v1729 = vadd.f32 %v1601, 1.0
        %v1730 = vadd.f32 %v1602, 1.0
        %v1731 = vadd.f32 %v1603, 1.0
        %v1732 = vadd.f32 %v1604, 1.0
        %v1733 = vadd.f32 %v1605, 1.0
        %v1734 = vadd.f32 %v1606, 1.0
        %v1735 = vadd.f32 %v1607, 1.0
        %v1736 = vadd.f32 %v1608, 1.0
        %v1737 = vadd.f32 %v1609, 1.0
        %v1738 = vadd.f32 %v1610, 1.0
        %v1739 = vadd.f32 %v1611, 1.0
        %v1740 = vadd.f32 %v1612, 1.0
        %v1741 = vadd.f32 %v1613, 1.0
        %v1742 = vadd.f32 %v1614, 1.0
        %v1743 = vadd.f32 %v1615, 1.0
        %v1744 = vadd.f32 %v1616, 1.0
        %v1745 = vadd.f32 %v1617, 1.0
        %v1746 = vadd.f32 %v1618, 1.0
        %v1747 = vadd.f32 %v1619, 1.0
        %v1748 = vadd.f32 %v1620, 1.0
        %v1749 = vadd.f32 %v1621, 1.0
        %v1750 = vadd.f32 %v1622, 1.0
        %v1751 = vadd.f32 %v1623, 1.0
        %v1752 = vadd.f32 %v1624, 1.0
        %v1753 = vadd.f32 %v1625, 1.0
        %v1754 = vadd.f32 %v1626, 1.0
        %v1755 = vadd.f32 %v1627, 1.0
        %v1756 = vadd.f32 %v1628, 1.0
        %v1757 = vadd.f32 %v1629, 1.0
        %v1758 = vadd.f32 %v1630, 1.0
        %v1759 = vadd.f32 %v1631, 1.0
        %v1760 = vadd.f32 %v1632, 1.0
        %v1761 = vadd.f32 %v1633, 1.0
        %v1762 = vadd.f32 %v1634, 1.0
        %v1763 = vadd.f32 %v1635, 1.0
        %v1764 = vadd.f32 %v1636, 1.0
        %v1765 = vadd.f32 %v1637, 1.0
        %v1766 = vadd.f32 %v1638, 1.0
        %v1767 = vadd.f32 %v1639, 1.0
        %v1768 = vadd.f32 %v1640, 1.0
        %v1769 = vadd.f32 %v1641, 1.0
        %v1770 = vadd.f32 %v1642, 1.0
        %v1771 = vadd.f32 %v1643, 1.0
        %v1772 = vadd.f32 %v1644, 1.0
        %v1773 = vadd.f32 %v1645, 1.0
        %v1774 = vadd.f32 %v1646, 1.0
        %v1775 = vadd.f32 %v1647, 1.0
        %v1776 = vadd.f32 %v1648, 1.0
        %v1777 = vadd.f32 %v1649, 1.0
        %v1778 = vadd.f32 %v1650, 1.0
        %v1779 = vadd.f32 %v1651, 1.0
        %v1780 = vadd.f32 %v1652, 1.0
        %v1781 = vadd.f32 %v1653, 1.0
        %v1782 = vadd.f32 %v1654, 1.0
        %v1783 = vadd.f32 %v1655, 1.0
        %v1784 = vadd.f32 %v1656, 1.0
        %v1785 = vadd.f32 %v1657, 1.0
        %v1786 = vadd.f32 %v1658, 1.0
        %v1787 = vadd.f32 %v1659, 1.0
        %v1788 = vadd.f32 %v1660, 1.0
        %v1789 = vadd.f32 %v1661, 1.0
        %v1790 = vadd.f32 %v1662, 1.0
        %v1791 = vadd.f32 %v1663, 1.0
        %v1792 = vadd.f32 %v1664, 1.0
        %v1793 = vadd.f32 %v1665, 1.0
        %v1794 = vadd.f32 %v1666, 1.0
        %v1795 = vadd.f32 %v1667, 1.0
        %v1796 = vadd.f32 %v1668, 1.0
        %v1797 = vadd.f32 %v1669, 1.0
        %v1798 = vadd.f32 %v1670, 1.0
        %v1799 = vadd.f32 %v1671, 1.0
        %v1800 = vadd.f32 %v1672, 1.0
        %v1801 = vadd.f32 %v1673, 1.0
        %v1802 = vadd.f32 %v1674, 1.0
        %v1803 = vadd.f32 %v1675, 1.0
        %v1804 = vadd.f32 %v1676, 1.0
        %v1805 = vadd.f32 %v1677, 1.0
        %v1806 = vadd.f32 %v1678, 1.0
        %v1807 = vadd.f32 %v1679, 1.0
        %v1808 = vadd.f32 %v1680, 1.0
        %v1809 = vadd.f32 %v1681, 1.0
        %v1810 = vadd.f32 %v1682, 1.0
        %v1811 = vadd.f32 %v1683, 1.0
        %v1812 = vadd.f32 %v1684, 1.0
        %v1813 = vadd.f32 %v1685, 1.0
        %v1814 = vadd.f32 %v1686, 1.0
        %v1815 = vadd.f32 %v1687, 1.0
        %v1816 = vadd.f32 %v1688, 1.0
        %v1817 = vadd.f32 %v1689, 1.0
        %v1818 = vadd.f32 %v1690, 1.0
        %v1819 = vadd.f32 %v1691, 1.0
        %v1820 = vadd.f32 %v1692, 1.0
        %v1821 = vadd.f32 %v1693, 1.0
        %v1822 = vadd.f32 %v1694, 1.0
        %v1823 = vadd.f32 %v1695, 1.0
        %v1824 = vadd.f32 %v1696, 1.0
        %v1825 = vadd.f32 %v1697, 1.0
        %v1826 = vadd.f32 %v1698, 1.0
        %v1827 = vadd.f32 %v1699, 1.0
        %v1828 = vadd.f32 %v1700, 1.0
        %v1829 = vadd.f32 %v1701, 1.0
        %v1830 = vadd.f32 %v1702, 1.0
        %v1831 = vadd.f32 %v1703, 1.0
        %v1832 = vadd.f32 %v1704, 1.0
        %v1833 = vadd.f32 %v1705, 1.0
        %v1834 = vadd.f32 %v1706, 1.0
        %v1835 = vadd.f32 %v1707, 1.0
        %v1836 = vadd.f32 %v1708, 1.0
        %v1837 = vadd.f32 %v1709, 1.0
        %v1838 = vadd.f32 %v1710, 1.0
        %v1839 = vadd.f32 %v1711, 1.0
        %v1840 = vadd.f32 %v1712, 1.0
        %v1841 = vadd.f32 %v1713, 1.0
        %v1842 = vadd.f32 %v1714, 1.0
        %v1843 = vadd.f32 %v1715, 1.0
        %v1844 = vadd.f32 %v1716, 1.0
        %v1845 = vadd.f32 %v1717, 1.0
        %v1846 = vadd.f32 %v1718, 1.0
        %v1847 = vmul.f32 %v1719, 0.5
        %v1848 = vmul.f32 %v1720, 0.5
        %v1849 = vmul.f32 %v1721, 0.5
        %v1850 = vmul.f32 %v1722, 0.5
        %v1851 = vmul.f32 %v1723, 0.5
        %v1852 = vmul.f32 %v1724, 0.5
        %v1853 = vmul.f32 %v1725, 0.5
        %v1854 = vmul.f32 %v1726, 0.5
        %v1855 = vmul.f32 %v1727, 0.5
        %v1856 = vmul.f32 %v1728, 0.5
        %v1857 = vmul.f32 %v1729, 0.5
        %v1858 = vmul.f32 %v1730, 0.5
        %v1859 = vmul.f32 %v1731, 0.5
        %v1860 = vmul.f32 %v1732, 0.5
        %v1861 = vmul.f32 %v1733, 0.5
        %v1862 = vmul.f32 %v1734, 0.5
        %v1863 = vmul.f32 %v1735, 0.5
        %v1864 = vmul.f32 %v1736, 0.5
        %v1865 = vmul.f32 %v1737, 0.5
        %v1866 = vmul.f32 %v1738, 0.5
        %v1867 = vmul.f32 %v1739, 0.5
        %v1868 = vmul.f32 %v1740, 0.5
        %v1869 = vmul.f32 %v1741, 0.5
        %v1870 = vmul.f32 %v1742, 0.5
        %v1871 = vmul.f32 %v1743, 0.5
        %v1872 = vmul.f32 %v1744, 0.5
        %v1873 = vmul.f32 %v1745, 0.5
        %v1874 = vmul.f32 %v1746, 0.5
        %v1875 = vmul.f32 %v1747, 0.5
        %v1876 = vmul.f32 %v1748, 0.5
        %v1877 = vmul.f32 %v1749, 0.5
        %v1878 = vmul.f32 %v1750, 0.5
        %v1879 = vmul.f32 %v1751, 0.5
        %v1880 = vmul.f32 %v1752, 0.5
        %v1881 = vmul.f32 %v1753, 0.5
        %v1882 = vmul.f32 %v1754, 0.5
        %v1883 = vmul.f32 %v1755, 0.5
        %v1884 = vmul.f32 %v1756, 0.5
        %v1885 = vmul.f32 %v1757, 0.5
        %v1886 = vmul.f32 %v1758, 0.5
        %v1887 = vmul.f32 %v1759, 0.5
        %v1888 = vmul.f32 %v1760, 0.5
        %v1889 = vmul.f32 %v1761, 0.5
        %v1890 = vmul.f32 %v1762, 0.5
        %v1891 = vmul.f32 %v1763, 0.5
        %v1892 = vmul.f32 %v1764, 0.5
        %v1893 = vmul.f32 %v1765, 0.5
        %v1894 = vmul.f32 %v1766, 0.5
        %v1895 = vmul.f32 %v1767, 0.5
        %v1896 = vmul.f32 %v1768, 0.5
        %v1897 = vmul.f32 %v1769, 0.5
        %v1898 = vmul.f32 %v1770, 0.5
        %v1899 = vmul.f32 %v1771, 0.5
        %v1900 = vmul.f32 %v1772, 0.5
        %v1901 = vmul.f32 %v1773, 0.5
        %v1902 = vmul.f32 %v1774, 0.5
        %v1903 = vmul.f32 %v1775, 0.5
        %v1904 = vmul.f32 %v1776, 0.5
        %v1905 = vmul.f32 %v1777, 0.5
        %v1906 = vmul.f32 %v1778, 0.5
        %v1907 = vmul.f32 %v1779, 0.5
        %v1908 = vmul.f32 %v1780, 0.5
        %v1909 = vmul.f32 %v1781, 0.5
        %v1910 = vmul.f32 %v1782, 0.5
        %v1911 = vmul.f32 %v1783, 0.5
        %v1912 = vmul.f32 %v1784, 0.5
        %v1913 = vmul.f32 %v1785, 0.5
        %v1914 = vmul.f32 %v1786, 0.5
        %v1915 = vmul.f32 %v1787, 0.5
        %v1916 = vmul.f32 %v1788, 0.5
        %v1917 = vmul.f32 %v1789, 0.5
        %v1918 = vmul.f32 %v1790, 0.5
        %v1919 = vmul.f32 %v1791, 0.5
        %v1920 = vmul.f32 %v1792, 0.5
        %v1921 = vmul.f32 %v1793, 0.5
        %v1922 = vmul.f32 %v1794, 0.5
        %v1923 = vmul.f32 %v1795, 0.5
        %v1924 = vmul.f32 %v1796, 0.5
        %v1925 = vmul.f32 %v1797, 0.5
        %v1926 = vmul.f32 %v1798, 0.5
        %v1927 = vmul.f32 %v1799, 0.5
        %v1928 = vmul.f32 %v1800, 0.5
        %v1929 = vmul.f32 %v1801, 0.5
        %v1930 = vmul.f32 %v1802, 0.5
        %v1931 = vmul.f32 %v1803, 0.5
        %v1932 = vmul.f32 %v1804, 0.5
        %v1933 = vmul.f32 %v1805, 0.5
        %v1934 = vmul.f32 %v1806, 0.5
        %v1935 = vmul.f32 %v1807, 0.5
        %v1936 = vmul.f32 %v1808, 0.5
        %v1937 = vmul.f32 %v1809, 0.5
        %v1938 = vmul.f32 %v1810, 0.5
        %v1939 = vmul.f32 %v1811, 0.5
        %v1940 = vmul.f32 %v1812, 0.5
        %v1941 = vmul.f32 %v1813, 0.5
        %v1942 = vmul.f32 %v1814, 0.5
        %v1943 = vmul.f32 %v1815, 0.5
        %v1944 = vmul.f32 %v1816, 0.5
        %v1945 = vmul.f32 %v1817, 0.5
        %v1946 = vmul.f32 %v1818, 0.5
        %v1947 = vmul.f32 %v1819, 0.5
        %v1948 = vmul.f32 %v1820, 0.5
        %v1949 = vmul.f32 %v1821, 0.5
        %v1950 = vmul.f32 %v1822, 0.5
        %v1951 = vmul.f32 %v1823, 0.5
        %v1952 = vmul.f32 %v1824, 0.5
        %v1953 = vmul.f32 %v1825, 0.5
        %v1954 = vmul.f32 %v1826, 0.5
        %v1955 = vmul.f32 %v1827, 0.5
        %v1956 = vmul.f32 %v1828, 0.5
        %v1957 = vmul.f32 %v1829, 0.5
        %v1958 = vmul.f32 %v1830, 0.5
        %v1959 = vmul.f32 %v1831, 0.5
        %v1960 = vmul.f32 %v1832, 0.5
        %v1961 = vmul.f32 %v1833, 0.5
        %v1962 = vmul.f32 %v1834, 0.5
        %v1963 = vmul.f32 %v1835, 0.5
        %v1964 = vmul.f32 %v1836, 0.5
        %v1965 = vmul.f32 %v1837, 0.5
        %v1966 = vmul.f32 %v1838, 0.5
        %v1967 = vmul.f32 %v1839, 0.5
        %v1968 = vmul.f32 %v1840, 0.5
        %v1969 = vmul.f32 %v1841, 0.5
        %v1970 = vmul.f32 %v1842, 0.5
        %v1971 = vmul.f32 %v1843, 0.5
        %v1972 = vmul.f32 %v1844, 0.5
        %v1973 = vmul.f32 %v1845, 0.5
        %v1974 = vmul.f32 %v1846, 0.5
        %v1975 = vmul.f32 %v633, %v1847
        %v1976 = vmul.f32 %v635, %v1848
        %v1977 = vmul.f32 %v637, %v1849
        %v1978 = vmul.f32 %v639, %v1850
        %v1979 = vmul.f32 %v643, %v1851
        %v1980 = vmul.f32 %v645, %v1852
        %v1981 = vmul.f32 %v647, %v1853
        %v1982 = vmul.f32 %v649, %v1854
        %v1983 = vmul.f32 %v653, %v1855
        %v1984 = vmul.f32 %v655, %v1856
        %v1985 = vmul.f32 %v657, %v1857
        %v1986 = vmul.f32 %v659, %v1858
        %v1987 = vmul.f32 %v663, %v1859
        %v1988 = vmul.f32 %v665, %v1860
        %v1989 = vmul.f32 %v667, %v1861
        %v1990 = vmul.f32 %v669, %v1862
        %v1991 = vmul.f32 %v673, %v1863
        %v1992 = vmul.f32 %v675, %v1864
        %v1993 = vmul.f32 %v677, %v1865
        %v1994 = vmul.f32 %v679, %v1866
        %v1995 = vmul.f32 %v683, %v1867
        %v1996 = vmul.f32 %v685, %v1868
        %v1997 = vmul.f32 %v687, %v1869
        %v1998 = vmul.f32 %v689, %v1870
        %v1999 = vmul.f32 %v693, %v1871
        %v2000 = vmul.f32 %v695, %v1872
        %v2001 = vmul.f32 %v697, %v1873
        %v2002 = vmul.f32 %v699, %v1874
        %v2003 = vmul.f32 %v703, %v1875
        %v2004 = vmul.f32 %v705, %v1876
        %v2005 = vmul.f32 %v707, %v1877
        %v2006 = vmul.f32 %v709, %v1878
        %v2007 = vmul.f32 %v713, %v1879
        %v2008 = vmul.f32 %v715, %v1880
        %v2009 = vmul.f32 %v717, %v1881
        %v2010 = vmul.f32 %v719, %v1882
        %v2011 = vmul.f32 %v723, %v1883
        %v2012 = vmul.f32 %v725, %v1884
        %v2013 = vmul.f32 %v727, %v1885
        %v2014 = vmul.f32 %v729, %v1886
        %v2015 = vmul.f32 %v733, %v1887
        %v2016 = vmul.f32 %v735, %v1888
        %v2017 = vmul.f32 %v737, %v1889
        %v2018 = vmul.f32 %v739, %v1890
        %v2019 = vmul.f32 %v743, %v1891
        %v2020 = vmul.f32 %v745, %v1892
        %v2021 = vmul.f32 %v747, %v1893
        %v2022 = vmul.f32 %v749, %v1894
        %v2023 = vmul.f32 %v753, %v1895
        %v2024 = vmul.f32 %v755, %v1896
        %v2025 = vmul.f32 %v757, %v1897
        %v2026 = vmul.f32 %v759, %v1898
        %v2027 = vmul.f32 %v763, %v1899
        %v2028 = vmul.f32 %v765, %v1900
        %v2029 = vmul.f32 %v767, %v1901
        %v2030 = vmul.f32 %v769, %v1902
        %v2031 = vmul.f32 %v773, %v1903
        %v2032 = vmul.f32 %v775, %v1904
        %v2033 = vmul.f32 %v777, %v1905
        %v2034 = vmul.f32 %v779, %v1906
        %v2035 = vmul.f32 %v783, %v1907
        %v2036 = vmul.f32 %v785, %v1908
        %v2037 = vmul.f32 %v787, %v1909
        %v2038 = vmul.f32 %v789, %v1910
        %v2039 = vmul.f32 %v793, %v1911
        %v2040 = vmul.f32 %v795, %v1912
        %v2041 = vmul.f32 %v797, %v1913
        %v2042 = vmul.f32 %v799, %v1914
        %v2043 = vmul.f32 %v803, %v1915
        %v2044 = vmul.f32 %v805, %v1916
        %v2045 = vmul.f32 %v807, %v1917
        %v2046 = vmul.f32 %v809, %v1918
        %v2047 = vmul.f32 %v813, %v1919
        %v2048 = vmul.f32 %v815, %v1920
        %v2049 = vmul.f32 %v817, %v1921
        %v2050 = vmul.f32 %v819, %v1922
        %v2051 = vmul.f32 %v823, %v1923
        %v2052 = vmul.f32 %v825, %v1924
        %v2053 = vmul.f32 %v827, %v1925
        %v2054 = vmul.f32 %v829, %v1926
        %v2055 = vmul.f32 %v833, %v1927
        %v2056 = vmul.f32 %v835, %v1928
        %v2057 = vmul.f32 %v837, %v1929
        %v2058 = vmul.f32 %v839, %v1930
        %v2059 = vmul.f32 %v843, %v1931
        %v2060 = vmul.f32 %v845, %v1932
        %v2061 = vmul.f32 %v847, %v1933
        %v2062 = vmul.f32 %v849, %v1934
        %v2063 = vmul.f32 %v853, %v1935
        %v2064 = vmul.f32 %v855, %v1936
        %v2065 = vmul.f32 %v857, %v1937
        %v2066 = vmul.f32 %v859, %v1938
        %v2067 = vmul.f32 %v863, %v1939
        %v2068 = vmul.f32 %v865, %v1940
        %v2069 = vmul.f32 %v867, %v1941
        %v2070 = vmul.f32 %v869, %v1942
        %v2071 = vmul.f32 %v873, %v1943
        %v2072 = vmul.f32 %v875, %v1944
        %v2073 = vmul.f32 %v877, %v1945
        %v2074 = vmul.f32 %v879, %v1946
        %v2075 = vmul.f32 %v883, %v1947
        %v2076 = vmul.f32 %v885, %v1948
        %v2077 = vmul.f32 %v887, %v1949
        %v2078 = vmul.f32 %v889, %v1950
        %v2079 = vmul.f32 %v893, %v1951
        %v2080 = vmul.f32 %v895, %v1952
        %v2081 = vmul.f32 %v897, %v1953
        %v2082 = vmul.f32 %v899, %v1954
        %v2083 = vmul.f32 %v903, %v1955
        %v2084 = vmul.f32 %v905, %v1956
        %v2085 = vmul.f32 %v907, %v1957
        %v2086 = vmul.f32 %v909, %v1958
        %v2087 = vmul.f32 %v913, %v1959
        %v2088 = vmul.f32 %v915, %v1960
        %v2089 = vmul.f32 %v917, %v1961
        %v2090 = vmul.f32 %v919, %v1962
        %v2091 = vmul.f32 %v923, %v1963
        %v2092 = vmul.f32 %v925, %v1964
        %v2093 = vmul.f32 %v927, %v1965
        %v2094 = vmul.f32 %v929, %v1966
        %v2095 = vmul.f32 %v933, %v1967
        %v2096 = vmul.f32 %v935, %v1968
        %v2097 = vmul.f32 %v937, %v1969
        %v2098 = vmul.f32 %v939, %v1970
        %v2099 = vmul.f32 %v943, %v1971
        %v2100 = vmul.f32 %v945, %v1972
        %v2101 = vmul.f32 %v947, %v1973
        %v2102 = vmul.f32 %v949, %v1974
        %s2103 = sld [smem:[#allocation4]]
        %s2104 = smul.u32 %s29, 512
        %s2105 = smul.u32 %s30, 256
        %v2106 = vlaneseq
        %v2107 = vshrl.u32 %v2106, 7
        %v2108 = vadd.s32 %v2107, 8
        %v2109 = vadd.s32 %v2107, 16
        %v2110 = vadd.s32 %v2107, 24
        %v2111 = vadd.s32 %v2107, 32
        %v2112 = vadd.s32 %v2107, 40
        %v2113 = vadd.s32 %v2107, 48
        %v2114 = vadd.s32 %v2107, 56
        %v2115 = vadd.s32 %v2107, 64
        %v2116 = vadd.s32 %v2107, 72
        %v2117 = vadd.s32 %v2107, 80
        %v2118 = vadd.s32 %v2107, 88
        %v2119 = vadd.s32 %v2107, 96
        %v2120 = vadd.s32 %v2107, 104
        %v2121 = vadd.s32 %v2107, 112
        %v2122 = vadd.s32 %v2107, 120
        %v2123 = vadd.s32 %v2107, 128
        %v2124 = vadd.s32 %v2107, 136
        %v2125 = vadd.s32 %v2107, 144
        %v2126 = vadd.s32 %v2107, 152
        %v2127 = vadd.s32 %v2107, 160
        %v2128 = vadd.s32 %v2107, 168
        %v2129 = vadd.s32 %v2107, 176
        %v2130 = vadd.s32 %v2107, 184
        %v2131 = vadd.s32 %v2107, 192
        %v2132 = vadd.s32 %v2107, 200
        %v2133 = vadd.s32 %v2107, 208
        %v2134 = vadd.s32 %v2107, 216
        %v2135 = vadd.s32 %v2107, 224
        %v2136 = vadd.s32 %v2107, 232
        %v2137 = vadd.s32 %v2107, 240
        %v2138 = vadd.s32 %v2107, 248
        %v2139 = vadd.s32 %v2107, 256
        %v2140 = vadd.s32 %v2107, 264
        %v2141 = vadd.s32 %v2107, 272
        %v2142 = vadd.s32 %v2107, 280
        %v2143 = vadd.s32 %v2107, 288
        %v2144 = vadd.s32 %v2107, 296
        %v2145 = vadd.s32 %v2107, 304
        %v2146 = vadd.s32 %v2107, 312
        %v2147 = vadd.s32 %v2107, 320
        %v2148 = vadd.s32 %v2107, 328
        %v2149 = vadd.s32 %v2107, 336
        %v2150 = vadd.s32 %v2107, 344
        %v2151 = vadd.s32 %v2107, 352
        %v2152 = vadd.s32 %v2107, 360
        %v2153 = vadd.s32 %v2107, 368
        %v2154 = vadd.s32 %v2107, 376
        %v2155 = vadd.s32 %v2107, 384
        %v2156 = vadd.s32 %v2107, 392
        %v2157 = vadd.s32 %v2107, 400
        %v2158 = vadd.s32 %v2107, 408
        %v2159 = vadd.s32 %v2107, 416
        %v2160 = vadd.s32 %v2107, 424
        %v2161 = vadd.s32 %v2107, 432
        %v2162 = vadd.s32 %v2107, 440
        %v2163 = vadd.s32 %v2107, 448
        %v2164 = vadd.s32 %v2107, 456
        %v2165 = vadd.s32 %v2107, 464
        %v2166 = vadd.s32 %v2107, 472
        %v2167 = vadd.s32 %v2107, 480
        %v2168 = vadd.s32 %v2107, 488
        %v2169 = vadd.s32 %v2107, 496
        %v2170 = vadd.s32 %v2107, 504
        %v2171 = vstv %s2104
        %v2172 = vadd.s32 %v2107, %v2171
        %v2173 = vadd.s32 %v2108, %v2171
        %v2174 = vadd.s32 %v2109, %v2171
        %v2175 = vadd.s32 %v2110, %v2171
        %v2176 = vadd.s32 %v2111, %v2171
        %v2177 = vadd.s32 %v2112, %v2171
        %v2178 = vadd.s32 %v2113, %v2171
        %v2179 = vadd.s32 %v2114, %v2171
        %v2180 = vadd.s32 %v2115, %v2171
        %v2181 = vadd.s32 %v2116, %v2171
        %v2182 = vadd.s32 %v2117, %v2171
        %v2183 = vadd.s32 %v2118, %v2171
        %v2184 = vadd.s32 %v2119, %v2171
        %v2185 = vadd.s32 %v2120, %v2171
        %v2186 = vadd.s32 %v2121, %v2171
        %v2187 = vadd.s32 %v2122, %v2171
        %v2188 = vadd.s32 %v2123, %v2171
        %v2189 = vadd.s32 %v2124, %v2171
        %v2190 = vadd.s32 %v2125, %v2171
        %v2191 = vadd.s32 %v2126, %v2171
        %v2192 = vadd.s32 %v2127, %v2171
        %v2193 = vadd.s32 %v2128, %v2171
        %v2194 = vadd.s32 %v2129, %v2171
        %v2195 = vadd.s32 %v2130, %v2171
        %v2196 = vadd.s32 %v2131, %v2171
        %v2197 = vadd.s32 %v2132, %v2171
        %v2198 = vadd.s32 %v2133, %v2171
        %v2199 = vadd.s32 %v2134, %v2171
        %v2200 = vadd.s32 %v2135, %v2171
        %v2201 = vadd.s32 %v2136, %v2171
        %v2202 = vadd.s32 %v2137, %v2171
        %v2203 = vadd.s32 %v2138, %v2171
        %v2204 = vadd.s32 %v2139, %v2171
        %v2205 = vadd.s32 %v2140, %v2171
        %v2206 = vadd.s32 %v2141, %v2171
        %v2207 = vadd.s32 %v2142, %v2171
        %v2208 = vadd.s32 %v2143, %v2171
        %v2209 = vadd.s32 %v2144, %v2171
        %v2210 = vadd.s32 %v2145, %v2171
        %v2211 = vadd.s32 %v2146, %v2171
        %v2212 = vadd.s32 %v2147, %v2171
        %v2213 = vadd.s32 %v2148, %v2171
        %v2214 = vadd.s32 %v2149, %v2171
        %v2215 = vadd.s32 %v2150, %v2171
        %v2216 = vadd.s32 %v2151, %v2171
        %v2217 = vadd.s32 %v2152, %v2171
        %v2218 = vadd.s32 %v2153, %v2171
        %v2219 = vadd.s32 %v2154, %v2171
        %v2220 = vadd.s32 %v2155, %v2171
        %v2221 = vadd.s32 %v2156, %v2171
        %v2222 = vadd.s32 %v2157, %v2171
        %v2223 = vadd.s32 %v2158, %v2171
        %v2224 = vadd.s32 %v2159, %v2171
        %v2225 = vadd.s32 %v2160, %v2171
        %v2226 = vadd.s32 %v2161, %v2171
        %v2227 = vadd.s32 %v2162, %v2171
        %v2228 = vadd.s32 %v2163, %v2171
        %v2229 = vadd.s32 %v2164, %v2171
        %v2230 = vadd.s32 %v2165, %v2171
        %v2231 = vadd.s32 %v2166, %v2171
        %v2232 = vadd.s32 %v2167, %v2171
        %v2233 = vadd.s32 %v2168, %v2171
        %v2234 = vadd.s32 %v2169, %v2171
        %v2235 = vadd.s32 %v2170, %v2171
        %v2236 = vmul.u32 %v2172, 2654435761
        %v2237 = vmul.u32 %v2173, 2654435761
        %v2238 = vmul.u32 %v2174, 2654435761
        %v2239 = vmul.u32 %v2175, 2654435761
        %v2240 = vmul.u32 %v2176, 2654435761
        %v2241 = vmul.u32 %v2177, 2654435761
        %v2242 = vmul.u32 %v2178, 2654435761
        %v2243 = vmul.u32 %v2179, 2654435761
        %v2244 = vmul.u32 %v2180, 2654435761
        %v2245 = vmul.u32 %v2181, 2654435761
        %v2246 = vmul.u32 %v2182, 2654435761
        %v2247 = vmul.u32 %v2183, 2654435761
        %v2248 = vmul.u32 %v2184, 2654435761
        %v2249 = vmul.u32 %v2185, 2654435761
        %v2250 = vmul.u32 %v2186, 2654435761
        %v2251 = vmul.u32 %v2187, 2654435761
        %v2252 = vmul.u32 %v2188, 2654435761
        %v2253 = vmul.u32 %v2189, 2654435761
        %v2254 = vmul.u32 %v2190, 2654435761
        %v2255 = vmul.u32 %v2191, 2654435761
        %v2256 = vmul.u32 %v2192, 2654435761
        %v2257 = vmul.u32 %v2193, 2654435761
        %v2258 = vmul.u32 %v2194, 2654435761
        %v2259 = vmul.u32 %v2195, 2654435761
        %v2260 = vmul.u32 %v2196, 2654435761
        %v2261 = vmul.u32 %v2197, 2654435761
        %v2262 = vmul.u32 %v2198, 2654435761
        %v2263 = vmul.u32 %v2199, 2654435761
        %v2264 = vmul.u32 %v2200, 2654435761
        %v2265 = vmul.u32 %v2201, 2654435761
        %v2266 = vmul.u32 %v2202, 2654435761
        %v2267 = vmul.u32 %v2203, 2654435761
        %v2268 = vmul.u32 %v2204, 2654435761
        %v2269 = vmul.u32 %v2205, 2654435761
        %v2270 = vmul.u32 %v2206, 2654435761
        %v2271 = vmul.u32 %v2207, 2654435761
        %v2272 = vmul.u32 %v2208, 2654435761
        %v2273 = vmul.u32 %v2209, 2654435761
        %v2274 = vmul.u32 %v2210, 2654435761
        %v2275 = vmul.u32 %v2211, 2654435761
        %v2276 = vmul.u32 %v2212, 2654435761
        %v2277 = vmul.u32 %v2213, 2654435761
        %v2278 = vmul.u32 %v2214, 2654435761
        %v2279 = vmul.u32 %v2215, 2654435761
        %v2280 = vmul.u32 %v2216, 2654435761
        %v2281 = vmul.u32 %v2217, 2654435761
        %v2282 = vmul.u32 %v2218, 2654435761
        %v2283 = vmul.u32 %v2219, 2654435761
        %v2284 = vmul.u32 %v2220, 2654435761
        %v2285 = vmul.u32 %v2221, 2654435761
        %v2286 = vmul.u32 %v2222, 2654435761
        %v2287 = vmul.u32 %v2223, 2654435761
        %v2288 = vmul.u32 %v2224, 2654435761
        %v2289 = vmul.u32 %v2225, 2654435761
        %v2290 = vmul.u32 %v2226, 2654435761
        %v2291 = vmul.u32 %v2227, 2654435761
        %v2292 = vmul.u32 %v2228, 2654435761
        %v2293 = vmul.u32 %v2229, 2654435761
        %v2294 = vmul.u32 %v2230, 2654435761
        %v2295 = vmul.u32 %v2231, 2654435761
        %v2296 = vmul.u32 %v2232, 2654435761
        %v2297 = vmul.u32 %v2233, 2654435761
        %v2298 = vmul.u32 %v2234, 2654435761
        %v2299 = vmul.u32 %v2235, 2654435761
        %v2300 = vlaneseq
        %v2301 = vand.u32 %v2300, 127
        %v2302 = vadd.s32 %v2301, 128
        %v2303 = vstv %s2105
        %v2304 = vadd.s32 %v2301, %v2303
        %v2305 = vadd.s32 %v2302, %v2303
        %v2306 = vmul.u32 %v2304, 2246822519
        %v2307 = vmul.u32 %v2305, 2246822519
        %v2308 = vstv %s2103
        %v2309 = vadd.s32 %v2308, %v2236
        %v2310 = vadd.s32 %v2308, %v2237
        %v2311 = vadd.s32 %v2308, %v2238
        %v2312 = vadd.s32 %v2308, %v2239
        %v2313 = vadd.s32 %v2308, %v2240
        %v2314 = vadd.s32 %v2308, %v2241
        %v2315 = vadd.s32 %v2308, %v2242
        %v2316 = vadd.s32 %v2308, %v2243
        %v2317 = vadd.s32 %v2308, %v2244
        %v2318 = vadd.s32 %v2308, %v2245
        %v2319 = vadd.s32 %v2308, %v2246
        %v2320 = vadd.s32 %v2308, %v2247
        %v2321 = vadd.s32 %v2308, %v2248
        %v2322 = vadd.s32 %v2308, %v2249
        %v2323 = vadd.s32 %v2308, %v2250
        %v2324 = vadd.s32 %v2308, %v2251
        %v2325 = vadd.s32 %v2308, %v2252
        %v2326 = vadd.s32 %v2308, %v2253
        %v2327 = vadd.s32 %v2308, %v2254
        %v2328 = vadd.s32 %v2308, %v2255
        %v2329 = vadd.s32 %v2308, %v2256
        %v2330 = vadd.s32 %v2308, %v2257
        %v2331 = vadd.s32 %v2308, %v2258
        %v2332 = vadd.s32 %v2308, %v2259
        %v2333 = vadd.s32 %v2308, %v2260
        %v2334 = vadd.s32 %v2308, %v2261
        %v2335 = vadd.s32 %v2308, %v2262
        %v2336 = vadd.s32 %v2308, %v2263
        %v2337 = vadd.s32 %v2308, %v2264
        %v2338 = vadd.s32 %v2308, %v2265
        %v2339 = vadd.s32 %v2308, %v2266
        %v2340 = vadd.s32 %v2308, %v2267
        %v2341 = vadd.s32 %v2308, %v2268
        %v2342 = vadd.s32 %v2308, %v2269
        %v2343 = vadd.s32 %v2308, %v2270
        %v2344 = vadd.s32 %v2308, %v2271
        %v2345 = vadd.s32 %v2308, %v2272
        %v2346 = vadd.s32 %v2308, %v2273
        %v2347 = vadd.s32 %v2308, %v2274
        %v2348 = vadd.s32 %v2308, %v2275
        %v2349 = vadd.s32 %v2308, %v2276
        %v2350 = vadd.s32 %v2308, %v2277
        %v2351 = vadd.s32 %v2308, %v2278
        %v2352 = vadd.s32 %v2308, %v2279
        %v2353 = vadd.s32 %v2308, %v2280
        %v2354 = vadd.s32 %v2308, %v2281
        %v2355 = vadd.s32 %v2308, %v2282
        %v2356 = vadd.s32 %v2308, %v2283
        %v2357 = vadd.s32 %v2308, %v2284
        %v2358 = vadd.s32 %v2308, %v2285
        %v2359 = vadd.s32 %v2308, %v2286
        %v2360 = vadd.s32 %v2308, %v2287
        %v2361 = vadd.s32 %v2308, %v2288
        %v2362 = vadd.s32 %v2308, %v2289
        %v2363 = vadd.s32 %v2308, %v2290
        %v2364 = vadd.s32 %v2308, %v2291
        %v2365 = vadd.s32 %v2308, %v2292
        %v2366 = vadd.s32 %v2308, %v2293
        %v2367 = vadd.s32 %v2308, %v2294
        %v2368 = vadd.s32 %v2308, %v2295
        %v2369 = vadd.s32 %v2308, %v2296
        %v2370 = vadd.s32 %v2308, %v2297
        %v2371 = vadd.s32 %v2308, %v2298
        %v2372 = vadd.s32 %v2308, %v2299
        %v2373 = vadd.s32 %v2309, %v2306
        %v2374 = vadd.s32 %v2309, %v2307
        %v2375 = vadd.s32 %v2310, %v2306
        %v2376 = vadd.s32 %v2310, %v2307
        %v2377 = vadd.s32 %v2311, %v2306
        %v2378 = vadd.s32 %v2311, %v2307
        %v2379 = vadd.s32 %v2312, %v2306
        %v2380 = vadd.s32 %v2312, %v2307
        %v2381 = vadd.s32 %v2313, %v2306
        %v2382 = vadd.s32 %v2313, %v2307
        %v2383 = vadd.s32 %v2314, %v2306
        %v2384 = vadd.s32 %v2314, %v2307
        %v2385 = vadd.s32 %v2315, %v2306
        %v2386 = vadd.s32 %v2315, %v2307
        %v2387 = vadd.s32 %v2316, %v2306
        %v2388 = vadd.s32 %v2316, %v2307
        %v2389 = vadd.s32 %v2317, %v2306
        %v2390 = vadd.s32 %v2317, %v2307
        %v2391 = vadd.s32 %v2318, %v2306
        %v2392 = vadd.s32 %v2318, %v2307
        %v2393 = vadd.s32 %v2319, %v2306
        %v2394 = vadd.s32 %v2319, %v2307
        %v2395 = vadd.s32 %v2320, %v2306
        %v2396 = vadd.s32 %v2320, %v2307
        %v2397 = vadd.s32 %v2321, %v2306
        %v2398 = vadd.s32 %v2321, %v2307
        %v2399 = vadd.s32 %v2322, %v2306
        %v2400 = vadd.s32 %v2322, %v2307
        %v2401 = vadd.s32 %v2323, %v2306
        %v2402 = vadd.s32 %v2323, %v2307
        %v2403 = vadd.s32 %v2324, %v2306
        %v2404 = vadd.s32 %v2324, %v2307
        %v2405 = vadd.s32 %v2325, %v2306
        %v2406 = vadd.s32 %v2325, %v2307
        %v2407 = vadd.s32 %v2326, %v2306
        %v2408 = vadd.s32 %v2326, %v2307
        %v2409 = vadd.s32 %v2327, %v2306
        %v2410 = vadd.s32 %v2327, %v2307
        %v2411 = vadd.s32 %v2328, %v2306
        %v2412 = vadd.s32 %v2328, %v2307
        %v2413 = vadd.s32 %v2329, %v2306
        %v2414 = vadd.s32 %v2329, %v2307
        %v2415 = vadd.s32 %v2330, %v2306
        %v2416 = vadd.s32 %v2330, %v2307
        %v2417 = vadd.s32 %v2331, %v2306
        %v2418 = vadd.s32 %v2331, %v2307
        %v2419 = vadd.s32 %v2332, %v2306
        %v2420 = vadd.s32 %v2332, %v2307
        %v2421 = vadd.s32 %v2333, %v2306
        %v2422 = vadd.s32 %v2333, %v2307
        %v2423 = vadd.s32 %v2334, %v2306
        %v2424 = vadd.s32 %v2334, %v2307
        %v2425 = vadd.s32 %v2335, %v2306
        %v2426 = vadd.s32 %v2335, %v2307
        %v2427 = vadd.s32 %v2336, %v2306
        %v2428 = vadd.s32 %v2336, %v2307
        %v2429 = vadd.s32 %v2337, %v2306
        %v2430 = vadd.s32 %v2337, %v2307
        %v2431 = vadd.s32 %v2338, %v2306
        %v2432 = vadd.s32 %v2338, %v2307
        %v2433 = vadd.s32 %v2339, %v2306
        %v2434 = vadd.s32 %v2339, %v2307
        %v2435 = vadd.s32 %v2340, %v2306
        %v2436 = vadd.s32 %v2340, %v2307
        %v2437 = vadd.s32 %v2341, %v2306
        %v2438 = vadd.s32 %v2341, %v2307
        %v2439 = vadd.s32 %v2342, %v2306
        %v2440 = vadd.s32 %v2342, %v2307
        %v2441 = vadd.s32 %v2343, %v2306
        %v2442 = vadd.s32 %v2343, %v2307
        %v2443 = vadd.s32 %v2344, %v2306
        %v2444 = vadd.s32 %v2344, %v2307
        %v2445 = vadd.s32 %v2345, %v2306
        %v2446 = vadd.s32 %v2345, %v2307
        %v2447 = vadd.s32 %v2346, %v2306
        %v2448 = vadd.s32 %v2346, %v2307
        %v2449 = vadd.s32 %v2347, %v2306
        %v2450 = vadd.s32 %v2347, %v2307
        %v2451 = vadd.s32 %v2348, %v2306
        %v2452 = vadd.s32 %v2348, %v2307
        %v2453 = vadd.s32 %v2349, %v2306
        %v2454 = vadd.s32 %v2349, %v2307
        %v2455 = vadd.s32 %v2350, %v2306
        %v2456 = vadd.s32 %v2350, %v2307
        %v2457 = vadd.s32 %v2351, %v2306
        %v2458 = vadd.s32 %v2351, %v2307
        %v2459 = vadd.s32 %v2352, %v2306
        %v2460 = vadd.s32 %v2352, %v2307
        %v2461 = vadd.s32 %v2353, %v2306
        %v2462 = vadd.s32 %v2353, %v2307
        %v2463 = vadd.s32 %v2354, %v2306
        %v2464 = vadd.s32 %v2354, %v2307
        %v2465 = vadd.s32 %v2355, %v2306
        %v2466 = vadd.s32 %v2355, %v2307
        %v2467 = vadd.s32 %v2356, %v2306
        %v2468 = vadd.s32 %v2356, %v2307
        %v2469 = vadd.s32 %v2357, %v2306
        %v2470 = vadd.s32 %v2357, %v2307
        %v2471 = vadd.s32 %v2358, %v2306
        %v2472 = vadd.s32 %v2358, %v2307
        %v2473 = vadd.s32 %v2359, %v2306
        %v2474 = vadd.s32 %v2359, %v2307
        %v2475 = vadd.s32 %v2360, %v2306
        %v2476 = vadd.s32 %v2360, %v2307
        %v2477 = vadd.s32 %v2361, %v2306
        %v2478 = vadd.s32 %v2361, %v2307
        %v2479 = vadd.s32 %v2362, %v2306
        %v2480 = vadd.s32 %v2362, %v2307
        %v2481 = vadd.s32 %v2363, %v2306
        %v2482 = vadd.s32 %v2363, %v2307
        %v2483 = vadd.s32 %v2364, %v2306
        %v2484 = vadd.s32 %v2364, %v2307
        %v2485 = vadd.s32 %v2365, %v2306
        %v2486 = vadd.s32 %v2365, %v2307
        %v2487 = vadd.s32 %v2366, %v2306
        %v2488 = vadd.s32 %v2366, %v2307
        %v2489 = vadd.s32 %v2367, %v2306
        %v2490 = vadd.s32 %v2367, %v2307
        %v2491 = vadd.s32 %v2368, %v2306
        %v2492 = vadd.s32 %v2368, %v2307
        %v2493 = vadd.s32 %v2369, %v2306
        %v2494 = vadd.s32 %v2369, %v2307
        %v2495 = vadd.s32 %v2370, %v2306
        %v2496 = vadd.s32 %v2370, %v2307
        %v2497 = vadd.s32 %v2371, %v2306
        %v2498 = vadd.s32 %v2371, %v2307
        %v2499 = vadd.s32 %v2372, %v2306
        %v2500 = vadd.s32 %v2372, %v2307
        %v2501 = vshrl.u32 %v2373, 16
        %v2502 = vshrl.u32 %v2374, 16
        %v2503 = vshrl.u32 %v2375, 16
        %v2504 = vshrl.u32 %v2376, 16
        %v2505 = vshrl.u32 %v2377, 16
        %v2506 = vshrl.u32 %v2378, 16
        %v2507 = vshrl.u32 %v2379, 16
        %v2508 = vshrl.u32 %v2380, 16
        %v2509 = vshrl.u32 %v2381, 16
        %v2510 = vshrl.u32 %v2382, 16
        %v2511 = vshrl.u32 %v2383, 16
        %v2512 = vshrl.u32 %v2384, 16
        %v2513 = vshrl.u32 %v2385, 16
        %v2514 = vshrl.u32 %v2386, 16
        %v2515 = vshrl.u32 %v2387, 16
        %v2516 = vshrl.u32 %v2388, 16
        %v2517 = vshrl.u32 %v2389, 16
        %v2518 = vshrl.u32 %v2390, 16
        %v2519 = vshrl.u32 %v2391, 16
        %v2520 = vshrl.u32 %v2392, 16
        %v2521 = vshrl.u32 %v2393, 16
        %v2522 = vshrl.u32 %v2394, 16
        %v2523 = vshrl.u32 %v2395, 16
        %v2524 = vshrl.u32 %v2396, 16
        %v2525 = vshrl.u32 %v2397, 16
        %v2526 = vshrl.u32 %v2398, 16
        %v2527 = vshrl.u32 %v2399, 16
        %v2528 = vshrl.u32 %v2400, 16
        %v2529 = vshrl.u32 %v2401, 16
        %v2530 = vshrl.u32 %v2402, 16
        %v2531 = vshrl.u32 %v2403, 16
        %v2532 = vshrl.u32 %v2404, 16
        %v2533 = vshrl.u32 %v2405, 16
        %v2534 = vshrl.u32 %v2406, 16
        %v2535 = vshrl.u32 %v2407, 16
        %v2536 = vshrl.u32 %v2408, 16
        %v2537 = vshrl.u32 %v2409, 16
        %v2538 = vshrl.u32 %v2410, 16
        %v2539 = vshrl.u32 %v2411, 16
        %v2540 = vshrl.u32 %v2412, 16
        %v2541 = vshrl.u32 %v2413, 16
        %v2542 = vshrl.u32 %v2414, 16
        %v2543 = vshrl.u32 %v2415, 16
        %v2544 = vshrl.u32 %v2416, 16
        %v2545 = vshrl.u32 %v2417, 16
        %v2546 = vshrl.u32 %v2418, 16
        %v2547 = vshrl.u32 %v2419, 16
        %v2548 = vshrl.u32 %v2420, 16
        %v2549 = vshrl.u32 %v2421, 16
        %v2550 = vshrl.u32 %v2422, 16
        %v2551 = vshrl.u32 %v2423, 16
        %v2552 = vshrl.u32 %v2424, 16
        %v2553 = vshrl.u32 %v2425, 16
        %v2554 = vshrl.u32 %v2426, 16
        %v2555 = vshrl.u32 %v2427, 16
        %v2556 = vshrl.u32 %v2428, 16
        %v2557 = vshrl.u32 %v2429, 16
        %v2558 = vshrl.u32 %v2430, 16
        %v2559 = vshrl.u32 %v2431, 16
        %v2560 = vshrl.u32 %v2432, 16
        %v2561 = vshrl.u32 %v2433, 16
        %v2562 = vshrl.u32 %v2434, 16
        %v2563 = vshrl.u32 %v2435, 16
        %v2564 = vshrl.u32 %v2436, 16
        %v2565 = vshrl.u32 %v2437, 16
        %v2566 = vshrl.u32 %v2438, 16
        %v2567 = vshrl.u32 %v2439, 16
        %v2568 = vshrl.u32 %v2440, 16
        %v2569 = vshrl.u32 %v2441, 16
        %v2570 = vshrl.u32 %v2442, 16
        %v2571 = vshrl.u32 %v2443, 16
        %v2572 = vshrl.u32 %v2444, 16
        %v2573 = vshrl.u32 %v2445, 16
        %v2574 = vshrl.u32 %v2446, 16
        %v2575 = vshrl.u32 %v2447, 16
        %v2576 = vshrl.u32 %v2448, 16
        %v2577 = vshrl.u32 %v2449, 16
        %v2578 = vshrl.u32 %v2450, 16
        %v2579 = vshrl.u32 %v2451, 16
        %v2580 = vshrl.u32 %v2452, 16
        %v2581 = vshrl.u32 %v2453, 16
        %v2582 = vshrl.u32 %v2454, 16
        %v2583 = vshrl.u32 %v2455, 16
        %v2584 = vshrl.u32 %v2456, 16
        %v2585 = vshrl.u32 %v2457, 16
        %v2586 = vshrl.u32 %v2458, 16
        %v2587 = vshrl.u32 %v2459, 16
        %v2588 = vshrl.u32 %v2460, 16
        %v2589 = vshrl.u32 %v2461, 16
        %v2590 = vshrl.u32 %v2462, 16
        %v2591 = vshrl.u32 %v2463, 16
        %v2592 = vshrl.u32 %v2464, 16
        %v2593 = vshrl.u32 %v2465, 16
        %v2594 = vshrl.u32 %v2466, 16
        %v2595 = vshrl.u32 %v2467, 16
        %v2596 = vshrl.u32 %v2468, 16
        %v2597 = vshrl.u32 %v2469, 16
        %v2598 = vshrl.u32 %v2470, 16
        %v2599 = vshrl.u32 %v2471, 16
        %v2600 = vshrl.u32 %v2472, 16
        %v2601 = vshrl.u32 %v2473, 16
        %v2602 = vshrl.u32 %v2474, 16
        %v2603 = vshrl.u32 %v2475, 16
        %v2604 = vshrl.u32 %v2476, 16
        %v2605 = vshrl.u32 %v2477, 16
        %v2606 = vshrl.u32 %v2478, 16
        %v2607 = vshrl.u32 %v2479, 16
        %v2608 = vshrl.u32 %v2480, 16
        %v2609 = vshrl.u32 %v2481, 16
        %v2610 = vshrl.u32 %v2482, 16
        %v2611 = vshrl.u32 %v2483, 16
        %v2612 = vshrl.u32 %v2484, 16
        %v2613 = vshrl.u32 %v2485, 16
        %v2614 = vshrl.u32 %v2486, 16
        %v2615 = vshrl.u32 %v2487, 16
        %v2616 = vshrl.u32 %v2488, 16
        %v2617 = vshrl.u32 %v2489, 16
        %v2618 = vshrl.u32 %v2490, 16
        %v2619 = vshrl.u32 %v2491, 16
        %v2620 = vshrl.u32 %v2492, 16
        %v2621 = vshrl.u32 %v2493, 16
        %v2622 = vshrl.u32 %v2494, 16
        %v2623 = vshrl.u32 %v2495, 16
        %v2624 = vshrl.u32 %v2496, 16
        %v2625 = vshrl.u32 %v2497, 16
        %v2626 = vshrl.u32 %v2498, 16
        %v2627 = vshrl.u32 %v2499, 16
        %v2628 = vshrl.u32 %v2500, 16
        %v2629 = vxor.u32 %v2373, %v2501
        %v2630 = vxor.u32 %v2374, %v2502
        %v2631 = vxor.u32 %v2375, %v2503
        %v2632 = vxor.u32 %v2376, %v2504
        %v2633 = vxor.u32 %v2377, %v2505
        %v2634 = vxor.u32 %v2378, %v2506
        %v2635 = vxor.u32 %v2379, %v2507
        %v2636 = vxor.u32 %v2380, %v2508
        %v2637 = vxor.u32 %v2381, %v2509
        %v2638 = vxor.u32 %v2382, %v2510
        %v2639 = vxor.u32 %v2383, %v2511
        %v2640 = vxor.u32 %v2384, %v2512
        %v2641 = vxor.u32 %v2385, %v2513
        %v2642 = vxor.u32 %v2386, %v2514
        %v2643 = vxor.u32 %v2387, %v2515
        %v2644 = vxor.u32 %v2388, %v2516
        %v2645 = vxor.u32 %v2389, %v2517
        %v2646 = vxor.u32 %v2390, %v2518
        %v2647 = vxor.u32 %v2391, %v2519
        %v2648 = vxor.u32 %v2392, %v2520
        %v2649 = vxor.u32 %v2393, %v2521
        %v2650 = vxor.u32 %v2394, %v2522
        %v2651 = vxor.u32 %v2395, %v2523
        %v2652 = vxor.u32 %v2396, %v2524
        %v2653 = vxor.u32 %v2397, %v2525
        %v2654 = vxor.u32 %v2398, %v2526
        %v2655 = vxor.u32 %v2399, %v2527
        %v2656 = vxor.u32 %v2400, %v2528
        %v2657 = vxor.u32 %v2401, %v2529
        %v2658 = vxor.u32 %v2402, %v2530
        %v2659 = vxor.u32 %v2403, %v2531
        %v2660 = vxor.u32 %v2404, %v2532
        %v2661 = vxor.u32 %v2405, %v2533
        %v2662 = vxor.u32 %v2406, %v2534
        %v2663 = vxor.u32 %v2407, %v2535
        %v2664 = vxor.u32 %v2408, %v2536
        %v2665 = vxor.u32 %v2409, %v2537
        %v2666 = vxor.u32 %v2410, %v2538
        %v2667 = vxor.u32 %v2411, %v2539
        %v2668 = vxor.u32 %v2412, %v2540
        %v2669 = vxor.u32 %v2413, %v2541
        %v2670 = vxor.u32 %v2414, %v2542
        %v2671 = vxor.u32 %v2415, %v2543
        %v2672 = vxor.u32 %v2416, %v2544
        %v2673 = vxor.u32 %v2417, %v2545
        %v2674 = vxor.u32 %v2418, %v2546
        %v2675 = vxor.u32 %v2419, %v2547
        %v2676 = vxor.u32 %v2420, %v2548
        %v2677 = vxor.u32 %v2421, %v2549
        %v2678 = vxor.u32 %v2422, %v2550
        %v2679 = vxor.u32 %v2423, %v2551
        %v2680 = vxor.u32 %v2424, %v2552
        %v2681 = vxor.u32 %v2425, %v2553
        %v2682 = vxor.u32 %v2426, %v2554
        %v2683 = vxor.u32 %v2427, %v2555
        %v2684 = vxor.u32 %v2428, %v2556
        %v2685 = vxor.u32 %v2429, %v2557
        %v2686 = vxor.u32 %v2430, %v2558
        %v2687 = vxor.u32 %v2431, %v2559
        %v2688 = vxor.u32 %v2432, %v2560
        %v2689 = vxor.u32 %v2433, %v2561
        %v2690 = vxor.u32 %v2434, %v2562
        %v2691 = vxor.u32 %v2435, %v2563
        %v2692 = vxor.u32 %v2436, %v2564
        %v2693 = vxor.u32 %v2437, %v2565
        %v2694 = vxor.u32 %v2438, %v2566
        %v2695 = vxor.u32 %v2439, %v2567
        %v2696 = vxor.u32 %v2440, %v2568
        %v2697 = vxor.u32 %v2441, %v2569
        %v2698 = vxor.u32 %v2442, %v2570
        %v2699 = vxor.u32 %v2443, %v2571
        %v2700 = vxor.u32 %v2444, %v2572
        %v2701 = vxor.u32 %v2445, %v2573
        %v2702 = vxor.u32 %v2446, %v2574
        %v2703 = vxor.u32 %v2447, %v2575
        %v2704 = vxor.u32 %v2448, %v2576
        %v2705 = vxor.u32 %v2449, %v2577
        %v2706 = vxor.u32 %v2450, %v2578
        %v2707 = vxor.u32 %v2451, %v2579
        %v2708 = vxor.u32 %v2452, %v2580
        %v2709 = vxor.u32 %v2453, %v2581
        %v2710 = vxor.u32 %v2454, %v2582
        %v2711 = vxor.u32 %v2455, %v2583
        %v2712 = vxor.u32 %v2456, %v2584
        %v2713 = vxor.u32 %v2457, %v2585
        %v2714 = vxor.u32 %v2458, %v2586
        %v2715 = vxor.u32 %v2459, %v2587
        %v2716 = vxor.u32 %v2460, %v2588
        %v2717 = vxor.u32 %v2461, %v2589
        %v2718 = vxor.u32 %v2462, %v2590
        %v2719 = vxor.u32 %v2463, %v2591
        %v2720 = vxor.u32 %v2464, %v2592
        %v2721 = vxor.u32 %v2465, %v2593
        %v2722 = vxor.u32 %v2466, %v2594
        %v2723 = vxor.u32 %v2467, %v2595
        %v2724 = vxor.u32 %v2468, %v2596
        %v2725 = vxor.u32 %v2469, %v2597
        %v2726 = vxor.u32 %v2470, %v2598
        %v2727 = vxor.u32 %v2471, %v2599
        %v2728 = vxor.u32 %v2472, %v2600
        %v2729 = vxor.u32 %v2473, %v2601
        %v2730 = vxor.u32 %v2474, %v2602
        %v2731 = vxor.u32 %v2475, %v2603
        %v2732 = vxor.u32 %v2476, %v2604
        %v2733 = vxor.u32 %v2477, %v2605
        %v2734 = vxor.u32 %v2478, %v2606
        %v2735 = vxor.u32 %v2479, %v2607
        %v2736 = vxor.u32 %v2480, %v2608
        %v2737 = vxor.u32 %v2481, %v2609
        %v2738 = vxor.u32 %v2482, %v2610
        %v2739 = vxor.u32 %v2483, %v2611
        %v2740 = vxor.u32 %v2484, %v2612
        %v2741 = vxor.u32 %v2485, %v2613
        %v2742 = vxor.u32 %v2486, %v2614
        %v2743 = vxor.u32 %v2487, %v2615
        %v2744 = vxor.u32 %v2488, %v2616
        %v2745 = vxor.u32 %v2489, %v2617
        %v2746 = vxor.u32 %v2490, %v2618
        %v2747 = vxor.u32 %v2491, %v2619
        %v2748 = vxor.u32 %v2492, %v2620
        %v2749 = vxor.u32 %v2493, %v2621
        %v2750 = vxor.u32 %v2494, %v2622
        %v2751 = vxor.u32 %v2495, %v2623
        %v2752 = vxor.u32 %v2496, %v2624
        %v2753 = vxor.u32 %v2497, %v2625
        %v2754 = vxor.u32 %v2498, %v2626
        %v2755 = vxor.u32 %v2499, %v2627
        %v2756 = vxor.u32 %v2500, %v2628
        %v2757 = vmul.u32 %v2629, 2146121005
        %v2758 = vmul.u32 %v2630, 2146121005
        %v2759 = vmul.u32 %v2631, 2146121005
        %v2760 = vmul.u32 %v2632, 2146121005
        %v2761 = vmul.u32 %v2633, 2146121005
        %v2762 = vmul.u32 %v2634, 2146121005
        %v2763 = vmul.u32 %v2635, 2146121005
        %v2764 = vmul.u32 %v2636, 2146121005
        %v2765 = vmul.u32 %v2637, 2146121005
        %v2766 = vmul.u32 %v2638, 2146121005
        %v2767 = vmul.u32 %v2639, 2146121005
        %v2768 = vmul.u32 %v2640, 2146121005
        %v2769 = vmul.u32 %v2641, 2146121005
        %v2770 = vmul.u32 %v2642, 2146121005
        %v2771 = vmul.u32 %v2643, 2146121005
        %v2772 = vmul.u32 %v2644, 2146121005
        %v2773 = vmul.u32 %v2645, 2146121005
        %v2774 = vmul.u32 %v2646, 2146121005
        %v2775 = vmul.u32 %v2647, 2146121005
        %v2776 = vmul.u32 %v2648, 2146121005
        %v2777 = vmul.u32 %v2649, 2146121005
        %v2778 = vmul.u32 %v2650, 2146121005
        %v2779 = vmul.u32 %v2651, 2146121005
        %v2780 = vmul.u32 %v2652, 2146121005
        %v2781 = vmul.u32 %v2653, 2146121005
        %v2782 = vmul.u32 %v2654, 2146121005
        %v2783 = vmul.u32 %v2655, 2146121005
        %v2784 = vmul.u32 %v2656, 2146121005
        %v2785 = vmul.u32 %v2657, 2146121005
        %v2786 = vmul.u32 %v2658, 2146121005
        %v2787 = vmul.u32 %v2659, 2146121005
        %v2788 = vmul.u32 %v2660, 2146121005
        %v2789 = vmul.u32 %v2661, 2146121005
        %v2790 = vmul.u32 %v2662, 2146121005
        %v2791 = vmul.u32 %v2663, 2146121005
        %v2792 = vmul.u32 %v2664, 2146121005
        %v2793 = vmul.u32 %v2665, 2146121005
        %v2794 = vmul.u32 %v2666, 2146121005
        %v2795 = vmul.u32 %v2667, 2146121005
        %v2796 = vmul.u32 %v2668, 2146121005
        %v2797 = vmul.u32 %v2669, 2146121005
        %v2798 = vmul.u32 %v2670, 2146121005
        %v2799 = vmul.u32 %v2671, 2146121005
        %v2800 = vmul.u32 %v2672, 2146121005
        %v2801 = vmul.u32 %v2673, 2146121005
        %v2802 = vmul.u32 %v2674, 2146121005
        %v2803 = vmul.u32 %v2675, 2146121005
        %v2804 = vmul.u32 %v2676, 2146121005
        %v2805 = vmul.u32 %v2677, 2146121005
        %v2806 = vmul.u32 %v2678, 2146121005
        %v2807 = vmul.u32 %v2679, 2146121005
        %v2808 = vmul.u32 %v2680, 2146121005
        %v2809 = vmul.u32 %v2681, 2146121005
        %v2810 = vmul.u32 %v2682, 2146121005
        %v2811 = vmul.u32 %v2683, 2146121005
        %v2812 = vmul.u32 %v2684, 2146121005
        %v2813 = vmul.u32 %v2685, 2146121005
        %v2814 = vmul.u32 %v2686, 2146121005
        %v2815 = vmul.u32 %v2687, 2146121005
        %v2816 = vmul.u32 %v2688, 2146121005
        %v2817 = vmul.u32 %v2689, 2146121005
        %v2818 = vmul.u32 %v2690, 2146121005
        %v2819 = vmul.u32 %v2691, 2146121005
        %v2820 = vmul.u32 %v2692, 2146121005
        %v2821 = vmul.u32 %v2693, 2146121005
        %v2822 = vmul.u32 %v2694, 2146121005
        %v2823 = vmul.u32 %v2695, 2146121005
        %v2824 = vmul.u32 %v2696, 2146121005
        %v2825 = vmul.u32 %v2697, 2146121005
        %v2826 = vmul.u32 %v2698, 2146121005
        %v2827 = vmul.u32 %v2699, 2146121005
        %v2828 = vmul.u32 %v2700, 2146121005
        %v2829 = vmul.u32 %v2701, 2146121005
        %v2830 = vmul.u32 %v2702, 2146121005
        %v2831 = vmul.u32 %v2703, 2146121005
        %v2832 = vmul.u32 %v2704, 2146121005
        %v2833 = vmul.u32 %v2705, 2146121005
        %v2834 = vmul.u32 %v2706, 2146121005
        %v2835 = vmul.u32 %v2707, 2146121005
        %v2836 = vmul.u32 %v2708, 2146121005
        %v2837 = vmul.u32 %v2709, 2146121005
        %v2838 = vmul.u32 %v2710, 2146121005
        %v2839 = vmul.u32 %v2711, 2146121005
        %v2840 = vmul.u32 %v2712, 2146121005
        %v2841 = vmul.u32 %v2713, 2146121005
        %v2842 = vmul.u32 %v2714, 2146121005
        %v2843 = vmul.u32 %v2715, 2146121005
        %v2844 = vmul.u32 %v2716, 2146121005
        %v2845 = vmul.u32 %v2717, 2146121005
        %v2846 = vmul.u32 %v2718, 2146121005
        %v2847 = vmul.u32 %v2719, 2146121005
        %v2848 = vmul.u32 %v2720, 2146121005
        %v2849 = vmul.u32 %v2721, 2146121005
        %v2850 = vmul.u32 %v2722, 2146121005
        %v2851 = vmul.u32 %v2723, 2146121005
        %v2852 = vmul.u32 %v2724, 2146121005
        %v2853 = vmul.u32 %v2725, 2146121005
        %v2854 = vmul.u32 %v2726, 2146121005
        %v2855 = vmul.u32 %v2727, 2146121005
        %v2856 = vmul.u32 %v2728, 2146121005
        %v2857 = vmul.u32 %v2729, 2146121005
        %v2858 = vmul.u32 %v2730, 2146121005
        %v2859 = vmul.u32 %v2731, 2146121005
        %v2860 = vmul.u32 %v2732, 2146121005
        %v2861 = vmul.u32 %v2733, 2146121005
        %v2862 = vmul.u32 %v2734, 2146121005
        %v2863 = vmul.u32 %v2735, 2146121005
        %v2864 = vmul.u32 %v2736, 2146121005
        %v2865 = vmul.u32 %v2737, 2146121005
        %v2866 = vmul.u32 %v2738, 2146121005
        %v2867 = vmul.u32 %v2739, 2146121005
        %v2868 = vmul.u32 %v2740, 2146121005
        %v2869 = vmul.u32 %v2741, 2146121005
        %v2870 = vmul.u32 %v2742, 2146121005
        %v2871 = vmul.u32 %v2743, 2146121005
        %v2872 = vmul.u32 %v2744, 2146121005
        %v2873 = vmul.u32 %v2745, 2146121005
        %v2874 = vmul.u32 %v2746, 2146121005
        %v2875 = vmul.u32 %v2747, 2146121005
        %v2876 = vmul.u32 %v2748, 2146121005
        %v2877 = vmul.u32 %v2749, 2146121005
        %v2878 = vmul.u32 %v2750, 2146121005
        %v2879 = vmul.u32 %v2751, 2146121005
        %v2880 = vmul.u32 %v2752, 2146121005
        %v2881 = vmul.u32 %v2753, 2146121005
        %v2882 = vmul.u32 %v2754, 2146121005
        %v2883 = vmul.u32 %v2755, 2146121005
        %v2884 = vmul.u32 %v2756, 2146121005
        %v2885 = vshrl.u32 %v2757, 15
        %v2886 = vshrl.u32 %v2758, 15
        %v2887 = vshrl.u32 %v2759, 15
        %v2888 = vshrl.u32 %v2760, 15
        %v2889 = vshrl.u32 %v2761, 15
        %v2890 = vshrl.u32 %v2762, 15
        %v2891 = vshrl.u32 %v2763, 15
        %v2892 = vshrl.u32 %v2764, 15
        %v2893 = vshrl.u32 %v2765, 15
        %v2894 = vshrl.u32 %v2766, 15
        %v2895 = vshrl.u32 %v2767, 15
        %v2896 = vshrl.u32 %v2768, 15
        %v2897 = vshrl.u32 %v2769, 15
        %v2898 = vshrl.u32 %v2770, 15
        %v2899 = vshrl.u32 %v2771, 15
        %v2900 = vshrl.u32 %v2772, 15
        %v2901 = vshrl.u32 %v2773, 15
        %v2902 = vshrl.u32 %v2774, 15
        %v2903 = vshrl.u32 %v2775, 15
        %v2904 = vshrl.u32 %v2776, 15
        %v2905 = vshrl.u32 %v2777, 15
        %v2906 = vshrl.u32 %v2778, 15
        %v2907 = vshrl.u32 %v2779, 15
        %v2908 = vshrl.u32 %v2780, 15
        %v2909 = vshrl.u32 %v2781, 15
        %v2910 = vshrl.u32 %v2782, 15
        %v2911 = vshrl.u32 %v2783, 15
        %v2912 = vshrl.u32 %v2784, 15
        %v2913 = vshrl.u32 %v2785, 15
        %v2914 = vshrl.u32 %v2786, 15
        %v2915 = vshrl.u32 %v2787, 15
        %v2916 = vshrl.u32 %v2788, 15
        %v2917 = vshrl.u32 %v2789, 15
        %v2918 = vshrl.u32 %v2790, 15
        %v2919 = vshrl.u32 %v2791, 15
        %v2920 = vshrl.u32 %v2792, 15
        %v2921 = vshrl.u32 %v2793, 15
        %v2922 = vshrl.u32 %v2794, 15
        %v2923 = vshrl.u32 %v2795, 15
        %v2924 = vshrl.u32 %v2796, 15
        %v2925 = vshrl.u32 %v2797, 15
        %v2926 = vshrl.u32 %v2798, 15
        %v2927 = vshrl.u32 %v2799, 15
        %v2928 = vshrl.u32 %v2800, 15
        %v2929 = vshrl.u32 %v2801, 15
        %v2930 = vshrl.u32 %v2802, 15
        %v2931 = vshrl.u32 %v2803, 15
        %v2932 = vshrl.u32 %v2804, 15
        %v2933 = vshrl.u32 %v2805, 15
        %v2934 = vshrl.u32 %v2806, 15
        %v2935 = vshrl.u32 %v2807, 15
        %v2936 = vshrl.u32 %v2808, 15
        %v2937 = vshrl.u32 %v2809, 15
        %v2938 = vshrl.u32 %v2810, 15
        %v2939 = vshrl.u32 %v2811, 15
        %v2940 = vshrl.u32 %v2812, 15
        %v2941 = vshrl.u32 %v2813, 15
        %v2942 = vshrl.u32 %v2814, 15
        %v2943 = vshrl.u32 %v2815, 15
        %v2944 = vshrl.u32 %v2816, 15
        %v2945 = vshrl.u32 %v2817, 15
        %v2946 = vshrl.u32 %v2818, 15
        %v2947 = vshrl.u32 %v2819, 15
        %v2948 = vshrl.u32 %v2820, 15
        %v2949 = vshrl.u32 %v2821, 15
        %v2950 = vshrl.u32 %v2822, 15
        %v2951 = vshrl.u32 %v2823, 15
        %v2952 = vshrl.u32 %v2824, 15
        %v2953 = vshrl.u32 %v2825, 15
        %v2954 = vshrl.u32 %v2826, 15
        %v2955 = vshrl.u32 %v2827, 15
        %v2956 = vshrl.u32 %v2828, 15
        %v2957 = vshrl.u32 %v2829, 15
        %v2958 = vshrl.u32 %v2830, 15
        %v2959 = vshrl.u32 %v2831, 15
        %v2960 = vshrl.u32 %v2832, 15
        %v2961 = vshrl.u32 %v2833, 15
        %v2962 = vshrl.u32 %v2834, 15
        %v2963 = vshrl.u32 %v2835, 15
        %v2964 = vshrl.u32 %v2836, 15
        %v2965 = vshrl.u32 %v2837, 15
        %v2966 = vshrl.u32 %v2838, 15
        %v2967 = vshrl.u32 %v2839, 15
        %v2968 = vshrl.u32 %v2840, 15
        %v2969 = vshrl.u32 %v2841, 15
        %v2970 = vshrl.u32 %v2842, 15
        %v2971 = vshrl.u32 %v2843, 15
        %v2972 = vshrl.u32 %v2844, 15
        %v2973 = vshrl.u32 %v2845, 15
        %v2974 = vshrl.u32 %v2846, 15
        %v2975 = vshrl.u32 %v2847, 15
        %v2976 = vshrl.u32 %v2848, 15
        %v2977 = vshrl.u32 %v2849, 15
        %v2978 = vshrl.u32 %v2850, 15
        %v2979 = vshrl.u32 %v2851, 15
        %v2980 = vshrl.u32 %v2852, 15
        %v2981 = vshrl.u32 %v2853, 15
        %v2982 = vshrl.u32 %v2854, 15
        %v2983 = vshrl.u32 %v2855, 15
        %v2984 = vshrl.u32 %v2856, 15
        %v2985 = vshrl.u32 %v2857, 15
        %v2986 = vshrl.u32 %v2858, 15
        %v2987 = vshrl.u32 %v2859, 15
        %v2988 = vshrl.u32 %v2860, 15
        %v2989 = vshrl.u32 %v2861, 15
        %v2990 = vshrl.u32 %v2862, 15
        %v2991 = vshrl.u32 %v2863, 15
        %v2992 = vshrl.u32 %v2864, 15
        %v2993 = vshrl.u32 %v2865, 15
        %v2994 = vshrl.u32 %v2866, 15
        %v2995 = vshrl.u32 %v2867, 15
        %v2996 = vshrl.u32 %v2868, 15
        %v2997 = vshrl.u32 %v2869, 15
        %v2998 = vshrl.u32 %v2870, 15
        %v2999 = vshrl.u32 %v2871, 15
        %v3000 = vshrl.u32 %v2872, 15
        %v3001 = vshrl.u32 %v2873, 15
        %v3002 = vshrl.u32 %v2874, 15
        %v3003 = vshrl.u32 %v2875, 15
        %v3004 = vshrl.u32 %v2876, 15
        %v3005 = vshrl.u32 %v2877, 15
        %v3006 = vshrl.u32 %v2878, 15
        %v3007 = vshrl.u32 %v2879, 15
        %v3008 = vshrl.u32 %v2880, 15
        %v3009 = vshrl.u32 %v2881, 15
        %v3010 = vshrl.u32 %v2882, 15
        %v3011 = vshrl.u32 %v2883, 15
        %v3012 = vshrl.u32 %v2884, 15
        %v3013 = vxor.u32 %v2757, %v2885
        %v3014 = vxor.u32 %v2758, %v2886
        %v3015 = vxor.u32 %v2759, %v2887
        %v3016 = vxor.u32 %v2760, %v2888
        %v3017 = vxor.u32 %v2761, %v2889
        %v3018 = vxor.u32 %v2762, %v2890
        %v3019 = vxor.u32 %v2763, %v2891
        %v3020 = vxor.u32 %v2764, %v2892
        %v3021 = vxor.u32 %v2765, %v2893
        %v3022 = vxor.u32 %v2766, %v2894
        %v3023 = vxor.u32 %v2767, %v2895
        %v3024 = vxor.u32 %v2768, %v2896
        %v3025 = vxor.u32 %v2769, %v2897
        %v3026 = vxor.u32 %v2770, %v2898
        %v3027 = vxor.u32 %v2771, %v2899
        %v3028 = vxor.u32 %v2772, %v2900
        %v3029 = vxor.u32 %v2773, %v2901
        %v3030 = vxor.u32 %v2774, %v2902
        %v3031 = vxor.u32 %v2775, %v2903
        %v3032 = vxor.u32 %v2776, %v2904
        %v3033 = vxor.u32 %v2777, %v2905
        %v3034 = vxor.u32 %v2778, %v2906
        %v3035 = vxor.u32 %v2779, %v2907
        %v3036 = vxor.u32 %v2780, %v2908
        %v3037 = vxor.u32 %v2781, %v2909
        %v3038 = vxor.u32 %v2782, %v2910
        %v3039 = vxor.u32 %v2783, %v2911
        %v3040 = vxor.u32 %v2784, %v2912
        %v3041 = vxor.u32 %v2785, %v2913
        %v3042 = vxor.u32 %v2786, %v2914
        %v3043 = vxor.u32 %v2787, %v2915
        %v3044 = vxor.u32 %v2788, %v2916
        %v3045 = vxor.u32 %v2789, %v2917
        %v3046 = vxor.u32 %v2790, %v2918
        %v3047 = vxor.u32 %v2791, %v2919
        %v3048 = vxor.u32 %v2792, %v2920
        %v3049 = vxor.u32 %v2793, %v2921
        %v3050 = vxor.u32 %v2794, %v2922
        %v3051 = vxor.u32 %v2795, %v2923
        %v3052 = vxor.u32 %v2796, %v2924
        %v3053 = vxor.u32 %v2797, %v2925
        %v3054 = vxor.u32 %v2798, %v2926
        %v3055 = vxor.u32 %v2799, %v2927
        %v3056 = vxor.u32 %v2800, %v2928
        %v3057 = vxor.u32 %v2801, %v2929
        %v3058 = vxor.u32 %v2802, %v2930
        %v3059 = vxor.u32 %v2803, %v2931
        %v3060 = vxor.u32 %v2804, %v2932
        %v3061 = vxor.u32 %v2805, %v2933
        %v3062 = vxor.u32 %v2806, %v2934
        %v3063 = vxor.u32 %v2807, %v2935
        %v3064 = vxor.u32 %v2808, %v2936
        %v3065 = vxor.u32 %v2809, %v2937
        %v3066 = vxor.u32 %v2810, %v2938
        %v3067 = vxor.u32 %v2811, %v2939
        %v3068 = vxor.u32 %v2812, %v2940
        %v3069 = vxor.u32 %v2813, %v2941
        %v3070 = vxor.u32 %v2814, %v2942
        %v3071 = vxor.u32 %v2815, %v2943
        %v3072 = vxor.u32 %v2816, %v2944
        %v3073 = vxor.u32 %v2817, %v2945
        %v3074 = vxor.u32 %v2818, %v2946
        %v3075 = vxor.u32 %v2819, %v2947
        %v3076 = vxor.u32 %v2820, %v2948
        %v3077 = vxor.u32 %v2821, %v2949
        %v3078 = vxor.u32 %v2822, %v2950
        %v3079 = vxor.u32 %v2823, %v2951
        %v3080 = vxor.u32 %v2824, %v2952
        %v3081 = vxor.u32 %v2825, %v2953
        %v3082 = vxor.u32 %v2826, %v2954
        %v3083 = vxor.u32 %v2827, %v2955
        %v3084 = vxor.u32 %v2828, %v2956
        %v3085 = vxor.u32 %v2829, %v2957
        %v3086 = vxor.u32 %v2830, %v2958
        %v3087 = vxor.u32 %v2831, %v2959
        %v3088 = vxor.u32 %v2832, %v2960
        %v3089 = vxor.u32 %v2833, %v2961
        %v3090 = vxor.u32 %v2834, %v2962
        %v3091 = vxor.u32 %v2835, %v2963
        %v3092 = vxor.u32 %v2836, %v2964
        %v3093 = vxor.u32 %v2837, %v2965
        %v3094 = vxor.u32 %v2838, %v2966
        %v3095 = vxor.u32 %v2839, %v2967
        %v3096 = vxor.u32 %v2840, %v2968
        %v3097 = vxor.u32 %v2841, %v2969
        %v3098 = vxor.u32 %v2842, %v2970
        %v3099 = vxor.u32 %v2843, %v2971
        %v3100 = vxor.u32 %v2844, %v2972
        %v3101 = vxor.u32 %v2845, %v2973
        %v3102 = vxor.u32 %v2846, %v2974
        %v3103 = vxor.u32 %v2847, %v2975
        %v3104 = vxor.u32 %v2848, %v2976
        %v3105 = vxor.u32 %v2849, %v2977
        %v3106 = vxor.u32 %v2850, %v2978
        %v3107 = vxor.u32 %v2851, %v2979
        %v3108 = vxor.u32 %v2852, %v2980
        %v3109 = vxor.u32 %v2853, %v2981
        %v3110 = vxor.u32 %v2854, %v2982
        %v3111 = vxor.u32 %v2855, %v2983
        %v3112 = vxor.u32 %v2856, %v2984
        %v3113 = vxor.u32 %v2857, %v2985
        %v3114 = vxor.u32 %v2858, %v2986
        %v3115 = vxor.u32 %v2859, %v2987
        %v3116 = vxor.u32 %v2860, %v2988
        %v3117 = vxor.u32 %v2861, %v2989
        %v3118 = vxor.u32 %v2862, %v2990
        %v3119 = vxor.u32 %v2863, %v2991
        %v3120 = vxor.u32 %v2864, %v2992
        %v3121 = vxor.u32 %v2865, %v2993
        %v3122 = vxor.u32 %v2866, %v2994
        %v3123 = vxor.u32 %v2867, %v2995
        %v3124 = vxor.u32 %v2868, %v2996
        %v3125 = vxor.u32 %v2869, %v2997
        %v3126 = vxor.u32 %v2870, %v2998
        %v3127 = vxor.u32 %v2871, %v2999
        %v3128 = vxor.u32 %v2872, %v3000
        %v3129 = vxor.u32 %v2873, %v3001
        %v3130 = vxor.u32 %v2874, %v3002
        %v3131 = vxor.u32 %v2875, %v3003
        %v3132 = vxor.u32 %v2876, %v3004
        %v3133 = vxor.u32 %v2877, %v3005
        %v3134 = vxor.u32 %v2878, %v3006
        %v3135 = vxor.u32 %v2879, %v3007
        %v3136 = vxor.u32 %v2880, %v3008
        %v3137 = vxor.u32 %v2881, %v3009
        %v3138 = vxor.u32 %v2882, %v3010
        %v3139 = vxor.u32 %v2883, %v3011
        %v3140 = vxor.u32 %v2884, %v3012
        %v3141 = vmul.u32 %v3013, 2221713035
        %v3142 = vmul.u32 %v3014, 2221713035
        %v3143 = vmul.u32 %v3015, 2221713035
        %v3144 = vmul.u32 %v3016, 2221713035
        %v3145 = vmul.u32 %v3017, 2221713035
        %v3146 = vmul.u32 %v3018, 2221713035
        %v3147 = vmul.u32 %v3019, 2221713035
        %v3148 = vmul.u32 %v3020, 2221713035
        %v3149 = vmul.u32 %v3021, 2221713035
        %v3150 = vmul.u32 %v3022, 2221713035
        %v3151 = vmul.u32 %v3023, 2221713035
        %v3152 = vmul.u32 %v3024, 2221713035
        %v3153 = vmul.u32 %v3025, 2221713035
        %v3154 = vmul.u32 %v3026, 2221713035
        %v3155 = vmul.u32 %v3027, 2221713035
        %v3156 = vmul.u32 %v3028, 2221713035
        %v3157 = vmul.u32 %v3029, 2221713035
        %v3158 = vmul.u32 %v3030, 2221713035
        %v3159 = vmul.u32 %v3031, 2221713035
        %v3160 = vmul.u32 %v3032, 2221713035
        %v3161 = vmul.u32 %v3033, 2221713035
        %v3162 = vmul.u32 %v3034, 2221713035
        %v3163 = vmul.u32 %v3035, 2221713035
        %v3164 = vmul.u32 %v3036, 2221713035
        %v3165 = vmul.u32 %v3037, 2221713035
        %v3166 = vmul.u32 %v3038, 2221713035
        %v3167 = vmul.u32 %v3039, 2221713035
        %v3168 = vmul.u32 %v3040, 2221713035
        %v3169 = vmul.u32 %v3041, 2221713035
        %v3170 = vmul.u32 %v3042, 2221713035
        %v3171 = vmul.u32 %v3043, 2221713035
        %v3172 = vmul.u32 %v3044, 2221713035
        %v3173 = vmul.u32 %v3045, 2221713035
        %v3174 = vmul.u32 %v3046, 2221713035
        %v3175 = vmul.u32 %v3047, 2221713035
        %v3176 = vmul.u32 %v3048, 2221713035
        %v3177 = vmul.u32 %v3049, 2221713035
        %v3178 = vmul.u32 %v3050, 2221713035
        %v3179 = vmul.u32 %v3051, 2221713035
        %v3180 = vmul.u32 %v3052, 2221713035
        %v3181 = vmul.u32 %v3053, 2221713035
        %v3182 = vmul.u32 %v3054, 2221713035
        %v3183 = vmul.u32 %v3055, 2221713035
        %v3184 = vmul.u32 %v3056, 2221713035
        %v3185 = vmul.u32 %v3057, 2221713035
        %v3186 = vmul.u32 %v3058, 2221713035
        %v3187 = vmul.u32 %v3059, 2221713035
        %v3188 = vmul.u32 %v3060, 2221713035
        %v3189 = vmul.u32 %v3061, 2221713035
        %v3190 = vmul.u32 %v3062, 2221713035
        %v3191 = vmul.u32 %v3063, 2221713035
        %v3192 = vmul.u32 %v3064, 2221713035
        %v3193 = vmul.u32 %v3065, 2221713035
        %v3194 = vmul.u32 %v3066, 2221713035
        %v3195 = vmul.u32 %v3067, 2221713035
        %v3196 = vmul.u32 %v3068, 2221713035
        %v3197 = vmul.u32 %v3069, 2221713035
        %v3198 = vmul.u32 %v3070, 2221713035
        %v3199 = vmul.u32 %v3071, 2221713035
        %v3200 = vmul.u32 %v3072, 2221713035
        %v3201 = vmul.u32 %v3073, 2221713035
        %v3202 = vmul.u32 %v3074, 2221713035
        %v3203 = vmul.u32 %v3075, 2221713035
        %v3204 = vmul.u32 %v3076, 2221713035
        %v3205 = vmul.u32 %v3077, 2221713035
        %v3206 = vmul.u32 %v3078, 2221713035
        %v3207 = vmul.u32 %v3079, 2221713035
        %v3208 = vmul.u32 %v3080, 2221713035
        %v3209 = vmul.u32 %v3081, 2221713035
        %v3210 = vmul.u32 %v3082, 2221713035
        %v3211 = vmul.u32 %v3083, 2221713035
        %v3212 = vmul.u32 %v3084, 2221713035
        %v3213 = vmul.u32 %v3085, 2221713035
        %v3214 = vmul.u32 %v3086, 2221713035
        %v3215 = vmul.u32 %v3087, 2221713035
        %v3216 = vmul.u32 %v3088, 2221713035
        %v3217 = vmul.u32 %v3089, 2221713035
        %v3218 = vmul.u32 %v3090, 2221713035
        %v3219 = vmul.u32 %v3091, 2221713035
        %v3220 = vmul.u32 %v3092, 2221713035
        %v3221 = vmul.u32 %v3093, 2221713035
        %v3222 = vmul.u32 %v3094, 2221713035
        %v3223 = vmul.u32 %v3095, 2221713035
        %v3224 = vmul.u32 %v3096, 2221713035
        %v3225 = vmul.u32 %v3097, 2221713035
        %v3226 = vmul.u32 %v3098, 2221713035
        %v3227 = vmul.u32 %v3099, 2221713035
        %v3228 = vmul.u32 %v3100, 2221713035
        %v3229 = vmul.u32 %v3101, 2221713035
        %v3230 = vmul.u32 %v3102, 2221713035
        %v3231 = vmul.u32 %v3103, 2221713035
        %v3232 = vmul.u32 %v3104, 2221713035
        %v3233 = vmul.u32 %v3105, 2221713035
        %v3234 = vmul.u32 %v3106, 2221713035
        %v3235 = vmul.u32 %v3107, 2221713035
        %v3236 = vmul.u32 %v3108, 2221713035
        %v3237 = vmul.u32 %v3109, 2221713035
        %v3238 = vmul.u32 %v3110, 2221713035
        %v3239 = vmul.u32 %v3111, 2221713035
        %v3240 = vmul.u32 %v3112, 2221713035
        %v3241 = vmul.u32 %v3113, 2221713035
        %v3242 = vmul.u32 %v3114, 2221713035
        %v3243 = vmul.u32 %v3115, 2221713035
        %v3244 = vmul.u32 %v3116, 2221713035
        %v3245 = vmul.u32 %v3117, 2221713035
        %v3246 = vmul.u32 %v3118, 2221713035
        %v3247 = vmul.u32 %v3119, 2221713035
        %v3248 = vmul.u32 %v3120, 2221713035
        %v3249 = vmul.u32 %v3121, 2221713035
        %v3250 = vmul.u32 %v3122, 2221713035
        %v3251 = vmul.u32 %v3123, 2221713035
        %v3252 = vmul.u32 %v3124, 2221713035
        %v3253 = vmul.u32 %v3125, 2221713035
        %v3254 = vmul.u32 %v3126, 2221713035
        %v3255 = vmul.u32 %v3127, 2221713035
        %v3256 = vmul.u32 %v3128, 2221713035
        %v3257 = vmul.u32 %v3129, 2221713035
        %v3258 = vmul.u32 %v3130, 2221713035
        %v3259 = vmul.u32 %v3131, 2221713035
        %v3260 = vmul.u32 %v3132, 2221713035
        %v3261 = vmul.u32 %v3133, 2221713035
        %v3262 = vmul.u32 %v3134, 2221713035
        %v3263 = vmul.u32 %v3135, 2221713035
        %v3264 = vmul.u32 %v3136, 2221713035
        %v3265 = vmul.u32 %v3137, 2221713035
        %v3266 = vmul.u32 %v3138, 2221713035
        %v3267 = vmul.u32 %v3139, 2221713035
        %v3268 = vmul.u32 %v3140, 2221713035
        %v3269 = vshrl.u32 %v3141, 16
        %v3270 = vshrl.u32 %v3142, 16
        %v3271 = vshrl.u32 %v3143, 16
        %v3272 = vshrl.u32 %v3144, 16
        %v3273 = vshrl.u32 %v3145, 16
        %v3274 = vshrl.u32 %v3146, 16
        %v3275 = vshrl.u32 %v3147, 16
        %v3276 = vshrl.u32 %v3148, 16
        %v3277 = vshrl.u32 %v3149, 16
        %v3278 = vshrl.u32 %v3150, 16
        %v3279 = vshrl.u32 %v3151, 16
        %v3280 = vshrl.u32 %v3152, 16
        %v3281 = vshrl.u32 %v3153, 16
        %v3282 = vshrl.u32 %v3154, 16
        %v3283 = vshrl.u32 %v3155, 16
        %v3284 = vshrl.u32 %v3156, 16
        %v3285 = vshrl.u32 %v3157, 16
        %v3286 = vshrl.u32 %v3158, 16
        %v3287 = vshrl.u32 %v3159, 16
        %v3288 = vshrl.u32 %v3160, 16
        %v3289 = vshrl.u32 %v3161, 16
        %v3290 = vshrl.u32 %v3162, 16
        %v3291 = vshrl.u32 %v3163, 16
        %v3292 = vshrl.u32 %v3164, 16
        %v3293 = vshrl.u32 %v3165, 16
        %v3294 = vshrl.u32 %v3166, 16
        %v3295 = vshrl.u32 %v3167, 16
        %v3296 = vshrl.u32 %v3168, 16
        %v3297 = vshrl.u32 %v3169, 16
        %v3298 = vshrl.u32 %v3170, 16
        %v3299 = vshrl.u32 %v3171, 16
        %v3300 = vshrl.u32 %v3172, 16
        %v3301 = vshrl.u32 %v3173, 16
        %v3302 = vshrl.u32 %v3174, 16
        %v3303 = vshrl.u32 %v3175, 16
        %v3304 = vshrl.u32 %v3176, 16
        %v3305 = vshrl.u32 %v3177, 16
        %v3306 = vshrl.u32 %v3178, 16
        %v3307 = vshrl.u32 %v3179, 16
        %v3308 = vshrl.u32 %v3180, 16
        %v3309 = vshrl.u32 %v3181, 16
        %v3310 = vshrl.u32 %v3182, 16
        %v3311 = vshrl.u32 %v3183, 16
        %v3312 = vshrl.u32 %v3184, 16
        %v3313 = vshrl.u32 %v3185, 16
        %v3314 = vshrl.u32 %v3186, 16
        %v3315 = vshrl.u32 %v3187, 16
        %v3316 = vshrl.u32 %v3188, 16
        %v3317 = vshrl.u32 %v3189, 16
        %v3318 = vshrl.u32 %v3190, 16
        %v3319 = vshrl.u32 %v3191, 16
        %v3320 = vshrl.u32 %v3192, 16
        %v3321 = vshrl.u32 %v3193, 16
        %v3322 = vshrl.u32 %v3194, 16
        %v3323 = vshrl.u32 %v3195, 16
        %v3324 = vshrl.u32 %v3196, 16
        %v3325 = vshrl.u32 %v3197, 16
        %v3326 = vshrl.u32 %v3198, 16
        %v3327 = vshrl.u32 %v3199, 16
        %v3328 = vshrl.u32 %v3200, 16
        %v3329 = vshrl.u32 %v3201, 16
        %v3330 = vshrl.u32 %v3202, 16
        %v3331 = vshrl.u32 %v3203, 16
        %v3332 = vshrl.u32 %v3204, 16
        %v3333 = vshrl.u32 %v3205, 16
        %v3334 = vshrl.u32 %v3206, 16
        %v3335 = vshrl.u32 %v3207, 16
        %v3336 = vshrl.u32 %v3208, 16
        %v3337 = vshrl.u32 %v3209, 16
        %v3338 = vshrl.u32 %v3210, 16
        %v3339 = vshrl.u32 %v3211, 16
        %v3340 = vshrl.u32 %v3212, 16
        %v3341 = vshrl.u32 %v3213, 16
        %v3342 = vshrl.u32 %v3214, 16
        %v3343 = vshrl.u32 %v3215, 16
        %v3344 = vshrl.u32 %v3216, 16
        %v3345 = vshrl.u32 %v3217, 16
        %v3346 = vshrl.u32 %v3218, 16
        %v3347 = vshrl.u32 %v3219, 16
        %v3348 = vshrl.u32 %v3220, 16
        %v3349 = vshrl.u32 %v3221, 16
        %v3350 = vshrl.u32 %v3222, 16
        %v3351 = vshrl.u32 %v3223, 16
        %v3352 = vshrl.u32 %v3224, 16
        %v3353 = vshrl.u32 %v3225, 16
        %v3354 = vshrl.u32 %v3226, 16
        %v3355 = vshrl.u32 %v3227, 16
        %v3356 = vshrl.u32 %v3228, 16
        %v3357 = vshrl.u32 %v3229, 16
        %v3358 = vshrl.u32 %v3230, 16
        %v3359 = vshrl.u32 %v3231, 16
        %v3360 = vshrl.u32 %v3232, 16
        %v3361 = vshrl.u32 %v3233, 16
        %v3362 = vshrl.u32 %v3234, 16
        %v3363 = vshrl.u32 %v3235, 16
        %v3364 = vshrl.u32 %v3236, 16
        %v3365 = vshrl.u32 %v3237, 16
        %v3366 = vshrl.u32 %v3238, 16
        %v3367 = vshrl.u32 %v3239, 16
        %v3368 = vshrl.u32 %v3240, 16
        %v3369 = vshrl.u32 %v3241, 16
        %v3370 = vshrl.u32 %v3242, 16
        %v3371 = vshrl.u32 %v3243, 16
        %v3372 = vshrl.u32 %v3244, 16
        %v3373 = vshrl.u32 %v3245, 16
        %v3374 = vshrl.u32 %v3246, 16
        %v3375 = vshrl.u32 %v3247, 16
        %v3376 = vshrl.u32 %v3248, 16
        %v3377 = vshrl.u32 %v3249, 16
        %v3378 = vshrl.u32 %v3250, 16
        %v3379 = vshrl.u32 %v3251, 16
        %v3380 = vshrl.u32 %v3252, 16
        %v3381 = vshrl.u32 %v3253, 16
        %v3382 = vshrl.u32 %v3254, 16
        %v3383 = vshrl.u32 %v3255, 16
        %v3384 = vshrl.u32 %v3256, 16
        %v3385 = vshrl.u32 %v3257, 16
        %v3386 = vshrl.u32 %v3258, 16
        %v3387 = vshrl.u32 %v3259, 16
        %v3388 = vshrl.u32 %v3260, 16
        %v3389 = vshrl.u32 %v3261, 16
        %v3390 = vshrl.u32 %v3262, 16
        %v3391 = vshrl.u32 %v3263, 16
        %v3392 = vshrl.u32 %v3264, 16
        %v3393 = vshrl.u32 %v3265, 16
        %v3394 = vshrl.u32 %v3266, 16
        %v3395 = vshrl.u32 %v3267, 16
        %v3396 = vshrl.u32 %v3268, 16
        %v3397 = vxor.u32 %v3141, %v3269
        %v3398 = vxor.u32 %v3142, %v3270
        %v3399 = vxor.u32 %v3143, %v3271
        %v3400 = vxor.u32 %v3144, %v3272
        %v3401 = vxor.u32 %v3145, %v3273
        %v3402 = vxor.u32 %v3146, %v3274
        %v3403 = vxor.u32 %v3147, %v3275
        %v3404 = vxor.u32 %v3148, %v3276
        %v3405 = vxor.u32 %v3149, %v3277
        %v3406 = vxor.u32 %v3150, %v3278
        %v3407 = vxor.u32 %v3151, %v3279
        %v3408 = vxor.u32 %v3152, %v3280
        %v3409 = vxor.u32 %v3153, %v3281
        %v3410 = vxor.u32 %v3154, %v3282
        %v3411 = vxor.u32 %v3155, %v3283
        %v3412 = vxor.u32 %v3156, %v3284
        %v3413 = vxor.u32 %v3157, %v3285
        %v3414 = vxor.u32 %v3158, %v3286
        %v3415 = vxor.u32 %v3159, %v3287
        %v3416 = vxor.u32 %v3160, %v3288
        %v3417 = vxor.u32 %v3161, %v3289
        %v3418 = vxor.u32 %v3162, %v3290
        %v3419 = vxor.u32 %v3163, %v3291
        %v3420 = vxor.u32 %v3164, %v3292
        %v3421 = vxor.u32 %v3165, %v3293
        %v3422 = vxor.u32 %v3166, %v3294
        %v3423 = vxor.u32 %v3167, %v3295
        %v3424 = vxor.u32 %v3168, %v3296
        %v3425 = vxor.u32 %v3169, %v3297
        %v3426 = vxor.u32 %v3170, %v3298
        %v3427 = vxor.u32 %v3171, %v3299
        %v3428 = vxor.u32 %v3172, %v3300
        %v3429 = vxor.u32 %v3173, %v3301
        %v3430 = vxor.u32 %v3174, %v3302
        %v3431 = vxor.u32 %v3175, %v3303
        %v3432 = vxor.u32 %v3176, %v3304
        %v3433 = vxor.u32 %v3177, %v3305
        %v3434 = vxor.u32 %v3178, %v3306
        %v3435 = vxor.u32 %v3179, %v3307
        %v3436 = vxor.u32 %v3180, %v3308
        %v3437 = vxor.u32 %v3181, %v3309
        %v3438 = vxor.u32 %v3182, %v3310
        %v3439 = vxor.u32 %v3183, %v3311
        %v3440 = vxor.u32 %v3184, %v3312
        %v3441 = vxor.u32 %v3185, %v3313
        %v3442 = vxor.u32 %v3186, %v3314
        %v3443 = vxor.u32 %v3187, %v3315
        %v3444 = vxor.u32 %v3188, %v3316
        %v3445 = vxor.u32 %v3189, %v3317
        %v3446 = vxor.u32 %v3190, %v3318
        %v3447 = vxor.u32 %v3191, %v3319
        %v3448 = vxor.u32 %v3192, %v3320
        %v3449 = vxor.u32 %v3193, %v3321
        %v3450 = vxor.u32 %v3194, %v3322
        %v3451 = vxor.u32 %v3195, %v3323
        %v3452 = vxor.u32 %v3196, %v3324
        %v3453 = vxor.u32 %v3197, %v3325
        %v3454 = vxor.u32 %v3198, %v3326
        %v3455 = vxor.u32 %v3199, %v3327
        %v3456 = vxor.u32 %v3200, %v3328
        %v3457 = vxor.u32 %v3201, %v3329
        %v3458 = vxor.u32 %v3202, %v3330
        %v3459 = vxor.u32 %v3203, %v3331
        %v3460 = vxor.u32 %v3204, %v3332
        %v3461 = vxor.u32 %v3205, %v3333
        %v3462 = vxor.u32 %v3206, %v3334
        %v3463 = vxor.u32 %v3207, %v3335
        %v3464 = vxor.u32 %v3208, %v3336
        %v3465 = vxor.u32 %v3209, %v3337
        %v3466 = vxor.u32 %v3210, %v3338
        %v3467 = vxor.u32 %v3211, %v3339
        %v3468 = vxor.u32 %v3212, %v3340
        %v3469 = vxor.u32 %v3213, %v3341
        %v3470 = vxor.u32 %v3214, %v3342
        %v3471 = vxor.u32 %v3215, %v3343
        %v3472 = vxor.u32 %v3216, %v3344
        %v3473 = vxor.u32 %v3217, %v3345
        %v3474 = vxor.u32 %v3218, %v3346
        %v3475 = vxor.u32 %v3219, %v3347
        %v3476 = vxor.u32 %v3220, %v3348
        %v3477 = vxor.u32 %v3221, %v3349
        %v3478 = vxor.u32 %v3222, %v3350
        %v3479 = vxor.u32 %v3223, %v3351
        %v3480 = vxor.u32 %v3224, %v3352
        %v3481 = vxor.u32 %v3225, %v3353
        %v3482 = vxor.u32 %v3226, %v3354
        %v3483 = vxor.u32 %v3227, %v3355
        %v3484 = vxor.u32 %v3228, %v3356
        %v3485 = vxor.u32 %v3229, %v3357
        %v3486 = vxor.u32 %v3230, %v3358
        %v3487 = vxor.u32 %v3231, %v3359
        %v3488 = vxor.u32 %v3232, %v3360
        %v3489 = vxor.u32 %v3233, %v3361
        %v3490 = vxor.u32 %v3234, %v3362
        %v3491 = vxor.u32 %v3235, %v3363
        %v3492 = vxor.u32 %v3236, %v3364
        %v3493 = vxor.u32 %v3237, %v3365
        %v3494 = vxor.u32 %v3238, %v3366
        %v3495 = vxor.u32 %v3239, %v3367
        %v3496 = vxor.u32 %v3240, %v3368
        %v3497 = vxor.u32 %v3241, %v3369
        %v3498 = vxor.u32 %v3242, %v3370
        %v3499 = vxor.u32 %v3243, %v3371
        %v3500 = vxor.u32 %v3244, %v3372
        %v3501 = vxor.u32 %v3245, %v3373
        %v3502 = vxor.u32 %v3246, %v3374
        %v3503 = vxor.u32 %v3247, %v3375
        %v3504 = vxor.u32 %v3248, %v3376
        %v3505 = vxor.u32 %v3249, %v3377
        %v3506 = vxor.u32 %v3250, %v3378
        %v3507 = vxor.u32 %v3251, %v3379
        %v3508 = vxor.u32 %v3252, %v3380
        %v3509 = vxor.u32 %v3253, %v3381
        %v3510 = vxor.u32 %v3254, %v3382
        %v3511 = vxor.u32 %v3255, %v3383
        %v3512 = vxor.u32 %v3256, %v3384
        %v3513 = vxor.u32 %v3257, %v3385
        %v3514 = vxor.u32 %v3258, %v3386
        %v3515 = vxor.u32 %v3259, %v3387
        %v3516 = vxor.u32 %v3260, %v3388
        %v3517 = vxor.u32 %v3261, %v3389
        %v3518 = vxor.u32 %v3262, %v3390
        %v3519 = vxor.u32 %v3263, %v3391
        %v3520 = vxor.u32 %v3264, %v3392
        %v3521 = vxor.u32 %v3265, %v3393
        %v3522 = vxor.u32 %v3266, %v3394
        %v3523 = vxor.u32 %v3267, %v3395
        %v3524 = vxor.u32 %v3268, %v3396
        %v3525 = vshrl.u32 %v3397, 8
        %v3526 = vshrl.u32 %v3398, 8
        %v3527 = vshrl.u32 %v3399, 8
        %v3528 = vshrl.u32 %v3400, 8
        %v3529 = vshrl.u32 %v3401, 8
        %v3530 = vshrl.u32 %v3402, 8
        %v3531 = vshrl.u32 %v3403, 8
        %v3532 = vshrl.u32 %v3404, 8
        %v3533 = vshrl.u32 %v3405, 8
        %v3534 = vshrl.u32 %v3406, 8
        %v3535 = vshrl.u32 %v3407, 8
        %v3536 = vshrl.u32 %v3408, 8
        %v3537 = vshrl.u32 %v3409, 8
        %v3538 = vshrl.u32 %v3410, 8
        %v3539 = vshrl.u32 %v3411, 8
        %v3540 = vshrl.u32 %v3412, 8
        %v3541 = vshrl.u32 %v3413, 8
        %v3542 = vshrl.u32 %v3414, 8
        %v3543 = vshrl.u32 %v3415, 8
        %v3544 = vshrl.u32 %v3416, 8
        %v3545 = vshrl.u32 %v3417, 8
        %v3546 = vshrl.u32 %v3418, 8
        %v3547 = vshrl.u32 %v3419, 8
        %v3548 = vshrl.u32 %v3420, 8
        %v3549 = vshrl.u32 %v3421, 8
        %v3550 = vshrl.u32 %v3422, 8
        %v3551 = vshrl.u32 %v3423, 8
        %v3552 = vshrl.u32 %v3424, 8
        %v3553 = vshrl.u32 %v3425, 8
        %v3554 = vshrl.u32 %v3426, 8
        %v3555 = vshrl.u32 %v3427, 8
        %v3556 = vshrl.u32 %v3428, 8
        %v3557 = vshrl.u32 %v3429, 8
        %v3558 = vshrl.u32 %v3430, 8
        %v3559 = vshrl.u32 %v3431, 8
        %v3560 = vshrl.u32 %v3432, 8
        %v3561 = vshrl.u32 %v3433, 8
        %v3562 = vshrl.u32 %v3434, 8
        %v3563 = vshrl.u32 %v3435, 8
        %v3564 = vshrl.u32 %v3436, 8
        %v3565 = vshrl.u32 %v3437, 8
        %v3566 = vshrl.u32 %v3438, 8
        %v3567 = vshrl.u32 %v3439, 8
        %v3568 = vshrl.u32 %v3440, 8
        %v3569 = vshrl.u32 %v3441, 8
        %v3570 = vshrl.u32 %v3442, 8
        %v3571 = vshrl.u32 %v3443, 8
        %v3572 = vshrl.u32 %v3444, 8
        %v3573 = vshrl.u32 %v3445, 8
        %v3574 = vshrl.u32 %v3446, 8
        %v3575 = vshrl.u32 %v3447, 8
        %v3576 = vshrl.u32 %v3448, 8
        %v3577 = vshrl.u32 %v3449, 8
        %v3578 = vshrl.u32 %v3450, 8
        %v3579 = vshrl.u32 %v3451, 8
        %v3580 = vshrl.u32 %v3452, 8
        %v3581 = vshrl.u32 %v3453, 8
        %v3582 = vshrl.u32 %v3454, 8
        %v3583 = vshrl.u32 %v3455, 8
        %v3584 = vshrl.u32 %v3456, 8
        %v3585 = vshrl.u32 %v3457, 8
        %v3586 = vshrl.u32 %v3458, 8
        %v3587 = vshrl.u32 %v3459, 8
        %v3588 = vshrl.u32 %v3460, 8
        %v3589 = vshrl.u32 %v3461, 8
        %v3590 = vshrl.u32 %v3462, 8
        %v3591 = vshrl.u32 %v3463, 8
        %v3592 = vshrl.u32 %v3464, 8
        %v3593 = vshrl.u32 %v3465, 8
        %v3594 = vshrl.u32 %v3466, 8
        %v3595 = vshrl.u32 %v3467, 8
        %v3596 = vshrl.u32 %v3468, 8
        %v3597 = vshrl.u32 %v3469, 8
        %v3598 = vshrl.u32 %v3470, 8
        %v3599 = vshrl.u32 %v3471, 8
        %v3600 = vshrl.u32 %v3472, 8
        %v3601 = vshrl.u32 %v3473, 8
        %v3602 = vshrl.u32 %v3474, 8
        %v3603 = vshrl.u32 %v3475, 8
        %v3604 = vshrl.u32 %v3476, 8
        %v3605 = vshrl.u32 %v3477, 8
        %v3606 = vshrl.u32 %v3478, 8
        %v3607 = vshrl.u32 %v3479, 8
        %v3608 = vshrl.u32 %v3480, 8
        %v3609 = vshrl.u32 %v3481, 8
        %v3610 = vshrl.u32 %v3482, 8
        %v3611 = vshrl.u32 %v3483, 8
        %v3612 = vshrl.u32 %v3484, 8
        %v3613 = vshrl.u32 %v3485, 8
        %v3614 = vshrl.u32 %v3486, 8
        %v3615 = vshrl.u32 %v3487, 8
        %v3616 = vshrl.u32 %v3488, 8
        %v3617 = vshrl.u32 %v3489, 8
        %v3618 = vshrl.u32 %v3490, 8
        %v3619 = vshrl.u32 %v3491, 8
        %v3620 = vshrl.u32 %v3492, 8
        %v3621 = vshrl.u32 %v3493, 8
        %v3622 = vshrl.u32 %v3494, 8
        %v3623 = vshrl.u32 %v3495, 8
        %v3624 = vshrl.u32 %v3496, 8
        %v3625 = vshrl.u32 %v3497, 8
        %v3626 = vshrl.u32 %v3498, 8
        %v3627 = vshrl.u32 %v3499, 8
        %v3628 = vshrl.u32 %v3500, 8
        %v3629 = vshrl.u32 %v3501, 8
        %v3630 = vshrl.u32 %v3502, 8
        %v3631 = vshrl.u32 %v3503, 8
        %v3632 = vshrl.u32 %v3504, 8
        %v3633 = vshrl.u32 %v3505, 8
        %v3634 = vshrl.u32 %v3506, 8
        %v3635 = vshrl.u32 %v3507, 8
        %v3636 = vshrl.u32 %v3508, 8
        %v3637 = vshrl.u32 %v3509, 8
        %v3638 = vshrl.u32 %v3510, 8
        %v3639 = vshrl.u32 %v3511, 8
        %v3640 = vshrl.u32 %v3512, 8
        %v3641 = vshrl.u32 %v3513, 8
        %v3642 = vshrl.u32 %v3514, 8
        %v3643 = vshrl.u32 %v3515, 8
        %v3644 = vshrl.u32 %v3516, 8
        %v3645 = vshrl.u32 %v3517, 8
        %v3646 = vshrl.u32 %v3518, 8
        %v3647 = vshrl.u32 %v3519, 8
        %v3648 = vshrl.u32 %v3520, 8
        %v3649 = vshrl.u32 %v3521, 8
        %v3650 = vshrl.u32 %v3522, 8
        %v3651 = vshrl.u32 %v3523, 8
        %v3652 = vshrl.u32 %v3524, 8
        %vm3653 = vcmp.ge.s32.totalorder %v3525, 1677722
        %vm3654 = vcmp.ge.s32.totalorder %v3526, 1677722
        %vm3655 = vcmp.ge.s32.totalorder %v3527, 1677722
        %vm3656 = vcmp.ge.s32.totalorder %v3528, 1677722
        %vm3657 = vcmp.ge.s32.totalorder %v3529, 1677722
        %vm3658 = vcmp.ge.s32.totalorder %v3530, 1677722
        %vm3659 = vcmp.ge.s32.totalorder %v3531, 1677722
        %vm3660 = vcmp.ge.s32.totalorder %v3532, 1677722
        %vm3661 = vcmp.ge.s32.totalorder %v3533, 1677722
        %vm3662 = vcmp.ge.s32.totalorder %v3534, 1677722
        %vm3663 = vcmp.ge.s32.totalorder %v3535, 1677722
        %vm3664 = vcmp.ge.s32.totalorder %v3536, 1677722
        %vm3665 = vcmp.ge.s32.totalorder %v3537, 1677722
        %vm3666 = vcmp.ge.s32.totalorder %v3538, 1677722
        %vm3667 = vcmp.ge.s32.totalorder %v3539, 1677722
        %vm3668 = vcmp.ge.s32.totalorder %v3540, 1677722
        %vm3669 = vcmp.ge.s32.totalorder %v3541, 1677722
        %vm3670 = vcmp.ge.s32.totalorder %v3542, 1677722
        %vm3671 = vcmp.ge.s32.totalorder %v3543, 1677722
        %vm3672 = vcmp.ge.s32.totalorder %v3544, 1677722
        %vm3673 = vcmp.ge.s32.totalorder %v3545, 1677722
        %vm3674 = vcmp.ge.s32.totalorder %v3546, 1677722
        %vm3675 = vcmp.ge.s32.totalorder %v3547, 1677722
        %vm3676 = vcmp.ge.s32.totalorder %v3548, 1677722
        %vm3677 = vcmp.ge.s32.totalorder %v3549, 1677722
        %vm3678 = vcmp.ge.s32.totalorder %v3550, 1677722
        %vm3679 = vcmp.ge.s32.totalorder %v3551, 1677722
        %vm3680 = vcmp.ge.s32.totalorder %v3552, 1677722
        %vm3681 = vcmp.ge.s32.totalorder %v3553, 1677722
        %vm3682 = vcmp.ge.s32.totalorder %v3554, 1677722
        %vm3683 = vcmp.ge.s32.totalorder %v3555, 1677722
        %vm3684 = vcmp.ge.s32.totalorder %v3556, 1677722
        %vm3685 = vcmp.ge.s32.totalorder %v3557, 1677722
        %vm3686 = vcmp.ge.s32.totalorder %v3558, 1677722
        %vm3687 = vcmp.ge.s32.totalorder %v3559, 1677722
        %vm3688 = vcmp.ge.s32.totalorder %v3560, 1677722
        %vm3689 = vcmp.ge.s32.totalorder %v3561, 1677722
        %vm3690 = vcmp.ge.s32.totalorder %v3562, 1677722
        %vm3691 = vcmp.ge.s32.totalorder %v3563, 1677722
        %vm3692 = vcmp.ge.s32.totalorder %v3564, 1677722
        %vm3693 = vcmp.ge.s32.totalorder %v3565, 1677722
        %vm3694 = vcmp.ge.s32.totalorder %v3566, 1677722
        %vm3695 = vcmp.ge.s32.totalorder %v3567, 1677722
        %vm3696 = vcmp.ge.s32.totalorder %v3568, 1677722
        %vm3697 = vcmp.ge.s32.totalorder %v3569, 1677722
        %vm3698 = vcmp.ge.s32.totalorder %v3570, 1677722
        %vm3699 = vcmp.ge.s32.totalorder %v3571, 1677722
        %vm3700 = vcmp.ge.s32.totalorder %v3572, 1677722
        %vm3701 = vcmp.ge.s32.totalorder %v3573, 1677722
        %vm3702 = vcmp.ge.s32.totalorder %v3574, 1677722
        %vm3703 = vcmp.ge.s32.totalorder %v3575, 1677722
        %vm3704 = vcmp.ge.s32.totalorder %v3576, 1677722
        %vm3705 = vcmp.ge.s32.totalorder %v3577, 1677722
        %vm3706 = vcmp.ge.s32.totalorder %v3578, 1677722
        %vm3707 = vcmp.ge.s32.totalorder %v3579, 1677722
        %vm3708 = vcmp.ge.s32.totalorder %v3580, 1677722
        %vm3709 = vcmp.ge.s32.totalorder %v3581, 1677722
        %vm3710 = vcmp.ge.s32.totalorder %v3582, 1677722
        %vm3711 = vcmp.ge.s32.totalorder %v3583, 1677722
        %vm3712 = vcmp.ge.s32.totalorder %v3584, 1677722
        %vm3713 = vcmp.ge.s32.totalorder %v3585, 1677722
        %vm3714 = vcmp.ge.s32.totalorder %v3586, 1677722
        %vm3715 = vcmp.ge.s32.totalorder %v3587, 1677722
        %vm3716 = vcmp.ge.s32.totalorder %v3588, 1677722
        %vm3717 = vcmp.ge.s32.totalorder %v3589, 1677722
        %vm3718 = vcmp.ge.s32.totalorder %v3590, 1677722
        %vm3719 = vcmp.ge.s32.totalorder %v3591, 1677722
        %vm3720 = vcmp.ge.s32.totalorder %v3592, 1677722
        %vm3721 = vcmp.ge.s32.totalorder %v3593, 1677722
        %vm3722 = vcmp.ge.s32.totalorder %v3594, 1677722
        %vm3723 = vcmp.ge.s32.totalorder %v3595, 1677722
        %vm3724 = vcmp.ge.s32.totalorder %v3596, 1677722
        %vm3725 = vcmp.ge.s32.totalorder %v3597, 1677722
        %vm3726 = vcmp.ge.s32.totalorder %v3598, 1677722
        %vm3727 = vcmp.ge.s32.totalorder %v3599, 1677722
        %vm3728 = vcmp.ge.s32.totalorder %v3600, 1677722
        %vm3729 = vcmp.ge.s32.totalorder %v3601, 1677722
        %vm3730 = vcmp.ge.s32.totalorder %v3602, 1677722
        %vm3731 = vcmp.ge.s32.totalorder %v3603, 1677722
        %vm3732 = vcmp.ge.s32.totalorder %v3604, 1677722
        %vm3733 = vcmp.ge.s32.totalorder %v3605, 1677722
        %vm3734 = vcmp.ge.s32.totalorder %v3606, 1677722
        %vm3735 = vcmp.ge.s32.totalorder %v3607, 1677722
        %vm3736 = vcmp.ge.s32.totalorder %v3608, 1677722
        %vm3737 = vcmp.ge.s32.totalorder %v3609, 1677722
        %vm3738 = vcmp.ge.s32.totalorder %v3610, 1677722
        %vm3739 = vcmp.ge.s32.totalorder %v3611, 1677722
        %vm3740 = vcmp.ge.s32.totalorder %v3612, 1677722
        %vm3741 = vcmp.ge.s32.totalorder %v3613, 1677722
        %vm3742 = vcmp.ge.s32.totalorder %v3614, 1677722
        %vm3743 = vcmp.ge.s32.totalorder %v3615, 1677722
        %vm3744 = vcmp.ge.s32.totalorder %v3616, 1677722
        %vm3745 = vcmp.ge.s32.totalorder %v3617, 1677722
        %vm3746 = vcmp.ge.s32.totalorder %v3618, 1677722
        %vm3747 = vcmp.ge.s32.totalorder %v3619, 1677722
        %vm3748 = vcmp.ge.s32.totalorder %v3620, 1677722
        %vm3749 = vcmp.ge.s32.totalorder %v3621, 1677722
        %vm3750 = vcmp.ge.s32.totalorder %v3622, 1677722
        %vm3751 = vcmp.ge.s32.totalorder %v3623, 1677722
        %vm3752 = vcmp.ge.s32.totalorder %v3624, 1677722
        %vm3753 = vcmp.ge.s32.totalorder %v3625, 1677722
        %vm3754 = vcmp.ge.s32.totalorder %v3626, 1677722
        %vm3755 = vcmp.ge.s32.totalorder %v3627, 1677722
        %vm3756 = vcmp.ge.s32.totalorder %v3628, 1677722
        %vm3757 = vcmp.ge.s32.totalorder %v3629, 1677722
        %vm3758 = vcmp.ge.s32.totalorder %v3630, 1677722
        %vm3759 = vcmp.ge.s32.totalorder %v3631, 1677722
        %vm3760 = vcmp.ge.s32.totalorder %v3632, 1677722
        %vm3761 = vcmp.ge.s32.totalorder %v3633, 1677722
        %vm3762 = vcmp.ge.s32.totalorder %v3634, 1677722
        %vm3763 = vcmp.ge.s32.totalorder %v3635, 1677722
        %vm3764 = vcmp.ge.s32.totalorder %v3636, 1677722
        %vm3765 = vcmp.ge.s32.totalorder %v3637, 1677722
        %vm3766 = vcmp.ge.s32.totalorder %v3638, 1677722
        %vm3767 = vcmp.ge.s32.totalorder %v3639, 1677722
        %vm3768 = vcmp.ge.s32.totalorder %v3640, 1677722
        %vm3769 = vcmp.ge.s32.totalorder %v3641, 1677722
        %vm3770 = vcmp.ge.s32.totalorder %v3642, 1677722
        %vm3771 = vcmp.ge.s32.totalorder %v3643, 1677722
        %vm3772 = vcmp.ge.s32.totalorder %v3644, 1677722
        %vm3773 = vcmp.ge.s32.totalorder %v3645, 1677722
        %vm3774 = vcmp.ge.s32.totalorder %v3646, 1677722
        %vm3775 = vcmp.ge.s32.totalorder %v3647, 1677722
        %vm3776 = vcmp.ge.s32.totalorder %v3648, 1677722
        %vm3777 = vcmp.ge.s32.totalorder %v3649, 1677722
        %vm3778 = vcmp.ge.s32.totalorder %v3650, 1677722
        %vm3779 = vcmp.ge.s32.totalorder %v3651, 1677722
        %vm3780 = vcmp.ge.s32.totalorder %v3652, 1677722
        %v3781 = vsel %vm3653, %v1975, 0.0
        %v3782 = vsel %vm3654, %v1976, 0.0
        %v3783 = vsel %vm3655, %v1977, 0.0
        %v3784 = vsel %vm3656, %v1978, 0.0
        %v3785 = vsel %vm3657, %v1979, 0.0
        %v3786 = vsel %vm3658, %v1980, 0.0
        %v3787 = vsel %vm3659, %v1981, 0.0
        %v3788 = vsel %vm3660, %v1982, 0.0
        %v3789 = vsel %vm3661, %v1983, 0.0
        %v3790 = vsel %vm3662, %v1984, 0.0
        %v3791 = vsel %vm3663, %v1985, 0.0
        %v3792 = vsel %vm3664, %v1986, 0.0
        %v3793 = vsel %vm3665, %v1987, 0.0
        %v3794 = vsel %vm3666, %v1988, 0.0
        %v3795 = vsel %vm3667, %v1989, 0.0
        %v3796 = vsel %vm3668, %v1990, 0.0
        %v3797 = vsel %vm3669, %v1991, 0.0
        %v3798 = vsel %vm3670, %v1992, 0.0
        %v3799 = vsel %vm3671, %v1993, 0.0
        %v3800 = vsel %vm3672, %v1994, 0.0
        %v3801 = vsel %vm3673, %v1995, 0.0
        %v3802 = vsel %vm3674, %v1996, 0.0
        %v3803 = vsel %vm3675, %v1997, 0.0
        %v3804 = vsel %vm3676, %v1998, 0.0
        %v3805 = vsel %vm3677, %v1999, 0.0
        %v3806 = vsel %vm3678, %v2000, 0.0
        %v3807 = vsel %vm3679, %v2001, 0.0
        %v3808 = vsel %vm3680, %v2002, 0.0
        %v3809 = vsel %vm3681, %v2003, 0.0
        %v3810 = vsel %vm3682, %v2004, 0.0
        %v3811 = vsel %vm3683, %v2005, 0.0
        %v3812 = vsel %vm3684, %v2006, 0.0
        %v3813 = vsel %vm3685, %v2007, 0.0
        %v3814 = vsel %vm3686, %v2008, 0.0
        %v3815 = vsel %vm3687, %v2009, 0.0
        %v3816 = vsel %vm3688, %v2010, 0.0
        %v3817 = vsel %vm3689, %v2011, 0.0
        %v3818 = vsel %vm3690, %v2012, 0.0
        %v3819 = vsel %vm3691, %v2013, 0.0
        %v3820 = vsel %vm3692, %v2014, 0.0
        %v3821 = vsel %vm3693, %v2015, 0.0
        %v3822 = vsel %vm3694, %v2016, 0.0
        %v3823 = vsel %vm3695, %v2017, 0.0
        %v3824 = vsel %vm3696, %v2018, 0.0
        %v3825 = vsel %vm3697, %v2019, 0.0
        %v3826 = vsel %vm3698, %v2020, 0.0
        %v3827 = vsel %vm3699, %v2021, 0.0
        %v3828 = vsel %vm3700, %v2022, 0.0
        %v3829 = vsel %vm3701, %v2023, 0.0
        %v3830 = vsel %vm3702, %v2024, 0.0
        %v3831 = vsel %vm3703, %v2025, 0.0
        %v3832 = vsel %vm3704, %v2026, 0.0
        %v3833 = vsel %vm3705, %v2027, 0.0
        %v3834 = vsel %vm3706, %v2028, 0.0
        %v3835 = vsel %vm3707, %v2029, 0.0
        %v3836 = vsel %vm3708, %v2030, 0.0
        %v3837 = vsel %vm3709, %v2031, 0.0
        %v3838 = vsel %vm3710, %v2032, 0.0
        %v3839 = vsel %vm3711, %v2033, 0.0
        %v3840 = vsel %vm3712, %v2034, 0.0
        %v3841 = vsel %vm3713, %v2035, 0.0
        %v3842 = vsel %vm3714, %v2036, 0.0
        %v3843 = vsel %vm3715, %v2037, 0.0
        %v3844 = vsel %vm3716, %v2038, 0.0
        %v3845 = vsel %vm3717, %v2039, 0.0
        %v3846 = vsel %vm3718, %v2040, 0.0
        %v3847 = vsel %vm3719, %v2041, 0.0
        %v3848 = vsel %vm3720, %v2042, 0.0
        %v3849 = vsel %vm3721, %v2043, 0.0
        %v3850 = vsel %vm3722, %v2044, 0.0
        %v3851 = vsel %vm3723, %v2045, 0.0
        %v3852 = vsel %vm3724, %v2046, 0.0
        %v3853 = vsel %vm3725, %v2047, 0.0
        %v3854 = vsel %vm3726, %v2048, 0.0
        %v3855 = vsel %vm3727, %v2049, 0.0
        %v3856 = vsel %vm3728, %v2050, 0.0
        %v3857 = vsel %vm3729, %v2051, 0.0
        %v3858 = vsel %vm3730, %v2052, 0.0
        %v3859 = vsel %vm3731, %v2053, 0.0
        %v3860 = vsel %vm3732, %v2054, 0.0
        %v3861 = vsel %vm3733, %v2055, 0.0
        %v3862 = vsel %vm3734, %v2056, 0.0
        %v3863 = vsel %vm3735, %v2057, 0.0
        %v3864 = vsel %vm3736, %v2058, 0.0
        %v3865 = vsel %vm3737, %v2059, 0.0
        %v3866 = vsel %vm3738, %v2060, 0.0
        %v3867 = vsel %vm3739, %v2061, 0.0
        %v3868 = vsel %vm3740, %v2062, 0.0
        %v3869 = vsel %vm3741, %v2063, 0.0
        %v3870 = vsel %vm3742, %v2064, 0.0
        %v3871 = vsel %vm3743, %v2065, 0.0
        %v3872 = vsel %vm3744, %v2066, 0.0
        %v3873 = vsel %vm3745, %v2067, 0.0
        %v3874 = vsel %vm3746, %v2068, 0.0
        %v3875 = vsel %vm3747, %v2069, 0.0
        %v3876 = vsel %vm3748, %v2070, 0.0
        %v3877 = vsel %vm3749, %v2071, 0.0
        %v3878 = vsel %vm3750, %v2072, 0.0
        %v3879 = vsel %vm3751, %v2073, 0.0
        %v3880 = vsel %vm3752, %v2074, 0.0
        %v3881 = vsel %vm3753, %v2075, 0.0
        %v3882 = vsel %vm3754, %v2076, 0.0
        %v3883 = vsel %vm3755, %v2077, 0.0
        %v3884 = vsel %vm3756, %v2078, 0.0
        %v3885 = vsel %vm3757, %v2079, 0.0
        %v3886 = vsel %vm3758, %v2080, 0.0
        %v3887 = vsel %vm3759, %v2081, 0.0
        %v3888 = vsel %vm3760, %v2082, 0.0
        %v3889 = vsel %vm3761, %v2083, 0.0
        %v3890 = vsel %vm3762, %v2084, 0.0
        %v3891 = vsel %vm3763, %v2085, 0.0
        %v3892 = vsel %vm3764, %v2086, 0.0
        %v3893 = vsel %vm3765, %v2087, 0.0
        %v3894 = vsel %vm3766, %v2088, 0.0
        %v3895 = vsel %vm3767, %v2089, 0.0
        %v3896 = vsel %vm3768, %v2090, 0.0
        %v3897 = vsel %vm3769, %v2091, 0.0
        %v3898 = vsel %vm3770, %v2092, 0.0
        %v3899 = vsel %vm3771, %v2093, 0.0
        %v3900 = vsel %vm3772, %v2094, 0.0
        %v3901 = vsel %vm3773, %v2095, 0.0
        %v3902 = vsel %vm3774, %v2096, 0.0
        %v3903 = vsel %vm3775, %v2097, 0.0
        %v3904 = vsel %vm3776, %v2098, 0.0
        %v3905 = vsel %vm3777, %v2099, 0.0
        %v3906 = vsel %vm3778, %v2100, 0.0
        %v3907 = vsel %vm3779, %v2101, 0.0
        %v3908 = vsel %vm3780, %v2102, 0.0
        %v3909 = vmul.f32 %v3781, 1.1111112
        %v3910 = vmul.f32 %v3782, 1.1111112
        %v3911 = vmul.f32 %v3783, 1.1111112
        %v3912 = vmul.f32 %v3784, 1.1111112
        %v3913 = vmul.f32 %v3785, 1.1111112
        %v3914 = vmul.f32 %v3786, 1.1111112
        %v3915 = vmul.f32 %v3787, 1.1111112
        %v3916 = vmul.f32 %v3788, 1.1111112
        %v3917 = vmul.f32 %v3789, 1.1111112
        %v3918 = vmul.f32 %v3790, 1.1111112
        %v3919 = vmul.f32 %v3791, 1.1111112
        %v3920 = vmul.f32 %v3792, 1.1111112
        %v3921 = vmul.f32 %v3793, 1.1111112
        %v3922 = vmul.f32 %v3794, 1.1111112
        %v3923 = vmul.f32 %v3795, 1.1111112
        %v3924 = vmul.f32 %v3796, 1.1111112
        %v3925 = vmul.f32 %v3797, 1.1111112
        %v3926 = vmul.f32 %v3798, 1.1111112
        %v3927 = vmul.f32 %v3799, 1.1111112
        %v3928 = vmul.f32 %v3800, 1.1111112
        %v3929 = vmul.f32 %v3801, 1.1111112
        %v3930 = vmul.f32 %v3802, 1.1111112
        %v3931 = vmul.f32 %v3803, 1.1111112
        %v3932 = vmul.f32 %v3804, 1.1111112
        %v3933 = vmul.f32 %v3805, 1.1111112
        %v3934 = vmul.f32 %v3806, 1.1111112
        %v3935 = vmul.f32 %v3807, 1.1111112
        %v3936 = vmul.f32 %v3808, 1.1111112
        %v3937 = vmul.f32 %v3809, 1.1111112
        %v3938 = vmul.f32 %v3810, 1.1111112
        %v3939 = vmul.f32 %v3811, 1.1111112
        %v3940 = vmul.f32 %v3812, 1.1111112
        %v3941 = vmul.f32 %v3813, 1.1111112
        %v3942 = vmul.f32 %v3814, 1.1111112
        %v3943 = vmul.f32 %v3815, 1.1111112
        %v3944 = vmul.f32 %v3816, 1.1111112
        %v3945 = vmul.f32 %v3817, 1.1111112
        %v3946 = vmul.f32 %v3818, 1.1111112
        %v3947 = vmul.f32 %v3819, 1.1111112
        %v3948 = vmul.f32 %v3820, 1.1111112
        %v3949 = vmul.f32 %v3821, 1.1111112
        %v3950 = vmul.f32 %v3822, 1.1111112
        %v3951 = vmul.f32 %v3823, 1.1111112
        %v3952 = vmul.f32 %v3824, 1.1111112
        %v3953 = vmul.f32 %v3825, 1.1111112
        %v3954 = vmul.f32 %v3826, 1.1111112
        %v3955 = vmul.f32 %v3827, 1.1111112
        %v3956 = vmul.f32 %v3828, 1.1111112
        %v3957 = vmul.f32 %v3829, 1.1111112
        %v3958 = vmul.f32 %v3830, 1.1111112
        %v3959 = vmul.f32 %v3831, 1.1111112
        %v3960 = vmul.f32 %v3832, 1.1111112
        %v3961 = vmul.f32 %v3833, 1.1111112
        %v3962 = vmul.f32 %v3834, 1.1111112
        %v3963 = vmul.f32 %v3835, 1.1111112
        %v3964 = vmul.f32 %v3836, 1.1111112
        %v3965 = vmul.f32 %v3837, 1.1111112
        %v3966 = vmul.f32 %v3838, 1.1111112
        %v3967 = vmul.f32 %v3839, 1.1111112
        %v3968 = vmul.f32 %v3840, 1.1111112
        %v3969 = vmul.f32 %v3841, 1.1111112
        %v3970 = vmul.f32 %v3842, 1.1111112
        %v3971 = vmul.f32 %v3843, 1.1111112
        %v3972 = vmul.f32 %v3844, 1.1111112
        %v3973 = vmul.f32 %v3845, 1.1111112
        %v3974 = vmul.f32 %v3846, 1.1111112
        %v3975 = vmul.f32 %v3847, 1.1111112
        %v3976 = vmul.f32 %v3848, 1.1111112
        %v3977 = vmul.f32 %v3849, 1.1111112
        %v3978 = vmul.f32 %v3850, 1.1111112
        %v3979 = vmul.f32 %v3851, 1.1111112
        %v3980 = vmul.f32 %v3852, 1.1111112
        %v3981 = vmul.f32 %v3853, 1.1111112
        %v3982 = vmul.f32 %v3854, 1.1111112
        %v3983 = vmul.f32 %v3855, 1.1111112
        %v3984 = vmul.f32 %v3856, 1.1111112
        %v3985 = vmul.f32 %v3857, 1.1111112
        %v3986 = vmul.f32 %v3858, 1.1111112
        %v3987 = vmul.f32 %v3859, 1.1111112
        %v3988 = vmul.f32 %v3860, 1.1111112
        %v3989 = vmul.f32 %v3861, 1.1111112
        %v3990 = vmul.f32 %v3862, 1.1111112
        %v3991 = vmul.f32 %v3863, 1.1111112
        %v3992 = vmul.f32 %v3864, 1.1111112
        %v3993 = vmul.f32 %v3865, 1.1111112
        %v3994 = vmul.f32 %v3866, 1.1111112
        %v3995 = vmul.f32 %v3867, 1.1111112
        %v3996 = vmul.f32 %v3868, 1.1111112
        %v3997 = vmul.f32 %v3869, 1.1111112
        %v3998 = vmul.f32 %v3870, 1.1111112
        %v3999 = vmul.f32 %v3871, 1.1111112
        %v4000 = vmul.f32 %v3872, 1.1111112
        %v4001 = vmul.f32 %v3873, 1.1111112
        %v4002 = vmul.f32 %v3874, 1.1111112
        %v4003 = vmul.f32 %v3875, 1.1111112
        %v4004 = vmul.f32 %v3876, 1.1111112
        %v4005 = vmul.f32 %v3877, 1.1111112
        %v4006 = vmul.f32 %v3878, 1.1111112
        %v4007 = vmul.f32 %v3879, 1.1111112
        %v4008 = vmul.f32 %v3880, 1.1111112
        %v4009 = vmul.f32 %v3881, 1.1111112
        %v4010 = vmul.f32 %v3882, 1.1111112
        %v4011 = vmul.f32 %v3883, 1.1111112
        %v4012 = vmul.f32 %v3884, 1.1111112
        %v4013 = vmul.f32 %v3885, 1.1111112
        %v4014 = vmul.f32 %v3886, 1.1111112
        %v4015 = vmul.f32 %v3887, 1.1111112
        %v4016 = vmul.f32 %v3888, 1.1111112
        %v4017 = vmul.f32 %v3889, 1.1111112
        %v4018 = vmul.f32 %v3890, 1.1111112
        %v4019 = vmul.f32 %v3891, 1.1111112
        %v4020 = vmul.f32 %v3892, 1.1111112
        %v4021 = vmul.f32 %v3893, 1.1111112
        %v4022 = vmul.f32 %v3894, 1.1111112
        %v4023 = vmul.f32 %v3895, 1.1111112
        %v4024 = vmul.f32 %v3896, 1.1111112
        %v4025 = vmul.f32 %v3897, 1.1111112
        %v4026 = vmul.f32 %v3898, 1.1111112
        %v4027 = vmul.f32 %v3899, 1.1111112
        %v4028 = vmul.f32 %v3900, 1.1111112
        %v4029 = vmul.f32 %v3901, 1.1111112
        %v4030 = vmul.f32 %v3902, 1.1111112
        %v4031 = vmul.f32 %v3903, 1.1111112
        %v4032 = vmul.f32 %v3904, 1.1111112
        %v4033 = vmul.f32 %v3905, 1.1111112
        %v4034 = vmul.f32 %v3906, 1.1111112
        %v4035 = vmul.f32 %v3907, 1.1111112
        %v4036 = vmul.f32 %v3908, 1.1111112
        %v4037 = vld [vmem:[#allocation2] sm:$0xff]
        %v4038 = vld [vmem:[#allocation2 + $0x8] sm:$0xff]
        %v4039 = vld [vmem:[#allocation2 + $0x10] sm:$0xff]
        %v4040 = vld [vmem:[#allocation2 + $0x18] sm:$0xff]
        %v4041 = vld [vmem:[#allocation2 + $0x20] sm:$0xff]
        %v4042 = vld [vmem:[#allocation2 + $0x28] sm:$0xff]
        %v4043 = vld [vmem:[#allocation2 + $0x30] sm:$0xff]
        %v4044 = vld [vmem:[#allocation2 + $0x38] sm:$0xff]
        %v4045 = vld [vmem:[#allocation2 + $0x40] sm:$0xff]
        %v4046 = vld [vmem:[#allocation2 + $0x48] sm:$0xff]
        %v4047 = vld [vmem:[#allocation2 + $0x50] sm:$0xff]
        %v4048 = vld [vmem:[#allocation2 + $0x58] sm:$0xff]
        %v4049 = vld [vmem:[#allocation2 + $0x60] sm:$0xff]
        %v4050 = vld [vmem:[#allocation2 + $0x68] sm:$0xff]
        %v4051 = vld [vmem:[#allocation2 + $0x70] sm:$0xff]
        %v4052 = vld [vmem:[#allocation2 + $0x78] sm:$0xff]
        %v4053 = vld [vmem:[#allocation2 + $0x80] sm:$0xff]
        %v4054 = vld [vmem:[#allocation2 + $0x88] sm:$0xff]
        %v4055 = vld [vmem:[#allocation2 + $0x90] sm:$0xff]
        %v4056 = vld [vmem:[#allocation2 + $0x98] sm:$0xff]
        %v4057 = vld [vmem:[#allocation2 + $0xa0] sm:$0xff]
        %v4058 = vld [vmem:[#allocation2 + $0xa8] sm:$0xff]
        %v4059 = vld [vmem:[#allocation2 + $0xb0] sm:$0xff]
        %v4060 = vld [vmem:[#allocation2 + $0xb8] sm:$0xff]
        %v4061 = vld [vmem:[#allocation2 + $0xc0] sm:$0xff]
        %v4062 = vld [vmem:[#allocation2 + $0xc8] sm:$0xff]
        %v4063 = vld [vmem:[#allocation2 + $0xd0] sm:$0xff]
        %v4064 = vld [vmem:[#allocation2 + $0xd8] sm:$0xff]
        %v4065 = vld [vmem:[#allocation2 + $0xe0] sm:$0xff]
        %v4066 = vld [vmem:[#allocation2 + $0xe8] sm:$0xff]
        %v4067 = vld [vmem:[#allocation2 + $0xf0] sm:$0xff]
        %v4068 = vld [vmem:[#allocation2 + $0xf8] sm:$0xff]
        %v4069 = vld [vmem:[#allocation2 + $0x100] sm:$0xff]
        %v4070 = vld [vmem:[#allocation2 + $0x108] sm:$0xff]
        %v4071 = vld [vmem:[#allocation2 + $0x110] sm:$0xff]
        %v4072 = vld [vmem:[#allocation2 + $0x118] sm:$0xff]
        %v4073 = vld [vmem:[#allocation2 + $0x120] sm:$0xff]
        %v4074 = vld [vmem:[#allocation2 + $0x128] sm:$0xff]
        %v4075 = vld [vmem:[#allocation2 + $0x130] sm:$0xff]
        %v4076 = vld [vmem:[#allocation2 + $0x138] sm:$0xff]
        %v4077 = vld [vmem:[#allocation2 + $0x140] sm:$0xff]
        %v4078 = vld [vmem:[#allocation2 + $0x148] sm:$0xff]
        %v4079 = vld [vmem:[#allocation2 + $0x150] sm:$0xff]
        %v4080 = vld [vmem:[#allocation2 + $0x158] sm:$0xff]
        %v4081 = vld [vmem:[#allocation2 + $0x160] sm:$0xff]
        %v4082 = vld [vmem:[#allocation2 + $0x168] sm:$0xff]
        %v4083 = vld [vmem:[#allocation2 + $0x170] sm:$0xff]
        %v4084 = vld [vmem:[#allocation2 + $0x178] sm:$0xff]
        %v4085 = vld [vmem:[#allocation2 + $0x180] sm:$0xff]
        %v4086 = vld [vmem:[#allocation2 + $0x188] sm:$0xff]
        %v4087 = vld [vmem:[#allocation2 + $0x190] sm:$0xff]
        %v4088 = vld [vmem:[#allocation2 + $0x198] sm:$0xff]
        %v4089 = vld [vmem:[#allocation2 + $0x1a0] sm:$0xff]
        %v4090 = vld [vmem:[#allocation2 + $0x1a8] sm:$0xff]
        %v4091 = vld [vmem:[#allocation2 + $0x1b0] sm:$0xff]
        %v4092 = vld [vmem:[#allocation2 + $0x1b8] sm:$0xff]
        %v4093 = vld [vmem:[#allocation2 + $0x1c0] sm:$0xff]
        %v4094 = vld [vmem:[#allocation2 + $0x1c8] sm:$0xff]
        %v4095 = vld [vmem:[#allocation2 + $0x1d0] sm:$0xff]
        %v4096 = vld [vmem:[#allocation2 + $0x1d8] sm:$0xff]
        %v4097 = vld [vmem:[#allocation2 + $0x1e0] sm:$0xff]
        %v4098 = vld [vmem:[#allocation2 + $0x1e8] sm:$0xff]
        %v4099 = vld [vmem:[#allocation2 + $0x1f0] sm:$0xff]
        %v4100 = vld [vmem:[#allocation2 + $0x1f8] sm:$0xff]
        %v4101 = vpack.c.bf16 %v3911, %v3909
        %v4102 = vpack.c.bf16 %v3912, %v3910
        %v4103 = vpack.c.bf16 %v3915, %v3913
        %v4104 = vpack.c.bf16 %v3916, %v3914
        %v4105 = vpack.c.bf16 %v3919, %v3917
        %v4106 = vpack.c.bf16 %v3920, %v3918
        %v4107 = vpack.c.bf16 %v3923, %v3921
        %v4108 = vpack.c.bf16 %v3924, %v3922
        %v4109 = vpack.c.bf16 %v3927, %v3925
        %v4110 = vpack.c.bf16 %v3928, %v3926
        %v4111 = vpack.c.bf16 %v3931, %v3929
        %v4112 = vpack.c.bf16 %v3932, %v3930
        %v4113 = vpack.c.bf16 %v3935, %v3933
        %v4114 = vpack.c.bf16 %v3936, %v3934
        %v4115 = vpack.c.bf16 %v3939, %v3937
        %v4116 = vpack.c.bf16 %v3940, %v3938
        %v4117 = vpack.c.bf16 %v3943, %v3941
        %v4118 = vpack.c.bf16 %v3944, %v3942
        %v4119 = vpack.c.bf16 %v3947, %v3945
        %v4120 = vpack.c.bf16 %v3948, %v3946
        %v4121 = vpack.c.bf16 %v3951, %v3949
        %v4122 = vpack.c.bf16 %v3952, %v3950
        %v4123 = vpack.c.bf16 %v3955, %v3953
        %v4124 = vpack.c.bf16 %v3956, %v3954
        %v4125 = vpack.c.bf16 %v3959, %v3957
        %v4126 = vpack.c.bf16 %v3960, %v3958
        %v4127 = vpack.c.bf16 %v3963, %v3961
        %v4128 = vpack.c.bf16 %v3964, %v3962
        %v4129 = vpack.c.bf16 %v3967, %v3965
        %v4130 = vpack.c.bf16 %v3968, %v3966
        %v4131 = vpack.c.bf16 %v3971, %v3969
        %v4132 = vpack.c.bf16 %v3972, %v3970
        %v4133 = vpack.c.bf16 %v3975, %v3973
        %v4134 = vpack.c.bf16 %v3976, %v3974
        %v4135 = vpack.c.bf16 %v3979, %v3977
        %v4136 = vpack.c.bf16 %v3980, %v3978
        %v4137 = vpack.c.bf16 %v3983, %v3981
        %v4138 = vpack.c.bf16 %v3984, %v3982
        %v4139 = vpack.c.bf16 %v3987, %v3985
        %v4140 = vpack.c.bf16 %v3988, %v3986
        %v4141 = vpack.c.bf16 %v3991, %v3989
        %v4142 = vpack.c.bf16 %v3992, %v3990
        %v4143 = vpack.c.bf16 %v3995, %v3993
        %v4144 = vpack.c.bf16 %v3996, %v3994
        %v4145 = vpack.c.bf16 %v3999, %v3997
        %v4146 = vpack.c.bf16 %v4000, %v3998
        %v4147 = vpack.c.bf16 %v4003, %v4001
        %v4148 = vpack.c.bf16 %v4004, %v4002
        %v4149 = vpack.c.bf16 %v4007, %v4005
        %v4150 = vpack.c.bf16 %v4008, %v4006
        %v4151 = vpack.c.bf16 %v4011, %v4009
        %v4152 = vpack.c.bf16 %v4012, %v4010
        %v4153 = vpack.c.bf16 %v4015, %v4013
        %v4154 = vpack.c.bf16 %v4016, %v4014
        %v4155 = vpack.c.bf16 %v4019, %v4017
        %v4156 = vpack.c.bf16 %v4020, %v4018
        %v4157 = vpack.c.bf16 %v4023, %v4021
        %v4158 = vpack.c.bf16 %v4024, %v4022
        %v4159 = vpack.c.bf16 %v4027, %v4025
        %v4160 = vpack.c.bf16 %v4028, %v4026
        %v4161 = vpack.c.bf16 %v4031, %v4029
        %v4162 = vpack.c.bf16 %v4032, %v4030
        %v4163 = vpack.c.bf16 %v4035, %v4033
        %v4164 = vpack.c.bf16 %v4036, %v4034
        %v4165 = vld [vmem:[#allocation10] sm:$0xf]
        %v4166 = vld [vmem:[#allocation10 + $0x4] sm:$0xf]
        %v4167 = vld [vmem:[#allocation10 + $0x8] sm:$0xf]
        %v4168 = vld [vmem:[#allocation10 + $0xc] sm:$0xf]
        %v4169 = vld [vmem:[#allocation10 + $0x10] sm:$0xf]
        %v4170 = vld [vmem:[#allocation10 + $0x14] sm:$0xf]
        %v4171 = vld [vmem:[#allocation10 + $0x18] sm:$0xf]
        %v4172 = vld [vmem:[#allocation10 + $0x1c] sm:$0xf]
        %v4173 = vld [vmem:[#allocation10 + $0x20] sm:$0xf]
        %v4174 = vld [vmem:[#allocation10 + $0x24] sm:$0xf]
        %v4175 = vld [vmem:[#allocation10 + $0x28] sm:$0xf]
        %v4176 = vld [vmem:[#allocation10 + $0x2c] sm:$0xf]
        %v4177 = vld [vmem:[#allocation10 + $0x30] sm:$0xf]
        %v4178 = vld [vmem:[#allocation10 + $0x34] sm:$0xf]
        %v4179 = vld [vmem:[#allocation10 + $0x38] sm:$0xf]
        %v4180 = vld [vmem:[#allocation10 + $0x3c] sm:$0xf]
        %v4181 = vld [vmem:[#allocation10 + $0x40] sm:$0xf]
        %v4182 = vld [vmem:[#allocation10 + $0x44] sm:$0xf]
        %v4183 = vld [vmem:[#allocation10 + $0x48] sm:$0xf]
        %v4184 = vld [vmem:[#allocation10 + $0x4c] sm:$0xf]
        %v4185 = vld [vmem:[#allocation10 + $0x50] sm:$0xf]
        %v4186 = vld [vmem:[#allocation10 + $0x54] sm:$0xf]
        %v4187 = vld [vmem:[#allocation10 + $0x58] sm:$0xf]
        %v4188 = vld [vmem:[#allocation10 + $0x5c] sm:$0xf]
        %v4189 = vld [vmem:[#allocation10 + $0x60] sm:$0xf]
        %v4190 = vld [vmem:[#allocation10 + $0x64] sm:$0xf]
        %v4191 = vld [vmem:[#allocation10 + $0x68] sm:$0xf]
        %v4192 = vld [vmem:[#allocation10 + $0x6c] sm:$0xf]
        %v4193 = vld [vmem:[#allocation10 + $0x70] sm:$0xf]
        %v4194 = vld [vmem:[#allocation10 + $0x74] sm:$0xf]
        %v4195 = vld [vmem:[#allocation10 + $0x78] sm:$0xf]
        %v4196 = vld [vmem:[#allocation10 + $0x7c] sm:$0xf]
        %v4229 = vunpack.c.l.b16 %v4165
        %v4230 = vunpack.c.l.b16 %v4166
        %v4231 = vunpack.c.l.b16 %v4167
        %v4232 = vunpack.c.l.b16 %v4168
        %v4233 = vunpack.c.l.b16 %v4169
        %v4234 = vunpack.c.l.b16 %v4170
        %v4235 = vunpack.c.l.b16 %v4171
        %v4236 = vunpack.c.l.b16 %v4172
        %v4237 = vunpack.c.l.b16 %v4173
        %v4238 = vunpack.c.l.b16 %v4174
        %v4239 = vunpack.c.l.b16 %v4175
        %v4240 = vunpack.c.l.b16 %v4176
        %v4241 = vunpack.c.l.b16 %v4177
        %v4242 = vunpack.c.l.b16 %v4178
        %v4243 = vunpack.c.l.b16 %v4179
        %v4244 = vunpack.c.l.b16 %v4180
        %v4245 = vunpack.c.l.b16 %v4181
        %v4246 = vunpack.c.l.b16 %v4182
        %v4247 = vunpack.c.l.b16 %v4183
        %v4248 = vunpack.c.l.b16 %v4184
        %v4249 = vunpack.c.l.b16 %v4185
        %v4250 = vunpack.c.l.b16 %v4186
        %v4251 = vunpack.c.l.b16 %v4187
        %v4252 = vunpack.c.l.b16 %v4188
        %v4253 = vunpack.c.l.b16 %v4189
        %v4254 = vunpack.c.l.b16 %v4190
        %v4255 = vunpack.c.l.b16 %v4191
        %v4256 = vunpack.c.l.b16 %v4192
        %v4257 = vunpack.c.l.b16 %v4193
        %v4258 = vunpack.c.l.b16 %v4194
        %v4259 = vunpack.c.l.b16 %v4195
        %v4260 = vunpack.c.l.b16 %v4196
        %v4261 = vpack.c.b16 %v4230, %v4229
        %v4262 = vpack.c.b16 %v4232, %v4231
        %v4263 = vpack.c.b16 %v4234, %v4233
        %v4264 = vpack.c.b16 %v4236, %v4235
        %v4265 = vpack.c.b16 %v4238, %v4237
        %v4266 = vpack.c.b16 %v4240, %v4239
        %v4267 = vpack.c.b16 %v4242, %v4241
        %v4268 = vpack.c.b16 %v4244, %v4243
        %v4269 = vpack.c.b16 %v4246, %v4245
        %v4270 = vpack.c.b16 %v4248, %v4247
        %v4271 = vpack.c.b16 %v4250, %v4249
        %v4272 = vpack.c.b16 %v4252, %v4251
        %v4273 = vpack.c.b16 %v4254, %v4253
        %v4274 = vpack.c.b16 %v4256, %v4255
        %v4275 = vpack.c.b16 %v4258, %v4257
        %v4276 = vpack.c.b16 %v4260, %v4259
        %4293 = vmatprep.subr.bf16.mxu0 0
        %4294 = vmatpush1.bf16.msra.mxu0 %v4268
        %4295 = vmatprep.subr.bf16.mxu0 0
        %4296 = vmatpush1.bf16.msra.mxu0 %v4267
        %4297 = vmatprep.subr.bf16.mxu0 0
        %4298 = vmatpush1.bf16.msra.mxu0 %v4266
        %4299 = vmatprep.subr.bf16.mxu0 0
        %4300 = vmatpush1.bf16.msra.mxu0 %v4265
        %4301 = vmatprep.subr.bf16.mxu0 0
        %4302 = vmatpush1.bf16.msra.mxu0 %v4264
        %4303 = vmatprep.subr.bf16.mxu0 0
        %4304 = vmatpush1.bf16.msra.mxu0 %v4263
        %4305 = vmatprep.subr.bf16.mxu0 0
        %4306 = vmatpush1.bf16.msra.mxu0 %v4262
        %4307 = vmatprep.subr.bf16.mxu0 0
        %4308 = vmatpush1.bf16.msra.mxu0 %v4261
        %4309 = vmatprep.subr.bf16.mxu0 0
        %4310 = vmatpush2.bf16.msra.mxu0 %v4276
        %4311 = vmatprep.subr.bf16.mxu0 0
        %4312 = vmatpush2.bf16.msra.mxu0 %v4275
        %4313 = vmatprep.subr.bf16.mxu0 0
        %4314 = vmatpush2.bf16.msra.mxu0 %v4274
        %4315 = vmatprep.subr.bf16.mxu0 0
        %4316 = vmatpush2.bf16.msra.mxu0 %v4273
        %4317 = vmatprep.subr.bf16.mxu0 0
        %4318 = vmatpush2.bf16.msra.mxu0 %v4272
        %4319 = vmatprep.subr.bf16.mxu0 0
        %4320 = vmatpush2.bf16.msra.mxu0 %v4271
        %4321 = vmatprep.subr.bf16.mxu0 0
        %4322 = vmatpush2.bf16.msra.mxu0 %v4270
        %4323 = vmatprep.subr.bf16.mxu0 0
        %4324 = vmatpush2.bf16.msra.mxu0 %v4269
        %4325 = vmatprep.mubr.bf16.mxu0 %v4102
        %4326 = vmatmul.mubr.bf16.gmra.mxu0 %v4101
        %v4327 = vpop.f32.mrf.mxu0
        %v4328 = vadd.f32 0.0, %v4327
        %v4329 = vpop.f32.mrf.mxu0
        %v4330 = vpop.f32.mrf.mxu0
        %v4331 = vadd.f32 0.0, %v4330
        %v4332 = vpop.f32.mrf.mxu0
        %4333 = vmatprep.mubr.bf16.mxu0 %v4104
        %4334 = vmatmul.mubr.bf16.gmra.mxu0 %v4103
        %v4335 = vpop.f32.mrf.mxu0
        %v4336 = vadd.f32 0.0, %v4335
        %v4337 = vpop.f32.mrf.mxu0
        %v4338 = vpop.f32.mrf.mxu0
        %v4339 = vadd.f32 0.0, %v4338
        %v4340 = vpop.f32.mrf.mxu0
        %4341 = vmatprep.mubr.bf16.mxu0 %v4106
        %4342 = vmatmul.mubr.bf16.gmra.mxu0 %v4105
        %v4343 = vpop.f32.mrf.mxu0
        %v4344 = vadd.f32 0.0, %v4343
        %v4345 = vpop.f32.mrf.mxu0
        %v4346 = vpop.f32.mrf.mxu0
        %v4347 = vadd.f32 0.0, %v4346
        %v4348 = vpop.f32.mrf.mxu0
        %4349 = vmatprep.mubr.bf16.mxu0 %v4108
        %4350 = vmatmul.mubr.bf16.gmra.mxu0 %v4107
        %v4351 = vpop.f32.mrf.mxu0
        %v4352 = vadd.f32 0.0, %v4351
        %v4353 = vpop.f32.mrf.mxu0
        %v4354 = vpop.f32.mrf.mxu0
        %v4355 = vadd.f32 0.0, %v4354
        %v4356 = vpop.f32.mrf.mxu0
        %4357 = vmatprep.mubr.bf16.mxu0 %v4110
        %4358 = vmatmul.mubr.bf16.gmra.mxu0 %v4109
        %v4359 = vpop.f32.mrf.mxu0
        %v4360 = vadd.f32 0.0, %v4359
        %v4361 = vpop.f32.mrf.mxu0
        %v4362 = vpop.f32.mrf.mxu0
        %v4363 = vadd.f32 0.0, %v4362
        %v4364 = vpop.f32.mrf.mxu0
        %4365 = vmatprep.mubr.bf16.mxu0 %v4112
        %4366 = vmatmul.mubr.bf16.gmra.mxu0 %v4111
        %v4367 = vpop.f32.mrf.mxu0
        %v4368 = vadd.f32 0.0, %v4367
        %v4369 = vpop.f32.mrf.mxu0
        %v4370 = vpop.f32.mrf.mxu0
        %v4371 = vadd.f32 0.0, %v4370
        %v4372 = vpop.f32.mrf.mxu0
        %4373 = vmatprep.mubr.bf16.mxu0 %v4114
        %4374 = vmatmul.mubr.bf16.gmra.mxu0 %v4113
        %v4375 = vpop.f32.mrf.mxu0
        %v4376 = vadd.f32 0.0, %v4375
        %v4377 = vpop.f32.mrf.mxu0
        %v4378 = vpop.f32.mrf.mxu0
        %v4379 = vadd.f32 0.0, %v4378
        %v4380 = vpop.f32.mrf.mxu0
        %4381 = vmatprep.mubr.bf16.mxu0 %v4116
        %4382 = vmatmul.mubr.bf16.gmra.mxu0 %v4115
        %v4383 = vpop.f32.mrf.mxu0
        %v4384 = vadd.f32 0.0, %v4383
        %v4385 = vpop.f32.mrf.mxu0
        %v4386 = vpop.f32.mrf.mxu0
        %v4387 = vadd.f32 0.0, %v4386
        %v4388 = vpop.f32.mrf.mxu0
        %4389 = vmatprep.mubr.bf16.mxu0 %v4118
        %4390 = vmatmul.mubr.bf16.gmra.mxu0 %v4117
        %v4391 = vpop.f32.mrf.mxu0
        %v4392 = vadd.f32 0.0, %v4391
        %v4393 = vpop.f32.mrf.mxu0
        %v4394 = vpop.f32.mrf.mxu0
        %v4395 = vadd.f32 0.0, %v4394
        %v4396 = vpop.f32.mrf.mxu0
        %4397 = vmatprep.mubr.bf16.mxu0 %v4120
        %4398 = vmatmul.mubr.bf16.gmra.mxu0 %v4119
        %v4399 = vpop.f32.mrf.mxu0
        %v4400 = vadd.f32 0.0, %v4399
        %v4401 = vpop.f32.mrf.mxu0
        %v4402 = vpop.f32.mrf.mxu0
        %v4403 = vadd.f32 0.0, %v4402
        %v4404 = vpop.f32.mrf.mxu0
        %4405 = vmatprep.mubr.bf16.mxu0 %v4122
        %4406 = vmatmul.mubr.bf16.gmra.mxu0 %v4121
        %v4407 = vpop.f32.mrf.mxu0
        %v4408 = vadd.f32 0.0, %v4407
        %v4409 = vpop.f32.mrf.mxu0
        %v4410 = vpop.f32.mrf.mxu0
        %v4411 = vadd.f32 0.0, %v4410
        %v4412 = vpop.f32.mrf.mxu0
        %4413 = vmatprep.mubr.bf16.mxu0 %v4124
        %4414 = vmatmul.mubr.bf16.gmra.mxu0 %v4123
        %v4415 = vpop.f32.mrf.mxu0
        %v4416 = vadd.f32 0.0, %v4415
        %v4417 = vpop.f32.mrf.mxu0
        %v4418 = vpop.f32.mrf.mxu0
        %v4419 = vadd.f32 0.0, %v4418
        %v4420 = vpop.f32.mrf.mxu0
        %4421 = vmatprep.mubr.bf16.mxu0 %v4126
        %4422 = vmatmul.mubr.bf16.gmra.mxu0 %v4125
        %v4423 = vpop.f32.mrf.mxu0
        %v4424 = vadd.f32 0.0, %v4423
        %v4425 = vpop.f32.mrf.mxu0
        %v4426 = vpop.f32.mrf.mxu0
        %v4427 = vadd.f32 0.0, %v4426
        %v4428 = vpop.f32.mrf.mxu0
        %4429 = vmatprep.mubr.bf16.mxu0 %v4128
        %4430 = vmatmul.mubr.bf16.gmra.mxu0 %v4127
        %v4431 = vpop.f32.mrf.mxu0
        %v4432 = vadd.f32 0.0, %v4431
        %v4433 = vpop.f32.mrf.mxu0
        %v4434 = vpop.f32.mrf.mxu0
        %v4435 = vadd.f32 0.0, %v4434
        %v4436 = vpop.f32.mrf.mxu0
        %4437 = vmatprep.mubr.bf16.mxu0 %v4130
        %4438 = vmatmul.mubr.bf16.gmra.mxu0 %v4129
        %v4439 = vpop.f32.mrf.mxu0
        %v4440 = vadd.f32 0.0, %v4439
        %v4441 = vpop.f32.mrf.mxu0
        %v4442 = vpop.f32.mrf.mxu0
        %v4443 = vadd.f32 0.0, %v4442
        %v4444 = vpop.f32.mrf.mxu0
        %4445 = vmatprep.mubr.bf16.mxu0 %v4132
        %4446 = vmatmul.mubr.bf16.gmra.mxu0 %v4131
        %v4447 = vpop.f32.mrf.mxu0
        %v4448 = vadd.f32 0.0, %v4447
        %v4449 = vpop.f32.mrf.mxu0
        %v4450 = vpop.f32.mrf.mxu0
        %v4451 = vadd.f32 0.0, %v4450
        %v4452 = vpop.f32.mrf.mxu0
        %4453 = vmatprep.mubr.bf16.mxu0 %v4134
        %4454 = vmatmul.mubr.bf16.gmra.mxu0 %v4133
        %v4455 = vpop.f32.mrf.mxu0
        %v4456 = vadd.f32 0.0, %v4455
        %v4457 = vpop.f32.mrf.mxu0
        %v4458 = vpop.f32.mrf.mxu0
        %v4459 = vadd.f32 0.0, %v4458
        %v4460 = vpop.f32.mrf.mxu0
        %4461 = vmatprep.mubr.bf16.mxu0 %v4136
        %4462 = vmatmul.mubr.bf16.gmra.mxu0 %v4135
        %v4463 = vpop.f32.mrf.mxu0
        %v4464 = vadd.f32 0.0, %v4463
        %v4465 = vpop.f32.mrf.mxu0
        %v4466 = vpop.f32.mrf.mxu0
        %v4467 = vadd.f32 0.0, %v4466
        %v4468 = vpop.f32.mrf.mxu0
        %4469 = vmatprep.mubr.bf16.mxu0 %v4138
        %4470 = vmatmul.mubr.bf16.gmra.mxu0 %v4137
        %v4471 = vpop.f32.mrf.mxu0
        %v4472 = vadd.f32 0.0, %v4471
        %v4473 = vpop.f32.mrf.mxu0
        %v4474 = vpop.f32.mrf.mxu0
        %v4475 = vadd.f32 0.0, %v4474
        %v4476 = vpop.f32.mrf.mxu0
        %4477 = vmatprep.mubr.bf16.mxu0 %v4140
        %4478 = vmatmul.mubr.bf16.gmra.mxu0 %v4139
        %v4479 = vpop.f32.mrf.mxu0
        %v4480 = vadd.f32 0.0, %v4479
        %v4481 = vpop.f32.mrf.mxu0
        %v4482 = vpop.f32.mrf.mxu0
        %v4483 = vadd.f32 0.0, %v4482
        %v4484 = vpop.f32.mrf.mxu0
        %4485 = vmatprep.mubr.bf16.mxu0 %v4142
        %4486 = vmatmul.mubr.bf16.gmra.mxu0 %v4141
        %v4487 = vpop.f32.mrf.mxu0
        %v4488 = vadd.f32 0.0, %v4487
        %v4489 = vpop.f32.mrf.mxu0
        %v4490 = vpop.f32.mrf.mxu0
        %v4491 = vadd.f32 0.0, %v4490
        %v4492 = vpop.f32.mrf.mxu0
        %4493 = vmatprep.mubr.bf16.mxu0 %v4144
        %4494 = vmatmul.mubr.bf16.gmra.mxu0 %v4143
        %v4495 = vpop.f32.mrf.mxu0
        %v4496 = vadd.f32 0.0, %v4495
        %v4497 = vpop.f32.mrf.mxu0
        %v4498 = vpop.f32.mrf.mxu0
        %v4499 = vadd.f32 0.0, %v4498
        %v4500 = vpop.f32.mrf.mxu0
        %4501 = vmatprep.mubr.bf16.mxu0 %v4146
        %4502 = vmatmul.mubr.bf16.gmra.mxu0 %v4145
        %v4503 = vpop.f32.mrf.mxu0
        %v4504 = vadd.f32 0.0, %v4503
        %v4505 = vpop.f32.mrf.mxu0
        %v4506 = vpop.f32.mrf.mxu0
        %v4507 = vadd.f32 0.0, %v4506
        %v4508 = vpop.f32.mrf.mxu0
        %4509 = vmatprep.mubr.bf16.mxu0 %v4148
        %4510 = vmatmul.mubr.bf16.gmra.mxu0 %v4147
        %v4511 = vpop.f32.mrf.mxu0
        %v4512 = vadd.f32 0.0, %v4511
        %v4513 = vpop.f32.mrf.mxu0
        %v4514 = vpop.f32.mrf.mxu0
        %v4515 = vadd.f32 0.0, %v4514
        %v4516 = vpop.f32.mrf.mxu0
        %4517 = vmatprep.mubr.bf16.mxu0 %v4150
        %4518 = vmatmul.mubr.bf16.gmra.mxu0 %v4149
        %v4519 = vpop.f32.mrf.mxu0
        %v4520 = vadd.f32 0.0, %v4519
        %v4521 = vpop.f32.mrf.mxu0
        %v4522 = vpop.f32.mrf.mxu0
        %v4523 = vadd.f32 0.0, %v4522
        %v4524 = vpop.f32.mrf.mxu0
        %4525 = vmatprep.mubr.bf16.mxu0 %v4152
        %4526 = vmatmul.mubr.bf16.gmra.mxu0 %v4151
        %v4527 = vpop.f32.mrf.mxu0
        %v4528 = vadd.f32 0.0, %v4527
        %v4529 = vpop.f32.mrf.mxu0
        %v4530 = vpop.f32.mrf.mxu0
        %v4531 = vadd.f32 0.0, %v4530
        %v4532 = vpop.f32.mrf.mxu0
        %4533 = vmatprep.mubr.bf16.mxu0 %v4154
        %4534 = vmatmul.mubr.bf16.gmra.mxu0 %v4153
        %v4535 = vpop.f32.mrf.mxu0
        %v4536 = vadd.f32 0.0, %v4535
        %v4537 = vpop.f32.mrf.mxu0
        %v4538 = vpop.f32.mrf.mxu0
        %v4539 = vadd.f32 0.0, %v4538
        %v4540 = vpop.f32.mrf.mxu0
        %4541 = vmatprep.mubr.bf16.mxu0 %v4156
        %4542 = vmatmul.mubr.bf16.gmra.mxu0 %v4155
        %v4543 = vpop.f32.mrf.mxu0
        %v4544 = vadd.f32 0.0, %v4543
        %v4545 = vpop.f32.mrf.mxu0
        %v4546 = vpop.f32.mrf.mxu0
        %v4547 = vadd.f32 0.0, %v4546
        %v4548 = vpop.f32.mrf.mxu0
        %4549 = vmatprep.mubr.bf16.mxu0 %v4158
        %4550 = vmatmul.mubr.bf16.gmra.mxu0 %v4157
        %v4551 = vpop.f32.mrf.mxu0
        %v4552 = vadd.f32 0.0, %v4551
        %v4553 = vpop.f32.mrf.mxu0
        %v4554 = vpop.f32.mrf.mxu0
        %v4555 = vadd.f32 0.0, %v4554
        %v4556 = vpop.f32.mrf.mxu0
        %4557 = vmatprep.mubr.bf16.mxu0 %v4160
        %4558 = vmatmul.mubr.bf16.gmra.mxu0 %v4159
        %v4559 = vpop.f32.mrf.mxu0
        %v4560 = vadd.f32 0.0, %v4559
        %v4561 = vpop.f32.mrf.mxu0
        %v4562 = vpop.f32.mrf.mxu0
        %v4563 = vadd.f32 0.0, %v4562
        %v4564 = vpop.f32.mrf.mxu0
        %4565 = vmatprep.mubr.bf16.mxu0 %v4162
        %4566 = vmatmul.mubr.bf16.gmra.mxu0 %v4161
        %v4567 = vpop.f32.mrf.mxu0
        %v4568 = vadd.f32 0.0, %v4567
        %v4569 = vpop.f32.mrf.mxu0
        %v4570 = vpop.f32.mrf.mxu0
        %v4571 = vadd.f32 0.0, %v4570
        %v4572 = vpop.f32.mrf.mxu0
        %4573 = vmatprep.mubr.bf16.mxu0 %v4164
        %4574 = vmatmul.mubr.bf16.gmra.mxu0 %v4163
        %v4575 = vpop.f32.mrf.mxu0
        %v4576 = vadd.f32 0.0, %v4575
        %v4577 = vpop.f32.mrf.mxu0
        %v4578 = vpop.f32.mrf.mxu0
        %v4579 = vadd.f32 0.0, %v4578
        %v4580 = vpop.f32.mrf.mxu0
        %4581 = vdwg.mxu0
        %v4582 = vadd.f32 %v4037, %v4328
        %v4583 = vadd.f32 %v4038, %v4331
        %v4584 = vadd.f32 %v4039, %v4336
        %v4585 = vadd.f32 %v4040, %v4339
        %v4586 = vadd.f32 %v4041, %v4344
        %v4587 = vadd.f32 %v4042, %v4347
        %v4588 = vadd.f32 %v4043, %v4352
        %v4589 = vadd.f32 %v4044, %v4355
        %v4590 = vadd.f32 %v4045, %v4360
        %v4591 = vadd.f32 %v4046, %v4363
        %v4592 = vadd.f32 %v4047, %v4368
        %v4593 = vadd.f32 %v4048, %v4371
        %v4594 = vadd.f32 %v4049, %v4376
        %v4595 = vadd.f32 %v4050, %v4379
        %v4596 = vadd.f32 %v4051, %v4384
        %v4597 = vadd.f32 %v4052, %v4387
        %v4598 = vadd.f32 %v4053, %v4392
        %v4599 = vadd.f32 %v4054, %v4395
        %v4600 = vadd.f32 %v4055, %v4400
        %v4601 = vadd.f32 %v4056, %v4403
        %v4602 = vadd.f32 %v4057, %v4408
        %v4603 = vadd.f32 %v4058, %v4411
        %v4604 = vadd.f32 %v4059, %v4416
        %v4605 = vadd.f32 %v4060, %v4419
        %v4606 = vadd.f32 %v4061, %v4424
        %v4607 = vadd.f32 %v4062, %v4427
        %v4608 = vadd.f32 %v4063, %v4432
        %v4609 = vadd.f32 %v4064, %v4435
        %v4610 = vadd.f32 %v4065, %v4440
        %v4611 = vadd.f32 %v4066, %v4443
        %v4612 = vadd.f32 %v4067, %v4448
        %v4613 = vadd.f32 %v4068, %v4451
        %v4614 = vadd.f32 %v4069, %v4456
        %v4615 = vadd.f32 %v4070, %v4459
        %v4616 = vadd.f32 %v4071, %v4464
        %v4617 = vadd.f32 %v4072, %v4467
        %v4618 = vadd.f32 %v4073, %v4472
        %v4619 = vadd.f32 %v4074, %v4475
        %v4620 = vadd.f32 %v4075, %v4480
        %v4621 = vadd.f32 %v4076, %v4483
        %v4622 = vadd.f32 %v4077, %v4488
        %v4623 = vadd.f32 %v4078, %v4491
        %v4624 = vadd.f32 %v4079, %v4496
        %v4625 = vadd.f32 %v4080, %v4499
        %v4626 = vadd.f32 %v4081, %v4504
        %v4627 = vadd.f32 %v4082, %v4507
        %v4628 = vadd.f32 %v4083, %v4512
        %v4629 = vadd.f32 %v4084, %v4515
        %v4630 = vadd.f32 %v4085, %v4520
        %v4631 = vadd.f32 %v4086, %v4523
        %v4632 = vadd.f32 %v4087, %v4528
        %v4633 = vadd.f32 %v4088, %v4531
        %v4634 = vadd.f32 %v4089, %v4536
        %v4635 = vadd.f32 %v4090, %v4539
        %v4636 = vadd.f32 %v4091, %v4544
        %v4637 = vadd.f32 %v4092, %v4547
        %v4638 = vadd.f32 %v4093, %v4552
        %v4639 = vadd.f32 %v4094, %v4555
        %v4640 = vadd.f32 %v4095, %v4560
        %v4641 = vadd.f32 %v4096, %v4563
        %v4642 = vadd.f32 %v4097, %v4568
        %v4643 = vadd.f32 %v4098, %v4571
        %v4644 = vadd.f32 %v4099, %v4576
        %v4645 = vadd.f32 %v4100, %v4579
        %4646 = vst [vmem:[#allocation2] sm:$0xff] %v4582
        %4647 = vst [vmem:[#allocation2 + $0x8] sm:$0xff] %v4583
        %4648 = vst [vmem:[#allocation2 + $0x10] sm:$0xff] %v4584
        %4649 = vst [vmem:[#allocation2 + $0x18] sm:$0xff] %v4585
        %4650 = vst [vmem:[#allocation2 + $0x20] sm:$0xff] %v4586
        %4651 = vst [vmem:[#allocation2 + $0x28] sm:$0xff] %v4587
        %4652 = vst [vmem:[#allocation2 + $0x30] sm:$0xff] %v4588
        %4653 = vst [vmem:[#allocation2 + $0x38] sm:$0xff] %v4589
        %4654 = vst [vmem:[#allocation2 + $0x40] sm:$0xff] %v4590
        %4655 = vst [vmem:[#allocation2 + $0x48] sm:$0xff] %v4591
        %4656 = vst [vmem:[#allocation2 + $0x50] sm:$0xff] %v4592
        %4657 = vst [vmem:[#allocation2 + $0x58] sm:$0xff] %v4593
        %4658 = vst [vmem:[#allocation2 + $0x60] sm:$0xff] %v4594
        %4659 = vst [vmem:[#allocation2 + $0x68] sm:$0xff] %v4595
        %4660 = vst [vmem:[#allocation2 + $0x70] sm:$0xff] %v4596
        %4661 = vst [vmem:[#allocation2 + $0x78] sm:$0xff] %v4597
        %4662 = vst [vmem:[#allocation2 + $0x80] sm:$0xff] %v4598
        %4663 = vst [vmem:[#allocation2 + $0x88] sm:$0xff] %v4599
        %4664 = vst [vmem:[#allocation2 + $0x90] sm:$0xff] %v4600
        %4665 = vst [vmem:[#allocation2 + $0x98] sm:$0xff] %v4601
        %4666 = vst [vmem:[#allocation2 + $0xa0] sm:$0xff] %v4602
        %4667 = vst [vmem:[#allocation2 + $0xa8] sm:$0xff] %v4603
        %4668 = vst [vmem:[#allocation2 + $0xb0] sm:$0xff] %v4604
        %4669 = vst [vmem:[#allocation2 + $0xb8] sm:$0xff] %v4605
        %4670 = vst [vmem:[#allocation2 + $0xc0] sm:$0xff] %v4606
        %4671 = vst [vmem:[#allocation2 + $0xc8] sm:$0xff] %v4607
        %4672 = vst [vmem:[#allocation2 + $0xd0] sm:$0xff] %v4608
        %4673 = vst [vmem:[#allocation2 + $0xd8] sm:$0xff] %v4609
        %4674 = vst [vmem:[#allocation2 + $0xe0] sm:$0xff] %v4610
        %4675 = vst [vmem:[#allocation2 + $0xe8] sm:$0xff] %v4611
        %4676 = vst [vmem:[#allocation2 + $0xf0] sm:$0xff] %v4612
        %4677 = vst [vmem:[#allocation2 + $0xf8] sm:$0xff] %v4613
        %4678 = vst [vmem:[#allocation2 + $0x100] sm:$0xff] %v4614
        %4679 = vst [vmem:[#allocation2 + $0x108] sm:$0xff] %v4615
        %4680 = vst [vmem:[#allocation2 + $0x110] sm:$0xff] %v4616
        %4681 = vst [vmem:[#allocation2 + $0x118] sm:$0xff] %v4617
        %4682 = vst [vmem:[#allocation2 + $0x120] sm:$0xff] %v4618
        %4683 = vst [vmem:[#allocation2 + $0x128] sm:$0xff] %v4619
        %4684 = vst [vmem:[#allocation2 + $0x130] sm:$0xff] %v4620
        %4685 = vst [vmem:[#allocation2 + $0x138] sm:$0xff] %v4621
        %4686 = vst [vmem:[#allocation2 + $0x140] sm:$0xff] %v4622
        %4687 = vst [vmem:[#allocation2 + $0x148] sm:$0xff] %v4623
        %4688 = vst [vmem:[#allocation2 + $0x150] sm:$0xff] %v4624
        %4689 = vst [vmem:[#allocation2 + $0x158] sm:$0xff] %v4625
        %4690 = vst [vmem:[#allocation2 + $0x160] sm:$0xff] %v4626
        %4691 = vst [vmem:[#allocation2 + $0x168] sm:$0xff] %v4627
        %4692 = vst [vmem:[#allocation2 + $0x170] sm:$0xff] %v4628
        %4693 = vst [vmem:[#allocation2 + $0x178] sm:$0xff] %v4629
        %4694 = vst [vmem:[#allocation2 + $0x180] sm:$0xff] %v4630
        %4695 = vst [vmem:[#allocation2 + $0x188] sm:$0xff] %v4631
        %4696 = vst [vmem:[#allocation2 + $0x190] sm:$0xff] %v4632
        %4697 = vst [vmem:[#allocation2 + $0x198] sm:$0xff] %v4633
        %4698 = vst [vmem:[#allocation2 + $0x1a0] sm:$0xff] %v4634
        %4699 = vst [vmem:[#allocation2 + $0x1a8] sm:$0xff] %v4635
        %4700 = vst [vmem:[#allocation2 + $0x1b0] sm:$0xff] %v4636
        %4701 = vst [vmem:[#allocation2 + $0x1b8] sm:$0xff] %v4637
        %4702 = vst [vmem:[#allocation2 + $0x1c0] sm:$0xff] %v4638
        %4703 = vst [vmem:[#allocation2 + $0x1c8] sm:$0xff] %v4639
        %4704 = vst [vmem:[#allocation2 + $0x1d0] sm:$0xff] %v4640
        %4705 = vst [vmem:[#allocation2 + $0x1d8] sm:$0xff] %v4641
        %4706 = vst [vmem:[#allocation2 + $0x1e0] sm:$0xff] %v4642
        %4707 = vst [vmem:[#allocation2 + $0x1e8] sm:$0xff] %v4643
        %4708 = vst [vmem:[#allocation2 + $0x1f0] sm:$0xff] %v4644
        %4709 = vst [vmem:[#allocation2 + $0x1f8] sm:$0xff] %v4645
        // Predicated region
        $region57: #{tpu_custom_call.1} parent=39 // pred_check
          %p4710 = pneg %p326
        $region58: #{tpu_custom_call.1} parent=39 // pred_check_branch
          %4712 = sbr.rel (%p4710) target = $region60
        $region59: #{tpu_custom_call.1} parent=39 // pred_region
          %v4713 = vld [vmem:[#allocation2] sm:$0xff]
          %v4714 = vld [vmem:[#allocation2 + $0x8] sm:$0xff]
          %v4715 = vld [vmem:[#allocation2 + $0x10] sm:$0xff]
          %v4716 = vld [vmem:[#allocation2 + $0x18] sm:$0xff]
          %v4717 = vld [vmem:[#allocation2 + $0x20] sm:$0xff]
          %v4718 = vld [vmem:[#allocation2 + $0x28] sm:$0xff]
          %v4719 = vld [vmem:[#allocation2 + $0x30] sm:$0xff]
          %v4720 = vld [vmem:[#allocation2 + $0x38] sm:$0xff]
          %v4721 = vld [vmem:[#allocation2 + $0x40] sm:$0xff]
          %v4722 = vld [vmem:[#allocation2 + $0x48] sm:$0xff]
          %v4723 = vld [vmem:[#allocation2 + $0x50] sm:$0xff]
          %v4724 = vld [vmem:[#allocation2 + $0x58] sm:$0xff]
          %v4725 = vld [vmem:[#allocation2 + $0x60] sm:$0xff]
          %v4726 = vld [vmem:[#allocation2 + $0x68] sm:$0xff]
          %v4727 = vld [vmem:[#allocation2 + $0x70] sm:$0xff]
          %v4728 = vld [vmem:[#allocation2 + $0x78] sm:$0xff]
          %v4729 = vld [vmem:[#allocation2 + $0x80] sm:$0xff]
          %v4730 = vld [vmem:[#allocation2 + $0x88] sm:$0xff]
          %v4731 = vld [vmem:[#allocation2 + $0x90] sm:$0xff]
          %v4732 = vld [vmem:[#allocation2 + $0x98] sm:$0xff]
          %v4733 = vld [vmem:[#allocation2 + $0xa0] sm:$0xff]
          %v4734 = vld [vmem:[#allocation2 + $0xa8] sm:$0xff]
          %v4735 = vld [vmem:[#allocation2 + $0xb0] sm:$0xff]
          %v4736 = vld [vmem:[#allocation2 + $0xb8] sm:$0xff]
          %v4737 = vld [vmem:[#allocation2 + $0xc0] sm:$0xff]
          %v4738 = vld [vmem:[#allocation2 + $0xc8] sm:$0xff]
          %v4739 = vld [vmem:[#allocation2 + $0xd0] sm:$0xff]
          %v4740 = vld [vmem:[#allocation2 + $0xd8] sm:$0xff]
          %v4741 = vld [vmem:[#allocation2 + $0xe0] sm:$0xff]
          %v4742 = vld [vmem:[#allocation2 + $0xe8] sm:$0xff]
          %v4743 = vld [vmem:[#allocation2 + $0xf0] sm:$0xff]
          %v4744 = vld [vmem:[#allocation2 + $0xf8] sm:$0xff]
          %v4745 = vld [vmem:[#allocation2 + $0x100] sm:$0xff]
          %v4746 = vld [vmem:[#allocation2 + $0x108] sm:$0xff]
          %v4747 = vld [vmem:[#allocation2 + $0x110] sm:$0xff]
          %v4748 = vld [vmem:[#allocation2 + $0x118] sm:$0xff]
          %v4749 = vld [vmem:[#allocation2 + $0x120] sm:$0xff]
          %v4750 = vld [vmem:[#allocation2 + $0x128] sm:$0xff]
          %v4751 = vld [vmem:[#allocation2 + $0x130] sm:$0xff]
          %v4752 = vld [vmem:[#allocation2 + $0x138] sm:$0xff]
          %v4753 = vld [vmem:[#allocation2 + $0x140] sm:$0xff]
          %v4754 = vld [vmem:[#allocation2 + $0x148] sm:$0xff]
          %v4755 = vld [vmem:[#allocation2 + $0x150] sm:$0xff]
          %v4756 = vld [vmem:[#allocation2 + $0x158] sm:$0xff]
          %v4757 = vld [vmem:[#allocation2 + $0x160] sm:$0xff]
          %v4758 = vld [vmem:[#allocation2 + $0x168] sm:$0xff]
          %v4759 = vld [vmem:[#allocation2 + $0x170] sm:$0xff]
          %v4760 = vld [vmem:[#allocation2 + $0x178] sm:$0xff]
          %v4761 = vld [vmem:[#allocation2 + $0x180] sm:$0xff]
          %v4762 = vld [vmem:[#allocation2 + $0x188] sm:$0xff]
          %v4763 = vld [vmem:[#allocation2 + $0x190] sm:$0xff]
          %v4764 = vld [vmem:[#allocation2 + $0x198] sm:$0xff]
          %v4765 = vld [vmem:[#allocation2 + $0x1a0] sm:$0xff]
          %v4766 = vld [vmem:[#allocation2 + $0x1a8] sm:$0xff]
          %v4767 = vld [vmem:[#allocation2 + $0x1b0] sm:$0xff]
          %v4768 = vld [vmem:[#allocation2 + $0x1b8] sm:$0xff]
          %v4769 = vld [vmem:[#allocation2 + $0x1c0] sm:$0xff]
          %v4770 = vld [vmem:[#allocation2 + $0x1c8] sm:$0xff]
          %v4771 = vld [vmem:[#allocation2 + $0x1d0] sm:$0xff]
          %v4772 = vld [vmem:[#allocation2 + $0x1d8] sm:$0xff]
          %v4773 = vld [vmem:[#allocation2 + $0x1e0] sm:$0xff]
          %v4774 = vld [vmem:[#allocation2 + $0x1e8] sm:$0xff]
          %v4775 = vld [vmem:[#allocation2 + $0x1f0] sm:$0xff]
          %v4776 = vld [vmem:[#allocation2 + $0x1f8] sm:$0xff]
          %v4777 = vld [vmem:[%s5] sm:$0x1]
          %v4779 = vlaneseq
          %v4780 = vshrl.u32 %v4779, 7
          %v4781 = vsub.s32 0, %v4780
          %v4782 = vrot.slane %v4777, %v4781
          %v4784 = vadd.f32 %v4713, %v4782
          %v4785 = vadd.f32 %v4714, %v4782
          %v4786 = vadd.f32 %v4715, %v4782
          %v4787 = vadd.f32 %v4716, %v4782
          %v4788 = vadd.f32 %v4717, %v4782
          %v4789 = vadd.f32 %v4718, %v4782
          %v4790 = vadd.f32 %v4719, %v4782
          %v4791 = vadd.f32 %v4720, %v4782
          %v4792 = vadd.f32 %v4721, %v4782
          %v4793 = vadd.f32 %v4722, %v4782
          %v4794 = vadd.f32 %v4723, %v4782
          %v4795 = vadd.f32 %v4724, %v4782
          %v4796 = vadd.f32 %v4725, %v4782
          %v4797 = vadd.f32 %v4726, %v4782
          %v4798 = vadd.f32 %v4727, %v4782
          %v4799 = vadd.f32 %v4728, %v4782
          %v4800 = vadd.f32 %v4729, %v4782
          %v4801 = vadd.f32 %v4730, %v4782
          %v4802 = vadd.f32 %v4731, %v4782
          %v4803 = vadd.f32 %v4732, %v4782
          %v4804 = vadd.f32 %v4733, %v4782
          %v4805 = vadd.f32 %v4734, %v4782
          %v4806 = vadd.f32 %v4735, %v4782
          %v4807 = vadd.f32 %v4736, %v4782
          %v4808 = vadd.f32 %v4737, %v4782
          %v4809 = vadd.f32 %v4738, %v4782
          %v4810 = vadd.f32 %v4739, %v4782
          %v4811 = vadd.f32 %v4740, %v4782
          %v4812 = vadd.f32 %v4741, %v4782
          %v4813 = vadd.f32 %v4742, %v4782
          %v4814 = vadd.f32 %v4743, %v4782
          %v4815 = vadd.f32 %v4744, %v4782
          %v4816 = vadd.f32 %v4745, %v4782
          %v4817 = vadd.f32 %v4746, %v4782
          %v4818 = vadd.f32 %v4747, %v4782
          %v4819 = vadd.f32 %v4748, %v4782
          %v4820 = vadd.f32 %v4749, %v4782
          %v4821 = vadd.f32 %v4750, %v4782
          %v4822 = vadd.f32 %v4751, %v4782
          %v4823 = vadd.f32 %v4752, %v4782
          %v4824 = vadd.f32 %v4753, %v4782
          %v4825 = vadd.f32 %v4754, %v4782
          %v4826 = vadd.f32 %v4755, %v4782
          %v4827 = vadd.f32 %v4756, %v4782
          %v4828 = vadd.f32 %v4757, %v4782
          %v4829 = vadd.f32 %v4758, %v4782
          %v4830 = vadd.f32 %v4759, %v4782
          %v4831 = vadd.f32 %v4760, %v4782
          %v4832 = vadd.f32 %v4761, %v4782
          %v4833 = vadd.f32 %v4762, %v4782
          %v4834 = vadd.f32 %v4763, %v4782
          %v4835 = vadd.f32 %v4764, %v4782
          %v4836 = vadd.f32 %v4765, %v4782
          %v4837 = vadd.f32 %v4766, %v4782
          %v4838 = vadd.f32 %v4767, %v4782
          %v4839 = vadd.f32 %v4768, %v4782
          %v4840 = vadd.f32 %v4769, %v4782
          %v4841 = vadd.f32 %v4770, %v4782
          %v4842 = vadd.f32 %v4771, %v4782
          %v4843 = vadd.f32 %v4772, %v4782
          %v4844 = vadd.f32 %v4773, %v4782
          %v4845 = vadd.f32 %v4774, %v4782
          %v4846 = vadd.f32 %v4775, %v4782
          %v4847 = vadd.f32 %v4776, %v4782
          %4848 = vst [vmem:[%s315] sm:$0xff] %v4784
          %4849 = vst [vmem:[%s315 + $0x8] sm:$0xff] %v4785
          %4850 = vst [vmem:[%s315 + $0x10] sm:$0xff] %v4786
          %4851 = vst [vmem:[%s315 + $0x18] sm:$0xff] %v4787
          %4852 = vst [vmem:[%s315 + $0x20] sm:$0xff] %v4788
          %4853 = vst [vmem:[%s315 + $0x28] sm:$0xff] %v4789
          %4854 = vst [vmem:[%s315 + $0x30] sm:$0xff] %v4790
          %4855 = vst [vmem:[%s315 + $0x38] sm:$0xff] %v4791
          %4856 = vst [vmem:[%s315 + $0x40] sm:$0xff] %v4792
          %4857 = vst [vmem:[%s315 + $0x48] sm:$0xff] %v4793
          %4858 = vst [vmem:[%s315 + $0x50] sm:$0xff] %v4794
          %4859 = vst [vmem:[%s315 + $0x58] sm:$0xff] %v4795
          %4860 = vst [vmem:[%s315 + $0x60] sm:$0xff] %v4796
          %4861 = vst [vmem:[%s315 + $0x68] sm:$0xff] %v4797
          %4862 = vst [vmem:[%s315 + $0x70] sm:$0xff] %v4798
          %4863 = vst [vmem:[%s315 + $0x78] sm:$0xff] %v4799
          %4864 = vst [vmem:[%s315 + $0x80] sm:$0xff] %v4800
          %4865 = vst [vmem:[%s315 + $0x88] sm:$0xff] %v4801
          %4866 = vst [vmem:[%s315 + $0x90] sm:$0xff] %v4802
          %4867 = vst [vmem:[%s315 + $0x98] sm:$0xff] %v4803
          %4868 = vst [vmem:[%s315 + $0xa0] sm:$0xff] %v4804
          %4869 = vst [vmem:[%s315 + $0xa8] sm:$0xff] %v4805
          %4870 = vst [vmem:[%s315 + $0xb0] sm:$0xff] %v4806
          %4871 = vst [vmem:[%s315 + $0xb8] sm:$0xff] %v4807
          %4872 = vst [vmem:[%s315 + $0xc0] sm:$0xff] %v4808
          %4873 = vst [vmem:[%s315 + $0xc8] sm:$0xff] %v4809
          %4874 = vst [vmem:[%s315 + $0xd0] sm:$0xff] %v4810
          %4875 = vst [vmem:[%s315 + $0xd8] sm:$0xff] %v4811
          %4876 = vst [vmem:[%s315 + $0xe0] sm:$0xff] %v4812
          %4877 = vst [vmem:[%s315 + $0xe8] sm:$0xff] %v4813
          %4878 = vst [vmem:[%s315 + $0xf0] sm:$0xff] %v4814
          %4879 = vst [vmem:[%s315 + $0xf8] sm:$0xff] %v4815
          %4880 = vst [vmem:[%s315 + $0x100] sm:$0xff] %v4816
          %4881 = vst [vmem:[%s315 + $0x108] sm:$0xff] %v4817
          %4882 = vst [vmem:[%s315 + $0x110] sm:$0xff] %v4818
          %4883 = vst [vmem:[%s315 + $0x118] sm:$0xff] %v4819
          %4884 = vst [vmem:[%s315 + $0x120] sm:$0xff] %v4820
          %4885 = vst [vmem:[%s315 + $0x128] sm:$0xff] %v4821
          %4886 = vst [vmem:[%s315 + $0x130] sm:$0xff] %v4822
          %4887 = vst [vmem:[%s315 + $0x138] sm:$0xff] %v4823
          %4888 = vst [vmem:[%s315 + $0x140] sm:$0xff] %v4824
          %4889 = vst [vmem:[%s315 + $0x148] sm:$0xff] %v4825
          %4890 = vst [vmem:[%s315 + $0x150] sm:$0xff] %v4826
          %4891 = vst [vmem:[%s315 + $0x158] sm:$0xff] %v4827
          %4892 = vst [vmem:[%s315 + $0x160] sm:$0xff] %v4828
          %4893 = vst [vmem:[%s315 + $0x168] sm:$0xff] %v4829
          %4894 = vst [vmem:[%s315 + $0x170] sm:$0xff] %v4830
          %4895 = vst [vmem:[%s315 + $0x178] sm:$0xff] %v4831
          %4896 = vst [vmem:[%s315 + $0x180] sm:$0xff] %v4832
          %4897 = vst [vmem:[%s315 + $0x188] sm:$0xff] %v4833
          %4898 = vst [vmem:[%s315 + $0x190] sm:$0xff] %v4834
          %4899 = vst [vmem:[%s315 + $0x198] sm:$0xff] %v4835
          %4900 = vst [vmem:[%s315 + $0x1a0] sm:$0xff] %v4836
          %4901 = vst [vmem:[%s315 + $0x1a8] sm:$0xff] %v4837
          %4902 = vst [vmem:[%s315 + $0x1b0] sm:$0xff] %v4838
          %4903 = vst [vmem:[%s315 + $0x1b8] sm:$0xff] %v4839
          %4904 = vst [vmem:[%s315 + $0x1c0] sm:$0xff] %v4840
          %4905 = vst [vmem:[%s315 + $0x1c8] sm:$0xff] %v4841
          %4906 = vst [vmem:[%s315 + $0x1d0] sm:$0xff] %v4842
          %4907 = vst [vmem:[%s315 + $0x1d8] sm:$0xff] %v4843
          %4908 = vst [vmem:[%s315 + $0x1e0] sm:$0xff] %v4844
          %4909 = vst [vmem:[%s315 + $0x1e8] sm:$0xff] %v4845
          %4910 = vst [vmem:[%s315 + $0x1f0] sm:$0xff] %v4846
          %4911 = vst [vmem:[%s315 + $0x1f8] sm:$0xff] %v4847
        $region60: #{tpu_custom_call.1} parent=39 // pred_fallthru
          _
        %s4912 = sand.u32 %s170, 1
        %s4913 = scalar_lea.sflag [#allocation7], %s4912
        %s4914 = sand.u32 %s170, 1
        %s4915 = smul.addr %s4914, 512
        %s4916 = scalar_lea.vmem [#allocation11], %s4915
        // Predicated region
        $region61: #{tpu_custom_call.1} parent=39 // pred_check
          %p4917 = pneg %p180
        $region62: #{tpu_custom_call.1} parent=39 // pred_check_branch
          %4919 = sbr.rel (%p4917) target = $region64
        $region63: #{tpu_custom_call.1} parent=39 // pred_region
          %s4920 = smul.u32 64, %s29
          %s4922 = ssub.s32 8192, 8192
          %4923 = vsyncadd %s4913, %s4922
          %s4924 = smul.addr %s4920, 128
          %s4925 = scalar_lea.hbm %s6, %s4924
          %s4926 = sshll.u32 %s4916, 4
          %s4927 = int_to_ptr.vmem [resolvable:$true] %s4926
          %4932 = dma.vmem_to_hbm [thread:$0]  %s4927, 8192, %s4925, %s4913, 128, 128, 8
        $region64: #{tpu_custom_call.1} parent=39 // pred_fallthru
          _
      $region40: #{tpu_custom_call.1} parent=5 // pred_fallthru
        _
      %p4933 = scmp.le.s32.totalorder 2, %s20
      // Predicated region
      $region65: #{tpu_custom_call.1} parent=5 // pred_check
        %p4934 = pneg %p4933
      $region66: #{tpu_custom_call.1} parent=5 // pred_check_branch
        %4936 = sbr.rel (%p4934) target = $region68
      $region67: #{tpu_custom_call.1} parent=5 // pred_region
        %s4937 = ssub.s32 %s20, 2
        // Predicated region
        $region69: #{tpu_custom_call.1} parent=67 // pred_check
          %p4938 = pneg %p186
        $region70: #{tpu_custom_call.1} parent=67 // pred_check_branch
          %4940 = sbr.rel (%p4938) target = $region72
        $region71: #{tpu_custom_call.1} parent=67 // pred_region
          %s4941 = sand.u32 %s171, 1
          %s4942 = scalar_lea.sflag [#allocation7], %s4941
          %s4943 = sand.u32 %s171, 1
          %s4944 = smul.addr %s4943, 512
          %s4945 = scalar_lea.vmem [#allocation11], %s4944
          %4946 = dma.done %s4942, 8192
        $region72: #{tpu_custom_call.1} parent=67 // pred_fallthru
          _
      $region68: #{tpu_custom_call.1} parent=5 // pred_fallthru
        _
    $region6: #{tpu_custom_call.1} parent=1 // loop_footer
      %s24 = sadd.s32 1, %s20
    $region7: #{tpu_custom_call.1} parent=1 // loop_footer_branch
      %19 = sbr.rel target = $region3
    $region8: #{tpu_custom_call.1} parent=1 // loop_exit
      _
    %4947 = vsyncpa [#allocation6], 1
    %s4948 = scalar_lea.sflag [#allocation6], 1
    %4949 = vsyncpa %s4948, 1
    %4950 = vsyncpa [#allocation9], 1
    %4951 = vsyncpa [#allocation7], 1
    %s4952 = scalar_lea.sflag [#allocation7], 1
    %4953 = vsyncpa %s4952, 1

</llo_original>
